<compile_context>
chip_gen: v5e
topology: v5e:2x2
jax: 0.10.0
libtpu: 0.0.40
codegen_flags: <defaults>
</compile_context>

<pallas_src>
import functools
import math

import jax
import jax.numpy as jnp
from jax.experimental import pallas as pl
from jax.experimental.pallas import tpu as pltpu


def _round_up(x, m):
    return ((x + m - 1) // m) * m


def _pad_cols(m, mult=128):
    n = m.shape[-1]
    npad = _round_up(n, mult)
    if npad == n:
        return m
    return jnp.pad(m, [(0, 0)] * (m.ndim - 1) + [(0, npad - n)])


def _apply_act(r, activation):
    if activation == "relu":
        return jnp.maximum(r, 0.0)
    if activation == "tanh":
        return jnp.tanh(r)
    return r


# ---------------------------------------------------------------------------
# Plain matmul kernel (Linear / 1x1 conv): bf16 operands, f32 acc, fused
# bias + activation, bf16 output.
# ---------------------------------------------------------------------------
def _mm_kernel(a_ref, b_ref, o_ref, *, activation):
    r = jnp.dot(a_ref[...], b_ref[...], preferred_element_type=jnp.float32)
    o_ref[...] = _apply_act(r, activation).astype(o_ref.dtype)


def _mm_bias_kernel(a_ref, b_ref, bias_ref, o_ref, *, activation):
    r = jnp.dot(a_ref[...], b_ref[...], preferred_element_type=jnp.float32)
    r = r + bias_ref[...]
    o_ref[...] = _apply_act(r, activation).astype(o_ref.dtype)


def _choose_row_tile(M, cap=1024):
    """Row tile that divides M exactly whenever possible (no activation pad)."""
    if M <= cap:
        if M >= 32 and M % 16 == 0:
            return M // 2, M          # >=2 blocks so v7x can shard across 2 TCs
        return M, M
    for t in range(cap, 7, -8):
        if M % t == 0:
            return t, M
    return 512, _round_up(M, 512)     # last resort: pad (not hit for this model)


def pallas_matmul(a, b, bias_row=None, activation="none"):
    """act(a @ b (+ bias)).  a: [M, K] (cast to bf16); b: [K, Np] bf16 with Np a
    multiple of 128 (pre-padded once at init); bias_row: [1, Np] f32.  Output is
    bf16 [M, Np]; the caller slices the valid columns (weights are padded, the
    activation never is)."""
    M, K = a.shape
    Np = b.shape[1]
    a = a.astype(jnp.bfloat16)
    TM, Mp = _choose_row_tile(M)
    if Mp != M:
        a = jnp.pad(a, ((0, Mp - M), (0, 0)))
    if Np <= 512:
        TN = Np
    else:
        TN = 512 if Np % 512 == 0 else (256 if Np % 256 == 0 else 128)

    args = [a, b]
    in_specs = [pl.BlockSpec((TM, K), lambda i, j: (i, 0)),
                pl.BlockSpec((K, TN), lambda i, j: (0, j))]
    if bias_row is not None:
        args.append(bias_row)
        in_specs.append(pl.BlockSpec((1, TN), lambda i, j: (0, j)))
        kernel = functools.partial(_mm_bias_kernel, activation=activation)
    else:
        kernel = functools.partial(_mm_kernel, activation=activation)

    out = pl.pallas_call(
        kernel,
        out_shape=jax.ShapeDtypeStruct((Mp, Np), jnp.bfloat16),
        grid_spec=pltpu.PrefetchScalarGridSpec(
            num_scalar_prefetch=0,
            grid=(Mp // TM, Np // TN),
            in_specs=in_specs,
            out_specs=pl.BlockSpec((TM, TN), lambda i, j: (i, j))),
        compiler_params=pltpu.CompilerParams(
            dimension_semantics=("parallel", "parallel")),
    )(*args)
    if Mp != M:
        out = out[:M]
    return out


# ---------------------------------------------------------------------------
# Fused tap-conv kernel: ConvTranspose2d (k=2,s=2 / k=3,s=2 / k=3,s=1) as
# row-shifted matmuls on the padded activation (im2col fused in VMEM), with
# fused bias / activation and BatchNorm-stat partial outputs.
# ---------------------------------------------------------------------------
def _tapconv_kernel(*refs, row_offsets, H, activation, has_bias, want_stats):
    x_ref, w_ref = refs[0], refs[1]
    i = 2
    b_ref = None
    if has_bias:
        b_ref = refs[i]
        i += 1
    y_ref = refs[i]
    i += 1

    acc = None
    for t, ty in enumerate(row_offsets):
        a = x_ref[0, ty:ty + H, :]                       # (H, Wp*Ci) full-lane load
        p = jnp.dot(a, w_ref[t], preferred_element_type=jnp.float32)
        acc = p if acc is None else acc + p
    if has_bias:
        acc = acc + b_ref[...]
    if want_stats:
        refs[i][0] = jnp.sum(acc, axis=0, keepdims=True)
        refs[i + 1][0] = jnp.sum(acc * acc, axis=0, keepdims=True)
    y_ref[0] = _apply_act(acc, activation).astype(y_ref.dtype)


def tap_conv(x, w_bd, *, row_offsets, pad, bias_row=None, activation="none",
             want_stats=False):
    """x: [N, H, W, C] bf16.  w_bd: [T, Wp*C, Ncp] bf16 (tx shifts + block-diag
    structure baked in at init).  Output y: [N, H, Ncp] bf16 with columns
    (w, ...); optionally per-batch column sum / sumsq partials for BN stats."""
    N, H, W, C = x.shape
    (pt, pb), (pw_l, pw_r) = pad
    if pt or pb or pw_l or pw_r:
        # TODO(synk): halo pad is one extra XLA pass over the bf16 activation;
        # an in-kernel masked edge tap would remove it.
        x = jnp.pad(x, ((0, 0), (pt, pb), (pw_l, pw_r), (0, 0)))
    Hp, Wp = H + pt + pb, W + pw_l + pw_r
    x3 = x.reshape(N, Hp, Wp * C)
    T, K, Ncp = w_bd.shape

    args = [x3, w_bd]
    in_specs = [pl.BlockSpec((1, Hp, Wp * C), lambda n: (n, 0, 0)),
                pl.BlockSpec((T, K, Ncp), lambda n: (0, 0, 0))]
    if bias_row is not None:
        args.append(bias_row)
        in_specs.append(pl.BlockSpec((1, Ncp), lambda n: (0, 0)))

    out_shapes = [jax.ShapeDtypeStruct((N, H, Ncp), jnp.bfloat16)]
    out_specs = [pl.BlockSpec((1, H, Ncp), lambda n: (n, 0, 0))]
    if want_stats:
        out_shapes += [jax.ShapeDtypeStruct((N, 1, Ncp), jnp.float32)] * 2
        out_specs += [pl.BlockSpec((1, 1, Ncp), lambda n: (n, 0, 0))] * 2

    kernel = functools.partial(
        _tapconv_kernel, row_offsets=tuple(row_offsets), H=H,
        activation=activation, has_bias=bias_row is not None,
        want_stats=want_stats)

    return pl.pallas_call(
        kernel,
        out_shape=tuple(out_shapes) if want_stats else out_shapes[0],
        grid_spec=pltpu.PrefetchScalarGridSpec(
            num_scalar_prefetch=0,
            grid=(N,),
            in_specs=in_specs,
            out_specs=tuple(out_specs) if want_stats else out_specs[0]),
        compiler_params=pltpu.CompilerParams(dimension_semantics=("parallel",)),
    )(*args)


# ---------------------------------------------------------------------------
# Fused BatchNorm-apply (+ ReLU / residual / ReLU), lane-dense
# ---------------------------------------------------------------------------
def _bn_apply_kernel(*refs, has_res, relu_pre, relu_post):
    if has_res:
        y_ref, r_ref, s_ref, t_ref, o_ref = refs
    else:
        y_ref, s_ref, t_ref, o_ref = refs
        r_ref = None
    v = y_ref[...].astype(jnp.float32) * s_ref[...] + t_ref[...]
    if relu_pre:
        v = jnp.maximum(v, 0.0)
    if has_res:
        v = v + r_ref[...].astype(jnp.float32)
    if relu_post:
        v = jnp.maximum(v, 0.0)
    o_ref[...] = v.astype(o_ref.dtype)


def _choose_flat(total, C):
    g = (C * 128) // math.gcd(C, 128)
    if total % g:
        return None
    L = g
    while L * 2 <= 2048 and total % (L * 2) == 0:
        L *= 2
    return total // L, L


def fused_bn_apply(y, scale, shift, residual=None, relu_pre=False, relu_post=False):
    """Per-channel scale/shift (+ReLU / +residual / +ReLU) over an NHWC tensor,
    reflattened to a lane-dense [rows, L] layout (L multiple of 128)."""
    shape = y.shape
    C = shape[-1]
    total = y.size
    flat = _choose_flat(total, C)
    if flat is None:                      # fallback: keep (..., W, C) flattening
        L = shape[-2] * C
        rows = total // L
    else:
        rows, L = flat
    y2 = y.reshape(rows, L)
    r2 = None if residual is None else residual.reshape(rows, L)

    if rows <= 512:
        TR = rows // 2 if (rows >= 16 and rows % 16 == 0) else rows
    else:
        TR = None
        for t in range(512, 7, -8):
            if rows % t == 0:
                TR = t
                break
        if TR is None:
            TR = rows                     # full-dims block is always legal

    s_row = jnp.tile(scale, L // C).reshape(1, L).astype(jnp.float32)
    t_row = jnp.tile(shift, L // C).reshape(1, L).astype(jnp.float32)

    args = [y2]
    in_specs = [pl.BlockSpec((TR, L), lambda i: (i, 0))]
    if r2 is not None:
        args.append(r2)
        in_specs.append(pl.BlockSpec((TR, L), lambda i: (i, 0)))
    args += [s_row, t_row]
    in_specs += [pl.BlockSpec((1, L), lambda i: (0, 0)),
                 pl.BlockSpec((1, L), lambda i: (0, 0))]

    kernel = functools.partial(_bn_apply_kernel, has_res=r2 is not None,
                               relu_pre=relu_pre, relu_post=relu_post)
    out = pl.pallas_call(
        kernel,
        out_shape=jax.ShapeDtypeStruct((rows, L), jnp.bfloat16),
        grid_spec=pltpu.PrefetchScalarGridSpec(
            num_scalar_prefetch=0,
            grid=(rows // TR,),
            in_specs=in_specs,
            out_specs=pl.BlockSpec((TR, L), lambda i: (i, 0))),
        compiler_params=pltpu.CompilerParams(dimension_semantics=("parallel",)),
    )(*args)
    return out.reshape(shape)


def _bn_stats(sums, sqs, ncols, C, count, eps=1e-5):
    """Reduce per-batch column partials (from the conv kernel) to per-channel
    BatchNorm scale/shift (training-mode, biased variance, gamma=1/beta=0)."""
    s = jnp.sum(sums[..., :ncols].reshape(-1, ncols), axis=0)
    q = jnp.sum(sqs[..., :ncols].reshape(-1, ncols), axis=0)
    s = s.reshape(ncols // C, C).sum(axis=0)
    q = q.reshape(ncols // C, C).sum(axis=0)
    mean = s / count
    var = jnp.maximum(q / count - mean * mean, 0.0)
    scale = jax.lax.rsqrt(var + eps)
    return scale, -mean * scale


# ---------------------------------------------------------------------------
# Layout / identity-path helpers (XLA glue on bf16, all tiny)
# ---------------------------------------------------------------------------
def _phase_to_space(y, N, H, W, Co):
    # y: [N, H, Ncp], columns (w, di, dj, co) -> [N, 2H, 2W, Co]
    # TODO(synk): could be deferred into the next layer's tap weights
    # (phase-major activations) to remove this XLA transpose round trip.
    y = y[:, :, :W * 4 * Co].reshape(N, H, W, 2, 2, Co)
    y = y.transpose(0, 1, 3, 2, 4, 5)
    return y.reshape(N, 2 * H, 2 * W, Co)


def _interp_matrix(hin, hout):
    # align_corners=True bilinear interpolation matrix
    if hin == 1:
        return jnp.ones((hout, 1), jnp.float32)
    src = jnp.arange(hout, dtype=jnp.float32) * (hin - 1) / (hout - 1)
    i0 = jnp.clip(jnp.floor(src).astype(jnp.int32), 0, hin - 1)
    i1 = jnp.clip(i0 + 1, 0, hin - 1)
    frac = src - i0.astype(jnp.float32)
    return ((1.0 - frac)[:, None] * jax.nn.one_hot(i0, hin, dtype=jnp.float32)
            + frac[:, None] * jax.nn.one_hot(i1, hin, dtype=jnp.float32))


def upsample_bilinear_2x(x):
    # nn.UpsamplingBilinear2d(scale_factor=2), NHWC.
    # TODO(synk): could be folded into fused_bn_apply's residual read (4x less
    # residual HBM traffic); kept as two tiny XLA einsums for simplicity.
    N, H, W, C = x.shape
    Mh = _interp_matrix(H, 2 * H)
    Mw = _interp_matrix(W, 2 * W)
    y = jnp.einsum("oi,nivc->novc", Mh, x.astype(jnp.float32))
    y = jnp.einsum("pj,nojc->nopc", Mw, y)
    return y.astype(jnp.bfloat16)


# ---------------------------------------------------------------------------
# Init-time weight repacking (phase decomposition + block-diagonal embedding)
# ---------------------------------------------------------------------------
def _pack_conv_weight(taps, W, Wp):
    """taps: {(ty, tx): [Ci, Q]}.  Returns (row_offsets, w_bd [T, Wp*Ci, Ncp]
    bf16): per row-offset ty, the tx lane shifts and per-output-column
    block-diagonal structure are baked into one matrix, so the kernel only needs
    aligned full-lane, row-shifted loads of the padded activation."""
    any_m = next(iter(taps.values()))
    Ci, Q = any_m.shape
    ncols = W * Q
    ncp = _round_up(ncols, 128)
    row_offsets = tuple(sorted({ty for (ty, _) in taps}))
    eye = jnp.eye(W, dtype=jnp.float32)
    mats = []
    for ty in row_offsets:
        m = jnp.zeros((Wp * Ci, ncols), jnp.float32)
        for (ty2, tx), w in taps.items():
            if ty2 != ty:
                continue
            m = m.at[tx * Ci:(tx + W) * Ci, :].add(
                jnp.kron(eye, w.astype(jnp.float32)))
        mats.append(jnp.pad(m, ((0, 0), (0, ncp - ncols))))
    return row_offsets, jnp.stack(mats, 0).astype(jnp.bfloat16)


def _k2s2_tap_mats(w):
    # ConvTranspose2d(k=2, s=2, p=0): single tap, columns (di, dj, co)
    Ci, Co = w.shape[0], w.shape[1]
    return {(0, 0): jnp.transpose(w, (0, 2, 3, 1)).reshape(Ci, 4 * Co)}


def _k3s2_tap_mats(w):
    # ConvTranspose2d(k=3, s=2, p=1, output_padding=1): phase decomposition on
    # the undilated input; phase (di,dj) at (i,j) uses tap x[i+dy, j+dx]
    # (dy,dx in {0,1}) with kernel element (di+1-2dy, dj+1-2dx) when in range.
    Ci, Co = w.shape[0], w.shape[1]
    taps = {}
    for dy in range(2):
        for dx in range(2):
            m = jnp.zeros((Ci, 2, 2, Co), jnp.float32)
            for di in range(2):
                for dj in range(2):
                    ky, kx = di + 1 - 2 * dy, dj + 1 - 2 * dx
                    if 0 <= ky <= 2 and 0 <= kx <= 2:
                        m = m.at[:, di, dj, :].set(w[:, :, ky, kx])
            taps[(dy, dx)] = m.reshape(Ci, 4 * Co)
    return taps


def _k3s1_tap_mats(w):
    # ConvTranspose2d(k=3, s=1, p=1) == same-padding correlation w/ flipped kernel
    return {(ty, tx): w[:, :, 2 - ty, 2 - tx]
            for ty in range(3) for tx in range(3)}


def init_generator_params(key, input_shape, blocklist, figsize):
    keys = iter(jax.random.split(key, 64))

    def xavier(k, shape, fan_in, fan_out):
        std = (2.0 / (fan_in + fan_out)) ** 0.5
        return std * jax.random.normal(k, shape, jnp.float32)

    C0 = blocklist[0]["out_channel"] * 2
    s0 = figsize
    for layer in blocklist:
        s0 //= layer["stride"]
    s0 //= 2                              # final ConvT(k=2, s=2)

    in_ch, sp = C0, s0
    blocks, meta = [], []
    for layer in blocklist:
        oc, kk = layer["out_channel"], layer["kernel"]
        if kk == 2:   # Tresblock1
            w = xavier(next(keys), (in_ch, oc, 2, 2), oc * 4, in_ch * 4)
            b = jnp.zeros((oc,), jnp.float32)
            ro, wbd = _pack_conv_weight(_k2s2_tap_mats(w), sp, sp)
            brow = _pad_cols(jnp.tile(b, sp * 4).reshape(1, -1))
            idw = xavier(next(keys), (oc, in_ch, 1, 1), in_ch, oc)
            blocks.append({
                "convT_wbd": wbd,
                "convT_brow": brow,
                "id_w": _pad_cols(idw.reshape(oc, in_ch).T).astype(jnp.bfloat16),
            })
            meta.append({"type": 1, "H": sp, "Ci": in_ch, "Co": oc, "ro": ro})
        elif kk == 3:  # Tresblock2
            w1 = xavier(next(keys), (in_ch, oc, 3, 3), oc * 9, in_ch * 9)
            w2 = xavier(next(keys), (oc, oc, 3, 3), oc * 9, oc * 9)
            idw = xavier(next(keys), (oc, in_ch, 1, 1), in_ch, oc)
            ro1, wbd1 = _pack_conv_weight(_k3s2_tap_mats(w1), sp, sp + 1)
            ro2, wbd2 = _pack_conv_weight(_k3s1_tap_mats(w2), 2 * sp, 2 * sp + 2)
            blocks.append({
                "convT1_wbd": wbd1,
                "convT2_wbd": wbd2,
                "id_w": _pad_cols(idw.reshape(oc, in_ch).T).astype(jnp.bfloat16),
            })
            meta.append({"type": 2, "H": sp, "Ci": in_ch, "Co": oc,
                         "ro1": ro1, "ro2": ro2})
        sp *= 2
        in_ch = oc

    wf = xavier(next(keys), (in_ch, 3, 2, 2), 3 * 4, in_ch * 4)
    bf_ = jnp.zeros((3,), jnp.float32)
    rof, final_wbd = _pack_conv_weight(_k2s2_tap_mats(wf), sp, sp)
    final_brow = _pad_cols(jnp.tile(bf_, sp * 4).reshape(1, -1))

    hidden = C0 * s0 * s0
    lw = xavier(next(keys), (input_shape, hidden), input_shape, hidden)
    lb = jnp.zeros((hidden,), jnp.float32)

    params = {
        "blocks": blocks,
        "final_wbd": final_wbd,
        "final_brow": final_brow,
        "lin_w": _pad_cols(lw).astype(jnp.bfloat16),
        "lin_b": _pad_cols(lb.reshape(1, -1)),
    }
    config = {"C0": C0, "s0": s0, "hidden": hidden, "meta": tuple(meta),
              "final": {"H": sp, "Ci": in_ch, "ro": rof}}
    return params, config


# ---------------------------------------------------------------------------
# Forward pass
# ---------------------------------------------------------------------------
def make_generator_forward(config):
    C0, s0, hidden = config["C0"], config["s0"], config["hidden"]
    meta, finalm = config["meta"], config["final"]

    def forward(params, x):
        B = x.shape[0]
        # preprocess: Linear + ReLU (bias + activation fused in the matmul)
        h = pallas_matmul(x, params["lin_w"], params["lin_b"], "relu")
        # PyTorch .view() is NCHW-ordered -> single layout conversion to NHWC
        h = h[:, :hidden].reshape(B, C0, s0, s0).transpose(0, 2, 3, 1)

        for m, blk in zip(meta, params["blocks"]):
            Hs, Ci, Co = m["H"], m["Ci"], m["Co"]
            # identity path: 1x1 conv commuted before the bilinear 2x upsample
            idn = pallas_matmul(h.reshape(B * Hs * Hs, Ci), blk["id_w"])
            idn = upsample_bilinear_2x(idn[:, :Co].reshape(B, Hs, Hs, Co))
            if m["type"] == 1:
                # Tresblock1: out = ReLU(BN(convT_k2s2(x))) + identity(x)
                y, ss, qq = tap_conv(h, blk["convT_wbd"], row_offsets=m["ro"],
                                     pad=((0, 0), (0, 0)),
                                     bias_row=blk["convT_brow"], want_stats=True)
                scale, shift = _bn_stats(ss, qq, Hs * 4 * Co, Co,
                                         count=B * Hs * Hs * 4)
                hid = _phase_to_space(y, B, Hs, Hs, Co)
                h = fused_bn_apply(hid, scale, shift, residual=idn, relu_pre=True)
            else:
                # Tresblock2: ReLU(BN2(convT_k3s1(ReLU(BN1(convT_k3s2(x))))) + id(x))
                y1, ss, qq = tap_conv(h, blk["convT1_wbd"], row_offsets=m["ro1"],
                                      pad=((0, 1), (0, 1)), want_stats=True)
                scale1, shift1 = _bn_stats(ss, qq, Hs * 4 * Co, Co,
                                           count=B * Hs * Hs * 4)
                h1 = _phase_to_space(y1, B, Hs, Hs, Co)
                h1 = fused_bn_apply(h1, scale1, shift1, relu_pre=True)
                H2 = 2 * Hs
                y2, ss2, qq2 = tap_conv(h1, blk["convT2_wbd"], row_offsets=m["ro2"],
                                        pad=((1, 1), (1, 1)), want_stats=True)
                scale2, shift2 = _bn_stats(ss2, qq2, H2 * Co, Co,
                                           count=B * H2 * H2)
                h2 = y2[:, :, :H2 * Co].reshape(B, H2, H2, Co)
                h = fused_bn_apply(h2, scale2, shift2, residual=idn,
                                   relu_post=True)

        # final ConvTranspose2d(in_ch, 3, k=2, s=2) + Tanh (fused in the kernel)
        Hf = finalm["H"]
        yf = tap_conv(h, params["final_wbd"], row_offsets=finalm["ro"],
                      pad=((0, 0), (0, 0)), bias_row=params["final_brow"],
                      activation="tanh")
        out = _phase_to_space(yf, B, Hf, Hf, 3)
        return out.transpose(0, 3, 1, 2).astype(jnp.float32)   # NCHW, f32

    return forward


if __name__ == "__main__":
    # small config: latent=32, two blocks (kernel 2 then kernel 3), figsize=16
    B, LATENT = 2, 32
    blocklist = [{"out_channel": 4, "kernel": 2, "stride": 2},
                 {"out_channel": 4, "kernel": 3, "stride": 2}]
    figsize = 16

    key = jax.random.PRNGKey(0)
    k_params, k_input = jax.random.split(key)
    params, config = init_generator_params(k_params, LATENT, blocklist, figsize)
    x = jax.random.normal(k_input, (B, LATENT), jnp.float32)

    forward = jax.jit(make_generator_forward(config))
    out = jax.block_until_ready(forward(params, x))

    assert out.shape == (B, 3, figsize, figsize), out.shape
    assert bool(jnp.all(jnp.isfinite(out)))
    assert bool(jnp.all(jnp.abs(out) <= 1.0))  # tanh output range
    print("KERNEL_OK")
</pallas_src>

<mosaic_0001>
module attributes {stable_mosaic.version = 11 : i64} {
  func.func @_mm_bias_kernel(%arg0: i32, %arg1: i32, %arg2: memref<2x32xbf16, #tpu.memory_space<vmem>>, %arg3: memref<32x128xbf16, #tpu.memory_space<vmem>>, %arg4: memref<1x128xf32, #tpu.memory_space<vmem>>, %arg5: memref<2x128xbf16, #tpu.memory_space<vmem>>) attributes {dimension_semantics = [#tpu.dimension_semantics<parallel>, #tpu.dimension_semantics<parallel>], iteration_bounds = array<i64: 1, 1>, scalar_prefetch = 0 : i64, scratch_operands = 0 : i64, tpu.core_type = #tpu.core_type<tc>, window_params = [{transform_indices = @transform_0, window_bounds = array<i64: 2, 32>}, {transform_indices = @transform_1, window_bounds = array<i64: 32, 128>}, {transform_indices = @transform_2, window_bounds = array<i64: 1, 128>}, {transform_indices = @transform_3, window_bounds = array<i64: 2, 128>}]} {
    %c0 = arith.constant 0 : index
    %c0_0 = arith.constant 0 : index
    %0 = vector.load %arg2[%c0, %c0_0] : memref<2x32xbf16, #tpu.memory_space<vmem>>, vector<2x32xbf16>
    %c0_1 = arith.constant 0 : index
    %c0_2 = arith.constant 0 : index
    %1 = vector.load %arg3[%c0_1, %c0_2] : memref<32x128xbf16, #tpu.memory_space<vmem>>, vector<32x128xbf16>
    %cst = arith.constant dense<0.000000e+00> : vector<2x128xf32>
    %2 = tpu.matmul %0, %1, %cst {dimension_numbers = #tpu.dot_dimension_numbers<[1], [0], [0], [1], [0, 0, 1, 1], [], []>} : vector<2x32xbf16>, vector<32x128xbf16>, vector<2x128xf32> -> vector<2x128xf32>
    %c0_3 = arith.constant 0 : index
    %c0_4 = arith.constant 0 : index
    %3 = vector.load %arg4[%c0_3, %c0_4] : memref<1x128xf32, #tpu.memory_space<vmem>>, vector<1x128xf32>
    %4 = vector.broadcast %3 : vector<1x128xf32> to vector<2x128xf32>
    %5 = arith.addf %2, %4 : vector<2x128xf32>
    %cst_5 = arith.constant 0.000000e+00 : f32
    %6 = vector.broadcast %cst_5 : f32 to vector<2x128xf32>
    %7 = arith.maximumf %5, %6 : vector<2x128xf32>
    %8 = arith.truncf %7 : vector<2x128xf32> to vector<2x128xbf16>
    %c0_6 = arith.constant 0 : index
    %c0_7 = arith.constant 0 : index
    %9 = vector.load %arg5[%c0_6, %c0_7] : memref<2x128xbf16, #tpu.memory_space<vmem>>, vector<2x128xbf16>
    tpu.vector_store %arg5[%c0_6, %c0_7], %8 {strides = array<i32>} : memref<2x128xbf16, #tpu.memory_space<vmem>>, vector<2x128xbf16>,
    return
  }
  func.func @transform_0(%arg0: i32, %arg1: i32) -> (i32, i32) {
    %c0_i32 = arith.constant 0 : i32
    %c0_i32_0 = arith.constant 0 : i32
    return %arg0, %c0_i32 : i32, i32
  }
  func.func @transform_1(%arg0: i32, %arg1: i32) -> (i32, i32) {
    %c0_i32 = arith.constant 0 : i32
    %c0_i32_0 = arith.constant 0 : i32
    return %c0_i32, %arg1 : i32, i32
  }
  func.func @transform_2(%arg0: i32, %arg1: i32) -> (i32, i32) {
    %c0_i32 = arith.constant 0 : i32
    %c0_i32_0 = arith.constant 0 : i32
    return %c0_i32, %arg1 : i32, i32
  }
  func.func @transform_3(%arg0: i32, %arg1: i32) -> (i32, i32) {
    %c0_i32 = arith.constant 0 : i32
    return %arg0, %arg1 : i32, i32
  }
}

module attributes {stable_mosaic.version = 11 : i64} {
  func.func @_mm_kernel(%arg0: i32, %arg1: i32, %arg2: memref<8x8xbf16, #tpu.memory_space<vmem>>, %arg3: memref<8x128xbf16, #tpu.memory_space<vmem>>, %arg4: memref<8x128xbf16, #tpu.memory_space<vmem>>) attributes {dimension_semantics = [#tpu.dimension_semantics<parallel>, #tpu.dimension_semantics<parallel>], iteration_bounds = array<i64: 1, 1>, scalar_prefetch = 0 : i64, scratch_operands = 0 : i64, tpu.core_type = #tpu.core_type<tc>, window_params = [{transform_indices = @transform_0, window_bounds = array<i64: 8, 8>}, {transform_indices = @transform_1, window_bounds = array<i64: 8, 128>}, {transform_indices = @transform_2, window_bounds = array<i64: 8, 128>}]} {
    %c0 = arith.constant 0 : index
    %c0_0 = arith.constant 0 : index
    %0 = vector.load %arg2[%c0, %c0_0] : memref<8x8xbf16, #tpu.memory_space<vmem>>, vector<8x8xbf16>
    %c0_1 = arith.constant 0 : index
    %c0_2 = arith.constant 0 : index
    %1 = vector.load %arg3[%c0_1, %c0_2] : memref<8x128xbf16, #tpu.memory_space<vmem>>, vector<8x128xbf16>
    %cst = arith.constant dense<0.000000e+00> : vector<8x128xf32>
    %2 = tpu.matmul %0, %1, %cst {dimension_numbers = #tpu.dot_dimension_numbers<[1], [0], [0], [1], [0, 0, 1, 1], [], []>} : vector<8x8xbf16>, vector<8x128xbf16>, vector<8x128xf32> -> vector<8x128xf32>
    %3 = arith.truncf %2 : vector<8x128xf32> to vector<8x128xbf16>
    %c0_3 = arith.constant 0 : index
    %c0_4 = arith.constant 0 : index
    %4 = vector.load %arg4[%c0_3, %c0_4] : memref<8x128xbf16, #tpu.memory_space<vmem>>, vector<8x128xbf16>
    tpu.vector_store %arg4[%c0_3, %c0_4], %3 {strides = array<i32>} : memref<8x128xbf16, #tpu.memory_space<vmem>>, vector<8x128xbf16>,
    return
  }
  func.func @transform_0(%arg0: i32, %arg1: i32) -> (i32, i32) {
    %c0_i32 = arith.constant 0 : i32
    %c0_i32_0 = arith.constant 0 : i32
    return %arg0, %c0_i32 : i32, i32
  }
  func.func @transform_1(%arg0: i32, %arg1: i32) -> (i32, i32) {
    %c0_i32 = arith.constant 0 : i32
    %c0_i32_0 = arith.constant 0 : i32
    return %c0_i32, %arg1 : i32, i32
  }
  func.func @transform_2(%arg0: i32, %arg1: i32) -> (i32, i32) {
    %c0_i32 = arith.constant 0 : i32
    return %arg0, %arg1 : i32, i32
  }
}

module attributes {stable_mosaic.version = 11 : i64} {
  func.func @_tapconv_kernel(%arg0: i32, %arg1: memref<1x2x16xbf16, #tpu.memory_space<vmem>>, %arg2: memref<1x16x128xbf16, #tpu.memory_space<vmem>>, %arg3: memref<1x128xf32, #tpu.memory_space<vmem>>, %arg4: memref<1x2x128xbf16, #tpu.memory_space<vmem>>, %arg5: memref<1x1x128xf32, #tpu.memory_space<vmem>>, %arg6: memref<1x1x128xf32, #tpu.memory_space<vmem>>) attributes {dimension_semantics = [#tpu.dimension_semantics<parallel>], iteration_bounds = array<i64: 2>, scalar_prefetch = 0 : i64, scratch_operands = 0 : i64, tpu.core_type = #tpu.core_type<tc>, window_params = [{transform_indices = @transform_0, window_bounds = array<i64: 1, 2, 16>}, {pipeline_mode = #tpu.pipeline_mode<synchronous>, transform_indices = @transform_1, window_bounds = array<i64: 1, 16, 128>}, {pipeline_mode = #tpu.pipeline_mode<synchronous>, transform_indices = @transform_2, window_bounds = array<i64: 1, 128>}, {transform_indices = @transform_3, window_bounds = array<i64: 1, 2, 128>}, {transform_indices = @transform_4, window_bounds = array<i64: 1, 1, 128>}, {transform_indices = @transform_5, window_bounds = array<i64: 1, 1, 128>}]} {
    %c0 = arith.constant 0 : index
    %c0_0 = arith.constant 0 : index
    %c0_1 = arith.constant 0 : index
    %0 = vector.load %arg1[%c0, %c0_0, %c0_1] : memref<1x2x16xbf16, #tpu.memory_space<vmem>>, vector<1x2x16xbf16>
    %1 = vector.shape_cast %0 : vector<1x2x16xbf16> to vector<2x16xbf16>
    %c0_2 = arith.constant 0 : index
    %c0_3 = arith.constant 0 : index
    %c0_4 = arith.constant 0 : index
    %2 = vector.load %arg2[%c0_2, %c0_3, %c0_4] : memref<1x16x128xbf16, #tpu.memory_space<vmem>>, vector<1x16x128xbf16>
    %3 = vector.shape_cast %2 : vector<1x16x128xbf16> to vector<16x128xbf16>
    %cst = arith.constant dense<0.000000e+00> : vector<2x128xf32>
    %4 = tpu.matmul %1, %3, %cst {dimension_numbers = #tpu.dot_dimension_numbers<[1], [0], [0], [1], [0, 0, 1, 1], [], []>} : vector<2x16xbf16>, vector<16x128xbf16>, vector<2x128xf32> -> vector<2x128xf32>
    %c0_5 = arith.constant 0 : index
    %c0_6 = arith.constant 0 : index
    %5 = vector.load %arg3[%c0_5, %c0_6] : memref<1x128xf32, #tpu.memory_space<vmem>>, vector<1x128xf32>
    %6 = vector.broadcast %5 : vector<1x128xf32> to vector<2x128xf32>
    %7 = arith.addf %4, %6 : vector<2x128xf32>
    %cst_7 = arith.constant dense<0.000000e+00> : vector<128xf32>
    %8 = vector.multi_reduction <add>, %7, %cst_7 [0] : vector<2x128xf32> to vector<128xf32>
    %9 = vector.shape_cast %8 : vector<128xf32> to vector<1x128xf32>
    %c0_8 = arith.constant 0 : index
    %c0_9 = arith.constant 0 : index
    %c0_10 = arith.constant 0 : index
    %10 = vector.load %arg5[%c0_8, %c0_9, %c0_10] : memref<1x1x128xf32, #tpu.memory_space<vmem>>, vector<1x1x128xf32>
    %11 = vector.shape_cast %10 : vector<1x1x128xf32> to vector<1x128xf32>
    %12 = vector.shape_cast %9 : vector<1x128xf32> to vector<1x1x128xf32>
    tpu.vector_store %arg5[%c0_8, %c0_9, %c0_10], %12 {strides = array<i32>} : memref<1x1x128xf32, #tpu.memory_space<vmem>>, vector<1x1x128xf32>,
    %13 = arith.mulf %7, %7 : vector<2x128xf32>
    %cst_11 = arith.constant dense<0.000000e+00> : vector<128xf32>
    %14 = vector.multi_reduction <add>, %13, %cst_11 [0] : vector<2x128xf32> to vector<128xf32>
    %15 = vector.shape_cast %14 : vector<128xf32> to vector<1x128xf32>
    %c0_12 = arith.constant 0 : index
    %c0_13 = arith.constant 0 : index
    %c0_14 = arith.constant 0 : index
    %16 = vector.load %arg6[%c0_12, %c0_13, %c0_14] : memref<1x1x128xf32, #tpu.memory_space<vmem>>, vector<1x1x128xf32>
    %17 = vector.shape_cast %16 : vector<1x1x128xf32> to vector<1x128xf32>
    %18 = vector.shape_cast %15 : vector<1x128xf32> to vector<1x1x128xf32>
    tpu.vector_store %arg6[%c0_12, %c0_13, %c0_14], %18 {strides = array<i32>} : memref<1x1x128xf32, #tpu.memory_space<vmem>>, vector<1x1x128xf32>,
    %19 = arith.truncf %7 : vector<2x128xf32> to vector<2x128xbf16>
    %c0_15 = arith.constant 0 : index
    %c0_16 = arith.constant 0 : index
    %c0_17 = arith.constant 0 : index
    %20 = vector.load %arg4[%c0_15, %c0_16, %c0_17] : memref<1x2x128xbf16, #tpu.memory_space<vmem>>, vector<1x2x128xbf16>
    %21 = vector.shape_cast %20 : vector<1x2x128xbf16> to vector<2x128xbf16>
    %22 = vector.shape_cast %19 : vector<2x128xbf16> to vector<1x2x128xbf16>
    tpu.vector_store %arg4[%c0_15, %c0_16, %c0_17], %22 {strides = array<i32>} : memref<1x2x128xbf16, #tpu.memory_space<vmem>>, vector<1x2x128xbf16>,
    return
  }
  func.func @transform_0(%arg0: i32) -> (i32, i32, i32) {
    %c0_i32 = arith.constant 0 : i32
    %c0_i32_0 = arith.constant 0 : i32
    %c0_i32_1 = arith.constant 0 : i32
    return %arg0, %c0_i32, %c0_i32_0 : i32, i32, i32
  }
  func.func @transform_1(%arg0: i32) -> (i32, i32, i32) {
    %c0_i32 = arith.constant 0 : i32
    %c0_i32_0 = arith.constant 0 : i32
    %c0_i32_1 = arith.constant 0 : i32
    %c0_i32_2 = arith.constant 0 : i32
    return %c0_i32, %c0_i32_0, %c0_i32_1 : i32, i32, i32
  }
  func.func @transform_2(%arg0: i32) -> (i32, i32) {
    %c0_i32 = arith.constant 0 : i32
    %c0_i32_0 = arith.constant 0 : i32
    %c0_i32_1 = arith.constant 0 : i32
    return %c0_i32, %c0_i32_0 : i32, i32
  }
  func.func @transform_3(%arg0: i32) -> (i32, i32, i32) {
    %c0_i32 = arith.constant 0 : i32
    %c0_i32_0 = arith.constant 0 : i32
    %c0_i32_1 = arith.constant 0 : i32
    return %arg0, %c0_i32, %c0_i32_0 : i32, i32, i32
  }
  func.func @transform_4(%arg0: i32) -> (i32, i32, i32) {
    %c0_i32 = arith.constant 0 : i32
    %c0_i32_0 = arith.constant 0 : i32
    %c0_i32_1 = arith.constant 0 : i32
    return %arg0, %c0_i32, %c0_i32_0 : i32, i32, i32
  }
  func.func @transform_5(%arg0: i32) -> (i32, i32, i32) {
    %c0_i32 = arith.constant 0 : i32
    %c0_i32_0 = arith.constant 0 : i32
    %c0_i32_1 = arith.constant 0 : i32
    return %arg0, %c0_i32, %c0_i32_0 : i32, i32, i32
  }
}

module attributes {stable_mosaic.version = 11 : i64} {
  func.func @_mm_kernel(%arg0: i32, %arg1: i32, %arg2: memref<16x4xbf16, #tpu.memory_space<vmem>>, %arg3: memref<4x128xbf16, #tpu.memory_space<vmem>>, %arg4: memref<16x128xbf16, #tpu.memory_space<vmem>>) attributes {dimension_semantics = [#tpu.dimension_semantics<parallel>, #tpu.dimension_semantics<parallel>], iteration_bounds = array<i64: 2, 1>, scalar_prefetch = 0 : i64, scratch_operands = 0 : i64, tpu.core_type = #tpu.core_type<tc>, window_params = [{transform_indices = @transform_0, window_bounds = array<i64: 16, 4>}, {transform_indices = @transform_1, window_bounds = array<i64: 4, 128>}, {transform_indices = @transform_2, window_bounds = array<i64: 16, 128>}]} {
    %c0 = arith.constant 0 : index
    %c0_0 = arith.constant 0 : index
    %0 = vector.load %arg2[%c0, %c0_0] : memref<16x4xbf16, #tpu.memory_space<vmem>>, vector<16x4xbf16>
    %c0_1 = arith.constant 0 : index
    %c0_2 = arith.constant 0 : index
    %1 = vector.load %arg3[%c0_1, %c0_2] : memref<4x128xbf16, #tpu.memory_space<vmem>>, vector<4x128xbf16>
    %cst = arith.constant dense<0.000000e+00> : vector<16x128xf32>
    %2 = tpu.matmul %0, %1, %cst {dimension_numbers = #tpu.dot_dimension_numbers<[1], [0], [0], [1], [0, 0, 1, 1], [], []>} : vector<16x4xbf16>, vector<4x128xbf16>, vector<16x128xf32> -> vector<16x128xf32>
    %3 = arith.truncf %2 : vector<16x128xf32> to vector<16x128xbf16>
    %c0_3 = arith.constant 0 : index
    %c0_4 = arith.constant 0 : index
    %4 = vector.load %arg4[%c0_3, %c0_4] : memref<16x128xbf16, #tpu.memory_space<vmem>>, vector<16x128xbf16>
    tpu.vector_store %arg4[%c0_3, %c0_4], %3 {strides = array<i32>} : memref<16x128xbf16, #tpu.memory_space<vmem>>, vector<16x128xbf16>,
    return
  }
  func.func @transform_0(%arg0: i32, %arg1: i32) -> (i32, i32) {
    %c0_i32 = arith.constant 0 : i32
    %c0_i32_0 = arith.constant 0 : i32
    return %arg0, %c0_i32 : i32, i32
  }
  func.func @transform_1(%arg0: i32, %arg1: i32) -> (i32, i32) {
    %c0_i32 = arith.constant 0 : i32
    %c0_i32_0 = arith.constant 0 : i32
    return %c0_i32, %arg1 : i32, i32
  }
  func.func @transform_2(%arg0: i32, %arg1: i32) -> (i32, i32) {
    %c0_i32 = arith.constant 0 : i32
    return %arg0, %arg1 : i32, i32
  }
}

module attributes {stable_mosaic.version = 11 : i64} {
  func.func @_bn_apply_kernel(%arg0: i32, %arg1: memref<1x128xbf16, #tpu.memory_space<vmem>>, %arg2: memref<1x128xbf16, #tpu.memory_space<vmem>>, %arg3: memref<1x128xf32, #tpu.memory_space<vmem>>, %arg4: memref<1x128xf32, #tpu.memory_space<vmem>>, %arg5: memref<1x128xbf16, #tpu.memory_space<vmem>>) attributes {dimension_semantics = [#tpu.dimension_semantics<parallel>], iteration_bounds = array<i64: 1>, scalar_prefetch = 0 : i64, scratch_operands = 0 : i64, tpu.core_type = #tpu.core_type<tc>, window_params = [{transform_indices = @transform_0, window_bounds = array<i64: 1, 128>}, {transform_indices = @transform_1, window_bounds = array<i64: 1, 128>}, {pipeline_mode = #tpu.pipeline_mode<synchronous>, transform_indices = @transform_2, window_bounds = array<i64: 1, 128>}, {pipeline_mode = #tpu.pipeline_mode<synchronous>, transform_indices = @transform_3, window_bounds = array<i64: 1, 128>}, {transform_indices = @transform_4, window_bounds = array<i64: 1, 128>}]} {
    %c0 = arith.constant 0 : index
    %c0_0 = arith.constant 0 : index
    %0 = vector.load %arg1[%c0, %c0_0] : memref<1x128xbf16, #tpu.memory_space<vmem>>, vector<1x128xbf16>
    %1 = arith.extf %0 : vector<1x128xbf16> to vector<1x128xf32>
    %c0_1 = arith.constant 0 : index
    %c0_2 = arith.constant 0 : index
    %2 = vector.load %arg3[%c0_1, %c0_2] : memref<1x128xf32, #tpu.memory_space<vmem>>, vector<1x128xf32>
    %3 = arith.mulf %1, %2 : vector<1x128xf32>
    %c0_3 = arith.constant 0 : index
    %c0_4 = arith.constant 0 : index
    %4 = vector.load %arg4[%c0_3, %c0_4] : memref<1x128xf32, #tpu.memory_space<vmem>>, vector<1x128xf32>
    %5 = arith.addf %3, %4 : vector<1x128xf32>
    %cst = arith.constant 0.000000e+00 : f32
    %6 = vector.broadcast %cst : f32 to vector<1x128xf32>
    %7 = arith.maximumf %5, %6 : vector<1x128xf32>
    %c0_5 = arith.constant 0 : index
    %c0_6 = arith.constant 0 : index
    %8 = vector.load %arg2[%c0_5, %c0_6] : memref<1x128xbf16, #tpu.memory_space<vmem>>, vector<1x128xbf16>
    %9 = arith.extf %8 : vector<1x128xbf16> to vector<1x128xf32>
    %10 = arith.addf %7, %9 : vector<1x128xf32>
    %11 = arith.truncf %10 : vector<1x128xf32> to vector<1x128xbf16>
    %c0_7 = arith.constant 0 : index
    %c0_8 = arith.constant 0 : index
    %12 = vector.load %arg5[%c0_7, %c0_8] : memref<1x128xbf16, #tpu.memory_space<vmem>>, vector<1x128xbf16>
    tpu.vector_store %arg5[%c0_7, %c0_8], %11 {strides = array<i32>} : memref<1x128xbf16, #tpu.memory_space<vmem>>, vector<1x128xbf16>,
    return
  }
  func.func @transform_0(%arg0: i32) -> (i32, i32) {
    %c0_i32 = arith.constant 0 : i32
    %c0_i32_0 = arith.constant 0 : i32
    return %arg0, %c0_i32 : i32, i32
  }
  func.func @transform_1(%arg0: i32) -> (i32, i32) {
    %c0_i32 = arith.constant 0 : i32
    %c0_i32_0 = arith.constant 0 : i32
    return %arg0, %c0_i32 : i32, i32
  }
  func.func @transform_2(%arg0: i32) -> (i32, i32) {
    %c0_i32 = arith.constant 0 : i32
    %c0_i32_0 = arith.constant 0 : i32
    %c0_i32_1 = arith.constant 0 : i32
    return %c0_i32, %c0_i32_0 : i32, i32
  }
  func.func @transform_3(%arg0: i32) -> (i32, i32) {
    %c0_i32 = arith.constant 0 : i32
    %c0_i32_0 = arith.constant 0 : i32
    %c0_i32_1 = arith.constant 0 : i32
    return %c0_i32, %c0_i32_0 : i32, i32
  }
  func.func @transform_4(%arg0: i32) -> (i32, i32) {
    %c0_i32 = arith.constant 0 : i32
    %c0_i32_0 = arith.constant 0 : i32
    return %arg0, %c0_i32 : i32, i32
  }
}

module attributes {stable_mosaic.version = 11 : i64} {
  func.func @_tapconv_kernel(%arg0: i32, %arg1: memref<1x5x20xbf16, #tpu.memory_space<vmem>>, %arg2: memref<2x20x128xbf16, #tpu.memory_space<vmem>>, %arg3: memref<1x4x128xbf16, #tpu.memory_space<vmem>>, %arg4: memref<1x1x128xf32, #tpu.memory_space<vmem>>, %arg5: memref<1x1x128xf32, #tpu.memory_space<vmem>>) attributes {dimension_semantics = [#tpu.dimension_semantics<parallel>], iteration_bounds = array<i64: 2>, scalar_prefetch = 0 : i64, scratch_operands = 0 : i64, tpu.core_type = #tpu.core_type<tc>, window_params = [{transform_indices = @transform_0, window_bounds = array<i64: 1, 5, 20>}, {pipeline_mode = #tpu.pipeline_mode<synchronous>, transform_indices = @transform_1, window_bounds = array<i64: 2, 20, 128>}, {transform_indices = @transform_2, window_bounds = array<i64: 1, 4, 128>}, {transform_indices = @transform_3, window_bounds = array<i64: 1, 1, 128>}, {transform_indices = @transform_4, window_bounds = array<i64: 1, 1, 128>}]} {
    %c0 = arith.constant 0 : index
    %c0_0 = arith.constant 0 : index
    %c0_1 = arith.constant 0 : index
    %0 = vector.load %arg1[%c0, %c0_0, %c0_1] : memref<1x5x20xbf16, #tpu.memory_space<vmem>>, vector<1x4x20xbf16>
    %1 = vector.shape_cast %0 : vector<1x4x20xbf16> to vector<4x20xbf16>
    %c0_2 = arith.constant 0 : index
    %c0_3 = arith.constant 0 : index
    %c0_4 = arith.constant 0 : index
    %2 = vector.load %arg2[%c0_2, %c0_3, %c0_4] : memref<2x20x128xbf16, #tpu.memory_space<vmem>>, vector<1x20x128xbf16>
    %3 = vector.shape_cast %2 : vector<1x20x128xbf16> to vector<20x128xbf16>
    %cst = arith.constant dense<0.000000e+00> : vector<4x128xf32>
    %4 = tpu.matmul %1, %3, %cst {dimension_numbers = #tpu.dot_dimension_numbers<[1], [0], [0], [1], [0, 0, 1, 1], [], []>} : vector<4x20xbf16>, vector<20x128xbf16>, vector<4x128xf32> -> vector<4x128xf32>
    %c0_5 = arith.constant 0 : index
    %c1 = arith.constant 1 : index
    %c0_6 = arith.constant 0 : index
    %5 = vector.load %arg1[%c0_5, %c1, %c0_6] : memref<1x5x20xbf16, #tpu.memory_space<vmem>>, vector<1x4x20xbf16>
    %6 = vector.shape_cast %5 : vector<1x4x20xbf16> to vector<4x20xbf16>
    %c1_7 = arith.constant 1 : index
    %c0_8 = arith.constant 0 : index
    %c0_9 = arith.constant 0 : index
    %7 = vector.load %arg2[%c1_7, %c0_8, %c0_9] : memref<2x20x128xbf16, #tpu.memory_space<vmem>>, vector<1x20x128xbf16>
    %8 = vector.shape_cast %7 : vector<1x20x128xbf16> to vector<20x128xbf16>
    %cst_10 = arith.constant dense<0.000000e+00> : vector<4x128xf32>
    %9 = tpu.matmul %6, %8, %cst_10 {dimension_numbers = #tpu.dot_dimension_numbers<[1], [0], [0], [1], [0, 0, 1, 1], [], []>} : vector<4x20xbf16>, vector<20x128xbf16>, vector<4x128xf32> -> vector<4x128xf32>
    %10 = arith.addf %4, %9 : vector<4x128xf32>
    %cst_11 = arith.constant dense<0.000000e+00> : vector<128xf32>
    %11 = vector.multi_reduction <add>, %10, %cst_11 [0] : vector<4x128xf32> to vector<128xf32>
    %12 = vector.shape_cast %11 : vector<128xf32> to vector<1x128xf32>
    %c0_12 = arith.constant 0 : index
    %c0_13 = arith.constant 0 : index
    %c0_14 = arith.constant 0 : index
    %13 = vector.load %arg4[%c0_12, %c0_13, %c0_14] : memref<1x1x128xf32, #tpu.memory_space<vmem>>, vector<1x1x128xf32>
    %14 = vector.shape_cast %13 : vector<1x1x128xf32> to vector<1x128xf32>
    %15 = vector.shape_cast %12 : vector<1x128xf32> to vector<1x1x128xf32>
    tpu.vector_store %arg4[%c0_12, %c0_13, %c0_14], %15 {strides = array<i32>} : memref<1x1x128xf32, #tpu.memory_space<vmem>>, vector<1x1x128xf32>,
    %16 = arith.mulf %10, %10 : vector<4x128xf32>
    %cst_15 = arith.constant dense<0.000000e+00> : vector<128xf32>
    %17 = vector.multi_reduction <add>, %16, %cst_15 [0] : vector<4x128xf32> to vector<128xf32>
    %18 = vector.shape_cast %17 : vector<128xf32> to vector<1x128xf32>
    %c0_16 = arith.constant 0 : index
    %c0_17 = arith.constant 0 : index
    %c0_18 = arith.constant 0 : index
    %19 = vector.load %arg5[%c0_16, %c0_17, %c0_18] : memref<1x1x128xf32, #tpu.memory_space<vmem>>, vector<1x1x128xf32>
    %20 = vector.shape_cast %19 : vector<1x1x128xf32> to vector<1x128xf32>
    %21 = vector.shape_cast %18 : vector<1x128xf32> to vector<1x1x128xf32>
    tpu.vector_store %arg5[%c0_16, %c0_17, %c0_18], %21 {strides = array<i32>} : memref<1x1x128xf32, #tpu.memory_space<vmem>>, vector<1x1x128xf32>,
    %22 = arith.truncf %10 : vector<4x128xf32> to vector<4x128xbf16>
    %c0_19 = arith.constant 0 : index
    %c0_20 = arith.constant 0 : index
    %c0_21 = arith.constant 0 : index
    %23 = vector.load %arg3[%c0_19, %c0_20, %c0_21] : memref<1x4x128xbf16, #tpu.memory_space<vmem>>, vector<1x4x128xbf16>
    %24 = vector.shape_cast %23 : vector<1x4x128xbf16> to vector<4x128xbf16>
    %25 = vector.shape_cast %22 : vector<4x128xbf16> to vector<1x4x128xbf16>
    tpu.vector_store %arg3[%c0_19, %c0_20, %c0_21], %25 {strides = array<i32>} : memref<1x4x128xbf16, #tpu.memory_space<vmem>>, vector<1x4x128xbf16>,
    return
  }
  func.func @transform_0(%arg0: i32) -> (i32, i32, i32) {
    %c0_i32 = arith.constant 0 : i32
    %c0_i32_0 = arith.constant 0 : i32
    %c0_i32_1 = arith.constant 0 : i32
    return %arg0, %c0_i32, %c0_i32_0 : i32, i32, i32
  }
  func.func @transform_1(%arg0: i32) -> (i32, i32, i32) {
    %c0_i32 = arith.constant 0 : i32
    %c0_i32_0 = arith.constant 0 : i32
    %c0_i32_1 = arith.constant 0 : i32
    %c0_i32_2 = arith.constant 0 : i32
    return %c0_i32, %c0_i32_0, %c0_i32_1 : i32, i32, i32
  }
  func.func @transform_2(%arg0: i32) -> (i32, i32, i32) {
    %c0_i32 = arith.constant 0 : i32
    %c0_i32_0 = arith.constant 0 : i32
    %c0_i32_1 = arith.constant 0 : i32
    return %arg0, %c0_i32, %c0_i32_0 : i32, i32, i32
  }
  func.func @transform_3(%arg0: i32) -> (i32, i32, i32) {
    %c0_i32 = arith.constant 0 : i32
    %c0_i32_0 = arith.constant 0 : i32
    %c0_i32_1 = arith.constant 0 : i32
    return %arg0, %c0_i32, %c0_i32_0 : i32, i32, i32
  }
  func.func @transform_4(%arg0: i32) -> (i32, i32, i32) {
    %c0_i32 = arith.constant 0 : i32
    %c0_i32_0 = arith.constant 0 : i32
    %c0_i32_1 = arith.constant 0 : i32
    return %arg0, %c0_i32, %c0_i32_0 : i32, i32, i32
  }
}

module attributes {stable_mosaic.version = 11 : i64} {
  func.func @_bn_apply_kernel(%arg0: i32, %arg1: memref<1x512xbf16, #tpu.memory_space<vmem>>, %arg2: memref<1x512xf32, #tpu.memory_space<vmem>>, %arg3: memref<1x512xf32, #tpu.memory_space<vmem>>, %arg4: memref<1x512xbf16, #tpu.memory_space<vmem>>) attributes {dimension_semantics = [#tpu.dimension_semantics<parallel>], iteration_bounds = array<i64: 1>, scalar_prefetch = 0 : i64, scratch_operands = 0 : i64, tpu.core_type = #tpu.core_type<tc>, window_params = [{transform_indices = @transform_0, window_bounds = array<i64: 1, 512>}, {pipeline_mode = #tpu.pipeline_mode<synchronous>, transform_indices = @transform_1, window_bounds = array<i64: 1, 512>}, {pipeline_mode = #tpu.pipeline_mode<synchronous>, transform_indices = @transform_2, window_bounds = array<i64: 1, 512>}, {transform_indices = @transform_3, window_bounds = array<i64: 1, 512>}]} {
    %c0 = arith.constant 0 : index
    %c0_0 = arith.constant 0 : index
    %0 = vector.load %arg1[%c0, %c0_0] : memref<1x512xbf16, #tpu.memory_space<vmem>>, vector<1x512xbf16>
    %1 = arith.extf %0 : vector<1x512xbf16> to vector<1x512xf32>
    %c0_1 = arith.constant 0 : index
    %c0_2 = arith.constant 0 : index
    %2 = vector.load %arg2[%c0_1, %c0_2] : memref<1x512xf32, #tpu.memory_space<vmem>>, vector<1x512xf32>
    %3 = arith.mulf %1, %2 : vector<1x512xf32>
    %c0_3 = arith.constant 0 : index
    %c0_4 = arith.constant 0 : index
    %4 = vector.load %arg3[%c0_3, %c0_4] : memref<1x512xf32, #tpu.memory_space<vmem>>, vector<1x512xf32>
    %5 = arith.addf %3, %4 : vector<1x512xf32>
    %cst = arith.constant 0.000000e+00 : f32
    %6 = vector.broadcast %cst : f32 to vector<1x512xf32>
    %7 = arith.maximumf %5, %6 : vector<1x512xf32>
    %8 = arith.truncf %7 : vector<1x512xf32> to vector<1x512xbf16>
    %c0_5 = arith.constant 0 : index
    %c0_6 = arith.constant 0 : index
    %9 = vector.load %arg4[%c0_5, %c0_6] : memref<1x512xbf16, #tpu.memory_space<vmem>>, vector<1x512xbf16>
    tpu.vector_store %arg4[%c0_5, %c0_6], %8 {strides = array<i32>} : memref<1x512xbf16, #tpu.memory_space<vmem>>, vector<1x512xbf16>,
    return
  }
  func.func @transform_0(%arg0: i32) -> (i32, i32) {
    %c0_i32 = arith.constant 0 : i32
    %c0_i32_0 = arith.constant 0 : i32
    return %arg0, %c0_i32 : i32, i32
  }
  func.func @transform_1(%arg0: i32) -> (i32, i32) {
    %c0_i32 = arith.constant 0 : i32
    %c0_i32_0 = arith.constant 0 : i32
    %c0_i32_1 = arith.constant 0 : i32
    return %c0_i32, %c0_i32_0 : i32, i32
  }
  func.func @transform_2(%arg0: i32) -> (i32, i32) {
    %c0_i32 = arith.constant 0 : i32
    %c0_i32_0 = arith.constant 0 : i32
    %c0_i32_1 = arith.constant 0 : i32
    return %c0_i32, %c0_i32_0 : i32, i32
  }
  func.func @transform_3(%arg0: i32) -> (i32, i32) {
    %c0_i32 = arith.constant 0 : i32
    %c0_i32_0 = arith.constant 0 : i32
    return %arg0, %c0_i32 : i32, i32
  }
}

module attributes {stable_mosaic.version = 11 : i64} {
  func.func @_bn_apply_kernel(%arg0: i32, %arg1: memref<1x512xbf16, #tpu.memory_space<vmem>>, %arg2: memref<1x512xbf16, #tpu.memory_space<vmem>>, %arg3: memref<1x512xf32, #tpu.memory_space<vmem>>, %arg4: memref<1x512xf32, #tpu.memory_space<vmem>>, %arg5: memref<1x512xbf16, #tpu.memory_space<vmem>>) attributes {dimension_semantics = [#tpu.dimension_semantics<parallel>], iteration_bounds = array<i64: 1>, scalar_prefetch = 0 : i64, scratch_operands = 0 : i64, tpu.core_type = #tpu.core_type<tc>, window_params = [{transform_indices = @transform_0, window_bounds = array<i64: 1, 512>}, {transform_indices = @transform_1, window_bounds = array<i64: 1, 512>}, {pipeline_mode = #tpu.pipeline_mode<synchronous>, transform_indices = @transform_2, window_bounds = array<i64: 1, 512>}, {pipeline_mode = #tpu.pipeline_mode<synchronous>, transform_indices = @transform_3, window_bounds = array<i64: 1, 512>}, {transform_indices = @transform_4, window_bounds = array<i64: 1, 512>}]} {
    %c0 = arith.constant 0 : index
    %c0_0 = arith.constant 0 : index
    %0 = vector.load %arg1[%c0, %c0_0] : memref<1x512xbf16, #tpu.memory_space<vmem>>, vector<1x512xbf16>
    %1 = arith.extf %0 : vector<1x512xbf16> to vector<1x512xf32>
    %c0_1 = arith.constant 0 : index
    %c0_2 = arith.constant 0 : index
    %2 = vector.load %arg3[%c0_1, %c0_2] : memref<1x512xf32, #tpu.memory_space<vmem>>, vector<1x512xf32>
    %3 = arith.mulf %1, %2 : vector<1x512xf32>
    %c0_3 = arith.constant 0 : index
    %c0_4 = arith.constant 0 : index
    %4 = vector.load %arg4[%c0_3, %c0_4] : memref<1x512xf32, #tpu.memory_space<vmem>>, vector<1x512xf32>
    %5 = arith.addf %3, %4 : vector<1x512xf32>
    %c0_5 = arith.constant 0 : index
    %c0_6 = arith.constant 0 : index
    %6 = vector.load %arg2[%c0_5, %c0_6] : memref<1x512xbf16, #tpu.memory_space<vmem>>, vector<1x512xbf16>
    %7 = arith.extf %6 : vector<1x512xbf16> to vector<1x512xf32>
    %8 = arith.addf %5, %7 : vector<1x512xf32>
    %cst = arith.constant 0.000000e+00 : f32
    %9 = vector.broadcast %cst : f32 to vector<1x512xf32>
    %10 = arith.maximumf %8, %9 : vector<1x512xf32>
    %11 = arith.truncf %10 : vector<1x512xf32> to vector<1x512xbf16>
    %c0_7 = arith.constant 0 : index
    %c0_8 = arith.constant 0 : index
    %12 = vector.load %arg5[%c0_7, %c0_8] : memref<1x512xbf16, #tpu.memory_space<vmem>>, vector<1x512xbf16>
    tpu.vector_store %arg5[%c0_7, %c0_8], %11 {strides = array<i32>} : memref<1x512xbf16, #tpu.memory_space<vmem>>, vector<1x512xbf16>,
    return
  }
  func.func @transform_0(%arg0: i32) -> (i32, i32) {
    %c0_i32 = arith.constant 0 : i32
    %c0_i32_0 = arith.constant 0 : i32
    return %arg0, %c0_i32 : i32, i32
  }
  func.func @transform_1(%arg0: i32) -> (i32, i32) {
    %c0_i32 = arith.constant 0 : i32
    %c0_i32_0 = arith.constant 0 : i32
    return %arg0, %c0_i32 : i32, i32
  }
  func.func @transform_2(%arg0: i32) -> (i32, i32) {
    %c0_i32 = arith.constant 0 : i32
    %c0_i32_0 = arith.constant 0 : i32
    %c0_i32_1 = arith.constant 0 : i32
    return %c0_i32, %c0_i32_0 : i32, i32
  }
  func.func @transform_3(%arg0: i32) -> (i32, i32) {
    %c0_i32 = arith.constant 0 : i32
    %c0_i32_0 = arith.constant 0 : i32
    %c0_i32_1 = arith.constant 0 : i32
    return %c0_i32, %c0_i32_0 : i32, i32
  }
  func.func @transform_4(%arg0: i32) -> (i32, i32) {
    %c0_i32 = arith.constant 0 : i32
    %c0_i32_0 = arith.constant 0 : i32
    return %arg0, %c0_i32 : i32, i32
  }
}

module attributes {stable_mosaic.version = 11 : i64} {
  func.func @_tapconv_kernel(%arg0: i32, %arg1: memref<1x10x40xbf16, #tpu.memory_space<vmem>>, %arg2: memref<3x40x128xbf16, #tpu.memory_space<vmem>>, %arg3: memref<1x8x128xbf16, #tpu.memory_space<vmem>>, %arg4: memref<1x1x128xf32, #tpu.memory_space<vmem>>, %arg5: memref<1x1x128xf32, #tpu.memory_space<vmem>>) attributes {dimension_semantics = [#tpu.dimension_semantics<parallel>], iteration_bounds = array<i64: 2>, scalar_prefetch = 0 : i64, scratch_operands = 0 : i64, tpu.core_type = #tpu.core_type<tc>, window_params = [{transform_indices = @transform_0, window_bounds = array<i64: 1, 10, 40>}, {pipeline_mode = #tpu.pipeline_mode<synchronous>, transform_indices = @transform_1, window_bounds = array<i64: 3, 40, 128>}, {transform_indices = @transform_2, window_bounds = array<i64: 1, 8, 128>}, {transform_indices = @transform_3, window_bounds = array<i64: 1, 1, 128>}, {transform_indices = @transform_4, window_bounds = array<i64: 1, 1, 128>}]} {
    %c0 = arith.constant 0 : index
    %c0_0 = arith.constant 0 : index
    %c0_1 = arith.constant 0 : index
    %0 = vector.load %arg1[%c0, %c0_0, %c0_1] : memref<1x10x40xbf16, #tpu.memory_space<vmem>>, vector<1x8x40xbf16>
    %1 = vector.shape_cast %0 : vector<1x8x40xbf16> to vector<8x40xbf16>
    %c0_2 = arith.constant 0 : index
    %c0_3 = arith.constant 0 : index
    %c0_4 = arith.constant 0 : index
    %2 = vector.load %arg2[%c0_2, %c0_3, %c0_4] : memref<3x40x128xbf16, #tpu.memory_space<vmem>>, vector<1x40x128xbf16>
    %3 = vector.shape_cast %2 : vector<1x40x128xbf16> to vector<40x128xbf16>
    %cst = arith.constant dense<0.000000e+00> : vector<8x128xf32>
    %4 = tpu.matmul %1, %3, %cst {dimension_numbers = #tpu.dot_dimension_numbers<[1], [0], [0], [1], [0, 0, 1, 1], [], []>} : vector<8x40xbf16>, vector<40x128xbf16>, vector<8x128xf32> -> vector<8x128xf32>
    %c0_5 = arith.constant 0 : index
    %c1 = arith.constant 1 : index
    %c0_6 = arith.constant 0 : index
    %5 = vector.load %arg1[%c0_5, %c1, %c0_6] : memref<1x10x40xbf16, #tpu.memory_space<vmem>>, vector<1x8x40xbf16>
    %6 = vector.shape_cast %5 : vector<1x8x40xbf16> to vector<8x40xbf16>
    %c1_7 = arith.constant 1 : index
    %c0_8 = arith.constant 0 : index
    %c0_9 = arith.constant 0 : index
    %7 = vector.load %arg2[%c1_7, %c0_8, %c0_9] : memref<3x40x128xbf16, #tpu.memory_space<vmem>>, vector<1x40x128xbf16>
    %8 = vector.shape_cast %7 : vector<1x40x128xbf16> to vector<40x128xbf16>
    %cst_10 = arith.constant dense<0.000000e+00> : vector<8x128xf32>
    %9 = tpu.matmul %6, %8, %cst_10 {dimension_numbers = #tpu.dot_dimension_numbers<[1], [0], [0], [1], [0, 0, 1, 1], [], []>} : vector<8x40xbf16>, vector<40x128xbf16>, vector<8x128xf32> -> vector<8x128xf32>
    %10 = arith.addf %4, %9 : vector<8x128xf32>
    %c0_11 = arith.constant 0 : index
    %c2 = arith.constant 2 : index
    %c0_12 = arith.constant 0 : index
    %11 = vector.load %arg1[%c0_11, %c2, %c0_12] : memref<1x10x40xbf16, #tpu.memory_space<vmem>>, vector<1x8x40xbf16>
    %12 = vector.shape_cast %11 : vector<1x8x40xbf16> to vector<8x40xbf16>
    %c2_13 = arith.constant 2 : index
    %c0_14 = arith.constant 0 : index
    %c0_15 = arith.constant 0 : index
    %13 = vector.load %arg2[%c2_13, %c0_14, %c0_15] : memref<3x40x128xbf16, #tpu.memory_space<vmem>>, vector<1x40x128xbf16>
    %14 = vector.shape_cast %13 : vector<1x40x128xbf16> to vector<40x128xbf16>
    %cst_16 = arith.constant dense<0.000000e+00> : vector<8x128xf32>
    %15 = tpu.matmul %12, %14, %cst_16 {dimension_numbers = #tpu.dot_dimension_numbers<[1], [0], [0], [1], [0, 0, 1, 1], [], []>} : vector<8x40xbf16>, vector<40x128xbf16>, vector<8x128xf32> -> vector<8x128xf32>
    %16 = arith.addf %10, %15 : vector<8x128xf32>
    %cst_17 = arith.constant dense<0.000000e+00> : vector<128xf32>
    %17 = vector.multi_reduction <add>, %16, %cst_17 [0] : vector<8x128xf32> to vector<128xf32>
    %18 = vector.shape_cast %17 : vector<128xf32> to vector<1x128xf32>
    %c0_18 = arith.constant 0 : index
    %c0_19 = arith.constant 0 : index
    %c0_20 = arith.constant 0 : index
    %19 = vector.load %arg4[%c0_18, %c0_19, %c0_20] : memref<1x1x128xf32, #tpu.memory_space<vmem>>, vector<1x1x128xf32>
    %20 = vector.shape_cast %19 : vector<1x1x128xf32> to vector<1x128xf32>
    %21 = vector.shape_cast %18 : vector<1x128xf32> to vector<1x1x128xf32>
    tpu.vector_store %arg4[%c0_18, %c0_19, %c0_20], %21 {strides = array<i32>} : memref<1x1x128xf32, #tpu.memory_space<vmem>>, vector<1x1x128xf32>,
    %22 = arith.mulf %16, %16 : vector<8x128xf32>
    %cst_21 = arith.constant dense<0.000000e+00> : vector<128xf32>
    %23 = vector.multi_reduction <add>, %22, %cst_21 [0] : vector<8x128xf32> to vector<128xf32>
    %24 = vector.shape_cast %23 : vector<128xf32> to vector<1x128xf32>
    %c0_22 = arith.constant 0 : index
    %c0_23 = arith.constant 0 : index
    %c0_24 = arith.constant 0 : index
    %25 = vector.load %arg5[%c0_22, %c0_23, %c0_24] : memref<1x1x128xf32, #tpu.memory_space<vmem>>, vector<1x1x128xf32>
    %26 = vector.shape_cast %25 : vector<1x1x128xf32> to vector<1x128xf32>
    %27 = vector.shape_cast %24 : vector<1x128xf32> to vector<1x1x128xf32>
    tpu.vector_store %arg5[%c0_22, %c0_23, %c0_24], %27 {strides = array<i32>} : memref<1x1x128xf32, #tpu.memory_space<vmem>>, vector<1x1x128xf32>,
    %28 = arith.truncf %16 : vector<8x128xf32> to vector<8x128xbf16>
    %c0_25 = arith.constant 0 : index
    %c0_26 = arith.constant 0 : index
    %c0_27 = arith.constant 0 : index
    %29 = vector.load %arg3[%c0_25, %c0_26, %c0_27] : memref<1x8x128xbf16, #tpu.memory_space<vmem>>, vector<1x8x128xbf16>
    %30 = vector.shape_cast %29 : vector<1x8x128xbf16> to vector<8x128xbf16>
    %31 = vector.shape_cast %28 : vector<8x128xbf16> to vector<1x8x128xbf16>
    tpu.vector_store %arg3[%c0_25, %c0_26, %c0_27], %31 {strides = array<i32>} : memref<1x8x128xbf16, #tpu.memory_space<vmem>>, vector<1x8x128xbf16>,
    return
  }
  func.func @transform_0(%arg0: i32) -> (i32, i32, i32) {
    %c0_i32 = arith.constant 0 : i32
    %c0_i32_0 = arith.constant 0 : i32
    %c0_i32_1 = arith.constant 0 : i32
    return %arg0, %c0_i32, %c0_i32_0 : i32, i32, i32
  }
  func.func @transform_1(%arg0: i32) -> (i32, i32, i32) {
    %c0_i32 = arith.constant 0 : i32
    %c0_i32_0 = arith.constant 0 : i32
    %c0_i32_1 = arith.constant 0 : i32
    %c0_i32_2 = arith.constant 0 : i32
    return %c0_i32, %c0_i32_0, %c0_i32_1 : i32, i32, i32
  }
  func.func @transform_2(%arg0: i32) -> (i32, i32, i32) {
    %c0_i32 = arith.constant 0 : i32
    %c0_i32_0 = arith.constant 0 : i32
    %c0_i32_1 = arith.constant 0 : i32
    return %arg0, %c0_i32, %c0_i32_0 : i32, i32, i32
  }
  func.func @transform_3(%arg0: i32) -> (i32, i32, i32) {
    %c0_i32 = arith.constant 0 : i32
    %c0_i32_0 = arith.constant 0 : i32
    %c0_i32_1 = arith.constant 0 : i32
    return %arg0, %c0_i32, %c0_i32_0 : i32, i32, i32
  }
  func.func @transform_4(%arg0: i32) -> (i32, i32, i32) {
    %c0_i32 = arith.constant 0 : i32
    %c0_i32_0 = arith.constant 0 : i32
    %c0_i32_1 = arith.constant 0 : i32
    return %arg0, %c0_i32, %c0_i32_0 : i32, i32, i32
  }
}

module attributes {stable_mosaic.version = 11 : i64} {
  func.func @_tapconv_kernel(%arg0: i32, %arg1: memref<1x8x32xbf16, #tpu.memory_space<vmem>>, %arg2: memref<1x32x128xbf16, #tpu.memory_space<vmem>>, %arg3: memref<1x128xf32, #tpu.memory_space<vmem>>, %arg4: memref<1x8x128xbf16, #tpu.memory_space<vmem>>) attributes {dimension_semantics = [#tpu.dimension_semantics<parallel>], iteration_bounds = array<i64: 2>, scalar_prefetch = 0 : i64, scratch_operands = 0 : i64, tpu.core_type = #tpu.core_type<tc>, window_params = [{transform_indices = @transform_0, window_bounds = array<i64: 1, 8, 32>}, {pipeline_mode = #tpu.pipeline_mode<synchronous>, transform_indices = @transform_1, window_bounds = array<i64: 1, 32, 128>}, {pipeline_mode = #tpu.pipeline_mode<synchronous>, transform_indices = @transform_2, window_bounds = array<i64: 1, 128>}, {transform_indices = @transform_3, window_bounds = array<i64: 1, 8, 128>}]} {
    %c0 = arith.constant 0 : index
    %c0_0 = arith.constant 0 : index
    %c0_1 = arith.constant 0 : index
    %0 = vector.load %arg1[%c0, %c0_0, %c0_1] : memref<1x8x32xbf16, #tpu.memory_space<vmem>>, vector<1x8x32xbf16>
    %1 = vector.shape_cast %0 : vector<1x8x32xbf16> to vector<8x32xbf16>
    %c0_2 = arith.constant 0 : index
    %c0_3 = arith.constant 0 : index
    %c0_4 = arith.constant 0 : index
    %2 = vector.load %arg2[%c0_2, %c0_3, %c0_4] : memref<1x32x128xbf16, #tpu.memory_space<vmem>>, vector<1x32x128xbf16>
    %3 = vector.shape_cast %2 : vector<1x32x128xbf16> to vector<32x128xbf16>
    %cst = arith.constant dense<0.000000e+00> : vector<8x128xf32>
    %4 = tpu.matmul %1, %3, %cst {dimension_numbers = #tpu.dot_dimension_numbers<[1], [0], [0], [1], [0, 0, 1, 1], [], []>} : vector<8x32xbf16>, vector<32x128xbf16>, vector<8x128xf32> -> vector<8x128xf32>
    %c0_5 = arith.constant 0 : index
    %c0_6 = arith.constant 0 : index
    %5 = vector.load %arg3[%c0_5, %c0_6] : memref<1x128xf32, #tpu.memory_space<vmem>>, vector<1x128xf32>
    %6 = vector.broadcast %5 : vector<1x128xf32> to vector<8x128xf32>
    %7 = arith.addf %4, %6 : vector<8x128xf32>
    %8 = math.tanh %7 : vector<8x128xf32>
    %9 = arith.truncf %8 : vector<8x128xf32> to vector<8x128xbf16>
    %c0_7 = arith.constant 0 : index
    %c0_8 = arith.constant 0 : index
    %c0_9 = arith.constant 0 : index
    %10 = vector.load %arg4[%c0_7, %c0_8, %c0_9] : memref<1x8x128xbf16, #tpu.memory_space<vmem>>, vector<1x8x128xbf16>
    %11 = vector.shape_cast %10 : vector<1x8x128xbf16> to vector<8x128xbf16>
    %12 = vector.shape_cast %9 : vector<8x128xbf16> to vector<1x8x128xbf16>
    tpu.vector_store %arg4[%c0_7, %c0_8, %c0_9], %12 {strides = array<i32>} : memref<1x8x128xbf16, #tpu.memory_space<vmem>>, vector<1x8x128xbf16>,
    return
  }
  func.func @transform_0(%arg0: i32) -> (i32, i32, i32) {
    %c0_i32 = arith.constant 0 : i32
    %c0_i32_0 = arith.constant 0 : i32
    %c0_i32_1 = arith.constant 0 : i32
    return %arg0, %c0_i32, %c0_i32_0 : i32, i32, i32
  }
  func.func @transform_1(%arg0: i32) -> (i32, i32, i32) {
    %c0_i32 = arith.constant 0 : i32
    %c0_i32_0 = arith.constant 0 : i32
    %c0_i32_1 = arith.constant 0 : i32
    %c0_i32_2 = arith.constant 0 : i32
    return %c0_i32, %c0_i32_0, %c0_i32_1 : i32, i32, i32
  }
  func.func @transform_2(%arg0: i32) -> (i32, i32) {
    %c0_i32 = arith.constant 0 : i32
    %c0_i32_0 = arith.constant 0 : i32
    %c0_i32_1 = arith.constant 0 : i32
    return %c0_i32, %c0_i32_0 : i32, i32
  }
  func.func @transform_3(%arg0: i32) -> (i32, i32, i32) {
    %c0_i32 = arith.constant 0 : i32
    %c0_i32_0 = arith.constant 0 : i32
    %c0_i32_1 = arith.constant 0 : i32
    return %arg0, %c0_i32, %c0_i32_0 : i32, i32, i32
  }
}

</mosaic_0001>

<llo_original>
// kernel: forward.10
$region0: #{forward.10}
  #allocation0 [shape = 'u32[]', space=smem, size = 0x4, offset = 0x4, fixed_abs, tag = 'smem constant byte address 0x4 - core index']
  #allocation1 [shape = 'u32[72,128]{1,0:T(1,128)}', space=vmem, size = 0x9000, scoped, tag = 'internal scratch']
  %s0 = inlined_call_operand.vmem [shape: bf16[2,32], index: 0, kind: input, shape index: {}]
  %s1 = inlined_call_operand.hbm [shape: bf16[32,128], index: 1, kind: input, shape index: {}]
  %s2 = inlined_call_operand.vmem [shape: f32[1,128], index: 2, kind: input, shape index: {}]
  %s3 = inlined_call_operand.vmem [shape: bf16[2,128], index: 3, kind: output, shape index: {}]
  %s4 = sld [smem:[#allocation0]]
  $region26: #{forward.10} parent=0
    _
  %s6 = ssub.s32 1, %s4
  %s7 = scalar_select 0, %s6, %s4
  $region1: #{forward.10} parent=0
    #allocation2 [shape = 'u8[8192]{0}', space=vmem, size = 0x2000, scoped, tag = 'input window, operand 1, single buffered']
    #allocation3 [shape = 's32[1]{0}', space=sflag, size = 0x4, scoped, tag = 'scoped memory for forward.10']
    %8 = vsyncpa [#allocation3], 0
    // Predicated region
    $region2: #{forward.10} parent=1 // pred_check
      _
    $region3: #{forward.10} parent=1 // pred_check_branch
      %10 = sbr.rel (0) target = $region5
    $region4: #{forward.10} parent=1 // pred_region
      _
    $region5: #{forward.10} parent=1 // pred_fallthru
      _
    // Predicated region
    $region6: #{forward.10} parent=1 // pred_check
      _
    $region7: #{forward.10} parent=1 // pred_check_branch
      %12 = sbr.rel (0) target = $region9
    $region8: #{forward.10} parent=1 // pred_region
      %14 = vsyncadd [#allocation3], 0
      %s15 = sshll.u32 %s1, 4
      %s16 = int_to_ptr.hbm [resolvable:$true] %s15
      %s17 = sshll.u32 [#allocation2], 4
      %s18 = int_to_ptr.vmem [resolvable:$true] %s17
      %23 = dma.hbm_to_vmem [thread:$0]  %s16, 256, %s18, [#allocation3], 64, 64, 4
    $region9: #{forward.10} parent=1 // pred_fallthru
      _
    // Predicated region
    $region10: #{forward.10} parent=1 // pred_check
      _
    $region11: #{forward.10} parent=1 // pred_check_branch
      %25 = sbr.rel (0) target = $region13
    $region12: #{forward.10} parent=1 // pred_region
      _
    $region13: #{forward.10} parent=1 // pred_fallthru
      _
    // Predicated region
    $region14: #{forward.10} parent=1 // pred_check
      _
    $region15: #{forward.10} parent=1 // pred_check_branch
      %27 = sbr.rel (0) target = $region17
    $region16: #{forward.10} parent=1 // pred_region
      %29 = dma.done [#allocation3], 256
    $region17: #{forward.10} parent=1 // pred_fallthru
      _
    %v31 = vld [vmem:[%s0] sm:$0x1]
    %v32 = vld [vmem:[#allocation2] sm:$0xf]
    %v33 = vld [vmem:[#allocation2 + $0x4] sm:$0xf]
    %v34 = vld [vmem:[#allocation2 + $0x8] sm:$0xf]
    %v35 = vld [vmem:[#allocation2 + $0xc] sm:$0xf]
    %v36 = vld [vmem:[%s2] sm:$0x1]
    %v38 = vperm.slane %v36, 0
    %v44 = vunpack.c.l.b16 %v32
    %v45 = vunpack.c.l.b16 %v33
    %v46 = vunpack.c.l.b16 %v34
    %v47 = vunpack.c.l.b16 %v35
    %v48 = vpack.c.b16 %v45, %v44
    %v49 = vpack.c.b16 %v47, %v46
    %vm52 = vcmask 261120
    %v54 = vsel %vm52, %v31, 0
    %56 = vmatpush.bf16.msra.mxu0 0
    %57 = vmatpush.bf16.msra.mxu0 0
    %58 = vmatpush.bf16.msra.mxu0 0
    %59 = vmatpush.bf16.msra.mxu0 0
    %60 = vmatpush.bf16.msra.mxu0 0
    %61 = vmatpush.bf16.msra.mxu0 0
    %62 = vmatpush.bf16.msra.mxu0 %v49
    %63 = vmatpush.bf16.msra.mxu0 %v48
    %64 = vmatmul.bf16.gmra.mxu0 %v54
    %v65 = vpop.f32.mrf.mxu0
    %v66 = vadd.f32 %v38, %v65
    %v67 = vpop.f32.mrf.mxu0
    %68 = vdwg.mxu0
    %v69 = vmax.f32 %v66, 0.0
    %v70 = vpack.c.bf16 %v69, %v69
    %71 = vst [vmem:[%s3] sm:$0x1] %v70
    // Predicated region
    $region18: #{forward.10} parent=1 // pred_check
      _
    $region19: #{forward.10} parent=1 // pred_check_branch
      %73 = sbr.rel (0) target = $region21
    $region20: #{forward.10} parent=1 // pred_region
      _
    $region21: #{forward.10} parent=1 // pred_fallthru
      _
    // Predicated region
    $region22: #{forward.10} parent=1 // pred_check
      _
    $region23: #{forward.10} parent=1 // pred_check_branch
      %75 = sbr.rel (0) target = $region25
    $region24: #{forward.10} parent=1 // pred_region
      _
    $region25: #{forward.10} parent=1 // pred_fallthru
      _
    %76 = vsyncpa [#allocation3], 1

// kernel: forward.11
$region0: #{forward.11}
  #allocation0 [shape = 'u32[]', space=smem, size = 0x4, offset = 0x4, fixed_abs, tag = 'smem constant byte address 0x4 - core index']
  #allocation1 [shape = 'u32[72,128]{1,0:T(1,128)}', space=vmem, size = 0x9000, scoped, tag = 'internal scratch']
  %s0 = inlined_call_operand.vmem [shape: bf16[8,8], index: 0, kind: input, shape index: {}]
  %s1 = inlined_call_operand.vmem [shape: bf16[8,128], index: 1, kind: input, shape index: {}]
  %s2 = inlined_call_operand.vmem [shape: bf16[8,128], index: 2, kind: output, shape index: {}]
  %s3 = sld [smem:[#allocation0]]
  $region18: #{forward.11} parent=0
    _
  %s5 = ssub.s32 1, %s3
  %s6 = scalar_select 0, %s5, %s3
  // Predicated region
  $region2: #{forward.11} parent=0 // pred_check
    _
  $region3: #{forward.11} parent=0 // pred_check_branch
    %8 = sbr.rel (0) target = $region5
  $region4: #{forward.11} parent=0 // pred_region
    _
  $region5: #{forward.11} parent=0 // pred_fallthru
    _
  // Predicated region
  $region6: #{forward.11} parent=0 // pred_check
    _
  $region7: #{forward.11} parent=0 // pred_check_branch
    %10 = sbr.rel (0) target = $region9
  $region8: #{forward.11} parent=0 // pred_region
    _
  $region9: #{forward.11} parent=0 // pred_fallthru
    _
  %v12 = vld [vmem:[%s0] sm:$0xf]
  %v13 = vld [vmem:[%s1] sm:$0xf]
  %vm14 = vcmask 64512
  %v16 = vsel %vm14, %v12, 0
  %vm18 = vcmask 1043456
  %v20 = vsel %vm18, %v13, 0
  %22 = vmatpush.bf16.msra.mxu0 0
  %23 = vmatpush.bf16.msra.mxu0 0
  %24 = vmatpush.bf16.msra.mxu0 0
  %25 = vmatpush.bf16.msra.mxu0 0
  %26 = vmatpush.bf16.msra.mxu0 0
  %27 = vmatpush.bf16.msra.mxu0 0
  %28 = vmatpush.bf16.msra.mxu0 0
  %29 = vmatpush.bf16.msra.mxu0 %v20
  %30 = vmatmul.bf16.gmra.mxu0 %v16
  %v31 = vpop.f32.mrf.mxu0
  %v32 = vadd.f32 0.0, %v31
  %v33 = vpop.f32.mrf.mxu0
  %34 = vdwg.mxu0
  %v35 = vpack.c.bf16 %v32, %v32
  %36 = vst [vmem:[%s2] sm:$0xf] %v35
  // Predicated region
  $region10: #{forward.11} parent=0 // pred_check
    _
  $region11: #{forward.11} parent=0 // pred_check_branch
    %38 = sbr.rel (0) target = $region13
  $region12: #{forward.11} parent=0 // pred_region
    _
  $region13: #{forward.11} parent=0 // pred_fallthru
    _
  // Predicated region
  $region14: #{forward.11} parent=0 // pred_check
    _
  $region15: #{forward.11} parent=0 // pred_check_branch
    %40 = sbr.rel (0) target = $region17
  $region16: #{forward.11} parent=0 // pred_region
    _
  $region17: #{forward.11} parent=0 // pred_fallthru
    _

// kernel: forward.12
$region0: #{forward.12}
  #allocation0 [shape = 'u32[]', space=smem, size = 0x4, offset = 0x4, fixed_abs, tag = 'smem constant byte address 0x4 - core index']
  #allocation1 [shape = 'u32[72,128]{1,0:T(1,128)}', space=vmem, size = 0x9000, scoped, tag = 'internal scratch']
  %s0 = inlined_call_operand.vmem [shape: bf16[2,2,16], index: 0, kind: input, shape index: {}]
  %s1 = inlined_call_operand.vmem [shape: bf16[1,16,128], index: 1, kind: input, shape index: {}]
  %s2 = inlined_call_operand.vmem [shape: f32[1,128], index: 2, kind: input, shape index: {}]
  %s3 = inlined_call_operand.vmem [shape: bf16[2,2,128], index: 3, kind: output, shape index: {0}]
  %s4 = inlined_call_operand.vmem [shape: f32[2,1,128], index: 4, kind: output, shape index: {1}]
  %s5 = inlined_call_operand.vmem [shape: f32[2,1,128], index: 5, kind: output, shape index: {2}]
  %6 = xla_tuple %s3, %s4, %s5
  %s7 = sld [smem:[#allocation0]]
  $region61: #{forward.12} parent=0
    _
  %s9 = ssub.s32 1, %s7
  %s10 = scalar_select 0, %s9, %s7
  loop: start=0, step=1, limit=4
  $region2: #{forward.12} parent=0 // loop_pre_header
    _
  $region3: #{forward.12} parent=0 // loop_header
    %s12 = sphi 0, %s16
    %p13 = scmp.ge.s32.totalorder %s12, 4
    %s22 = sphi 0, %s24
    %s25 = sphi 0, %s22
    %s26 = sphi 0, %s25
    %s42 = sphi 0, %s26
    %s46 = sphi 0, %s46
    %s48 = sphi 0, %s46
    %s49 = sphi 0, %s48
    %s63 = sphi 0, %s49
    %s67 = sphi 0, %s67
    %s69 = sphi 0, %s67
    %s70 = sphi 0, %s69
    %s84 = sphi 0, %s70
    %s90 = sphi 0, %s92
    %s93 = sphi 0, %s90
    %s94 = sphi 0, %s93
    %s110 = sphi 0, %s94
    %s116 = sphi 0, %s118
    %s119 = sphi 0, %s116
    %s120 = sphi 0, %s119
    %s136 = sphi 0, %s120
    %s142 = sphi 0, %s144
    %s145 = sphi 0, %s142
    %s146 = sphi 0, %s145
    %s162 = sphi 0, %s146
  $region4: #{forward.12} parent=0 // loop_header_branch
    %15 = sbr.rel (%p13) target = $region8
  $region5: #{forward.12} parent=0 // loop_body
    %s17 = ssub.s32 %s12, 1
    %s18 = ssub.s32 %s12, 2
    %s19 = sadd.s32 %s12, 1
    %s20 = ssub.s32 %s12, %s19
    %p21 = scmp.eq.s32.totalorder %s20, 0
    %s23 = sadd.s32 %s22, 1
    %s24 = scalar_select %p21, %s22, %s23
    %p27 = pneg %p21
    %p28 = scmp.eq.s32.totalorder %s12, 1
    %p29 = por %p27, %p28
    %p30 = scmp.ne.s32.totalorder %s22, %s25
    %p31 = scmp.eq.s32.totalorder %s12, 0
    %p32 = por %p30, %p31
    %p33 = scmp.ne.s32.totalorder %s22, %s25
    %p34 = scmp.eq.s32.totalorder %s17, 1
    %p35 = por %p33, %p34
    %p36 = scmp.ne.s32.totalorder %s25, %s26
    %p37 = scmp.eq.s32.totalorder %s17, 0
    %p38 = por %p36, %p37
    %p39 = scmp.ne.s32.totalorder %s25, %s26
    %p40 = scmp.eq.s32.totalorder %s18, 1
    %p41 = por %p39, %p40
    %p43 = scmp.ne.s32.totalorder %s26, %s42
    %p44 = scmp.eq.s32.totalorder %s18, 0
    %p45 = por %p43, %p44
    %s47 = sadd.s32 %s46, 1
    %p50 = scmp.eq.s32.totalorder %s12, 1
    %p51 = scmp.ne.s32.totalorder %s46, %s48
    %p52 = scmp.eq.s32.totalorder %s12, 0
    %p53 = por %p51, %p52
    %p54 = scmp.ne.s32.totalorder %s46, %s48
    %p55 = scmp.eq.s32.totalorder %s17, 1
    %p56 = por %p54, %p55
    %p57 = scmp.ne.s32.totalorder %s48, %s49
    %p58 = scmp.eq.s32.totalorder %s17, 0
    %p59 = por %p57, %p58
    %p60 = scmp.ne.s32.totalorder %s48, %s49
    %p61 = scmp.eq.s32.totalorder %s18, 1
    %p62 = por %p60, %p61
    %p64 = scmp.ne.s32.totalorder %s49, %s63
    %p65 = scmp.eq.s32.totalorder %s18, 0
    %p66 = por %p64, %p65
    %s68 = sadd.s32 %s67, 1
    %p71 = scmp.eq.s32.totalorder %s12, 1
    %p72 = scmp.ne.s32.totalorder %s67, %s69
    %p73 = scmp.eq.s32.totalorder %s12, 0
    %p74 = por %p72, %p73
    %p75 = scmp.ne.s32.totalorder %s67, %s69
    %p76 = scmp.eq.s32.totalorder %s17, 1
    %p77 = por %p75, %p76
    %p78 = scmp.ne.s32.totalorder %s69, %s70
    %p79 = scmp.eq.s32.totalorder %s17, 0
    %p80 = por %p78, %p79
    %p81 = scmp.ne.s32.totalorder %s69, %s70
    %p82 = scmp.eq.s32.totalorder %s18, 1
    %p83 = por %p81, %p82
    %p85 = scmp.ne.s32.totalorder %s70, %s84
    %p86 = scmp.eq.s32.totalorder %s18, 0
    %p87 = por %p85, %p86
    %s88 = ssub.s32 %s12, %s19
    %p89 = scmp.eq.s32.totalorder %s88, 0
    %s91 = sadd.s32 %s90, 1
    %s92 = scalar_select %p89, %s90, %s91
    %p95 = pneg %p89
    %p96 = scmp.eq.s32.totalorder %s12, 1
    %p97 = por %p95, %p96
    %p98 = scmp.ne.s32.totalorder %s90, %s93
    %p99 = scmp.eq.s32.totalorder %s12, 0
    %p100 = por %p98, %p99
    %p101 = scmp.ne.s32.totalorder %s90, %s93
    %p102 = scmp.eq.s32.totalorder %s17, 1
    %p103 = por %p101, %p102
    %p104 = scmp.ne.s32.totalorder %s93, %s94
    %p105 = scmp.eq.s32.totalorder %s17, 0
    %p106 = por %p104, %p105
    %p107 = scmp.ne.s32.totalorder %s93, %s94
    %p108 = scmp.eq.s32.totalorder %s18, 1
    %p109 = por %p107, %p108
    %p111 = scmp.ne.s32.totalorder %s94, %s110
    %p112 = scmp.eq.s32.totalorder %s18, 0
    %p113 = por %p111, %p112
    %s114 = ssub.s32 %s12, %s19
    %p115 = scmp.eq.s32.totalorder %s114, 0
    %s117 = sadd.s32 %s116, 1
    %s118 = scalar_select %p115, %s116, %s117
    %p121 = pneg %p115
    %p122 = scmp.eq.s32.totalorder %s12, 1
    %p123 = por %p121, %p122
    %p124 = scmp.ne.s32.totalorder %s116, %s119
    %p125 = scmp.eq.s32.totalorder %s12, 0
    %p126 = por %p124, %p125
    %p127 = scmp.ne.s32.totalorder %s116, %s119
    %p128 = scmp.eq.s32.totalorder %s17, 1
    %p129 = por %p127, %p128
    %p130 = scmp.ne.s32.totalorder %s119, %s120
    %p131 = scmp.eq.s32.totalorder %s17, 0
    %p132 = por %p130, %p131
    %p133 = scmp.ne.s32.totalorder %s119, %s120
    %p134 = scmp.eq.s32.totalorder %s18, 1
    %p135 = por %p133, %p134
    %p137 = scmp.ne.s32.totalorder %s120, %s136
    %p138 = scmp.eq.s32.totalorder %s18, 0
    %p139 = por %p137, %p138
    %s140 = ssub.s32 %s12, %s19
    %p141 = scmp.eq.s32.totalorder %s140, 0
    %s143 = sadd.s32 %s142, 1
    %s144 = scalar_select %p141, %s142, %s143
    %p147 = pneg %p141
    %p148 = scmp.eq.s32.totalorder %s12, 1
    %p149 = por %p147, %p148
    %p150 = scmp.ne.s32.totalorder %s142, %s145
    %p151 = scmp.eq.s32.totalorder %s12, 0
    %p152 = por %p150, %p151
    %p153 = scmp.ne.s32.totalorder %s142, %s145
    %p154 = scmp.eq.s32.totalorder %s17, 1
    %p155 = por %p153, %p154
    %p156 = scmp.ne.s32.totalorder %s145, %s146
    %p157 = scmp.eq.s32.totalorder %s17, 0
    %p158 = por %p156, %p157
    %p159 = scmp.ne.s32.totalorder %s145, %s146
    %p160 = scmp.eq.s32.totalorder %s18, 1
    %p161 = por %p159, %p160
    %p163 = scmp.ne.s32.totalorder %s146, %s162
    %p164 = scmp.eq.s32.totalorder %s18, 0
    %p165 = por %p163, %p164
    %p166 = scmp.le.s32.totalorder 1, %s12
    %p167 = scmp.lt.s32.totalorder %s12, 3
    %p168 = pnand %p166, %p167
    %p169 = pneg %p168
    // Predicated region
    $region9: #{forward.12} parent=5 // pred_check
      _
    $region10: #{forward.12} parent=5 // pred_check_branch
      %171 = sbr.rel (%p168) target = $region12
    $region11: #{forward.12} parent=5 // pred_region
      %s172 = ssub.s32 %s12, 1
      // Predicated region
      $region13: #{forward.12} parent=11 // pred_check
        %p173 = pneg %p59
      $region14: #{forward.12} parent=11 // pred_check_branch
        %175 = sbr.rel (%p173) target = $region16
      $region15: #{forward.12} parent=11 // pred_region
        _
      $region16: #{forward.12} parent=11 // pred_fallthru
        _
      // Predicated region
      $region17: #{forward.12} parent=11 // pred_check
        %p176 = pneg %p80
      $region18: #{forward.12} parent=11 // pred_check_branch
        %178 = sbr.rel (%p176) target = $region20
      $region19: #{forward.12} parent=11 // pred_region
        _
      $region20: #{forward.12} parent=11 // pred_fallthru
        _
    $region12: #{forward.12} parent=5 // pred_fallthru
      _
    %p179 = scmp.lt.s32.totalorder %s12, 2
    // Predicated region
    $region21: #{forward.12} parent=5 // pred_check
      %p180 = pneg %p179
    $region22: #{forward.12} parent=5 // pred_check_branch
      %182 = sbr.rel (%p180) target = $region24
    $region23: #{forward.12} parent=5 // pred_region
      // Predicated region
      $region25: #{forward.12} parent=23 // pred_check
        %p183 = pneg %p32
      $region26: #{forward.12} parent=23 // pred_check_branch
        %185 = sbr.rel (%p183) target = $region28
      $region27: #{forward.12} parent=23 // pred_region
        %p186 = scmp.lt.s32.totalorder %s12, 1
        %s187 = scalar_select %p186, %s12, 1
        %s188 = scalar_lea.vmem %s0, %s187
      $region28: #{forward.12} parent=23 // pred_fallthru
        _
    $region24: #{forward.12} parent=5 // pred_fallthru
      _
    %p189 = scmp.le.s32.totalorder 1, %s12
    %p190 = scmp.lt.s32.totalorder %s12, 3
    %p191 = pnand %p189, %p190
    %p192 = pneg %p191
    // Predicated region
    $region29: #{forward.12} parent=5 // pred_check
      _
    $region30: #{forward.12} parent=5 // pred_check_branch
      %194 = sbr.rel (%p191) target = $region32
    $region31: #{forward.12} parent=5 // pred_region
      %s195 = ssub.s32 %s12, 1
      %p196 = scmp.lt.s32.totalorder %s17, 1
      %s197 = scalar_select %p196, %s17, 1
      %s198 = scalar_lea.vmem %s0, %s197
      %p199 = pneg %p38
      %p200 = pneg %p35
      %p201 = pneg %p59
      %p202 = pneg %p56
      %p203 = pneg %p80
      %p204 = pneg %p77
      %p205 = pneg %p106
      %p206 = pneg %p103
      %p207 = scmp.lt.s32.totalorder %s17, 1
      %s208 = scalar_select %p207, %s17, 1
      %s209 = scalar_lea.vmem %s3, %s208
      %p210 = pneg %p132
      %p211 = pneg %p129
      %p212 = scmp.lt.s32.totalorder %s17, 1
      %s213 = scalar_select %p212, %s17, 1
      %s214 = scalar_lea.vmem %s4, %s213
      %p215 = pneg %p158
      %p216 = pneg %p155
      %p217 = scmp.lt.s32.totalorder %s17, 1
      %s218 = scalar_select %p217, %s17, 1
      %s219 = scalar_lea.vmem %s5, %s218
      %p220 = scmp.lt.s32.totalorder %s17, 1
      %s221 = scalar_select %p220, %s17, 1
      %s222 = scalar_lea.vmem %s0, %s221
      %p223 = scmp.lt.s32.totalorder %s17, 1
      %s224 = scalar_select %p223, %s17, 1
      %s225 = scalar_lea.vmem %s3, %s224
      %p226 = scmp.lt.s32.totalorder %s17, 1
      %s227 = scalar_select %p226, %s17, 1
      %s228 = scalar_lea.vmem %s4, %s227
      %p229 = scmp.lt.s32.totalorder %s17, 1
      %s230 = scalar_select %p229, %s17, 1
      %s231 = scalar_lea.vmem %s5, %s230
      %v233 = vld [vmem:[%s222] sm:$0x1]
      %v234 = vld [vmem:[%s1] sm:$0xf]
      %v235 = vld [vmem:[%s1 + $0x4] sm:$0xf]
      %v236 = vld [vmem:[%s2] sm:$0x1]
      %v238 = vperm.slane %v236, 0
      %v242 = vunpack.c.l.b16 %v234
      %v243 = vunpack.c.l.b16 %v235
      %v244 = vpack.c.b16 %v243, %v242
      %vm246 = vcmask 130048
      %v248 = vsel %vm246, %v233, 0
      %250 = vmatpush.bf16.msra.mxu0 0
      %251 = vmatpush.bf16.msra.mxu0 0
      %252 = vmatpush.bf16.msra.mxu0 0
      %253 = vmatpush.bf16.msra.mxu0 0
      %254 = vmatpush.bf16.msra.mxu0 0
      %255 = vmatpush.bf16.msra.mxu0 0
      %256 = vmatpush.bf16.msra.mxu0 0
      %257 = vmatpush.bf16.msra.mxu0 %v244
      %258 = vmatmul.bf16.gmra.mxu0 %v248
      %v259 = vpop.f32.mrf.mxu0
      %v260 = vadd.f32 %v238, %v259
      %v261 = vpop.f32.mrf.mxu0
      %262 = vdwg.mxu0
      %vm263 = vcmask 1041408
      %v264 = vsel %vm263, %v260, 0.0
      %v265 = vrot.slane %v264, 4
      %v266 = vadd.f32 %v264, %v265
      %v267 = vrot.slane %v266, 2
      %v268 = vadd.f32 %v266, %v267
      %v269 = vrot.slane %v268, 1
      %v270 = vadd.f32 %v268, %v269
      %271 = vst [vmem:[%s228] sm:$0x1] %v270
      %v272 = vmul.f32 %v260, %v260
      %v273 = vsel %vm263, %v272, 0.0
      %v274 = vrot.slane %v273, 4
      %v275 = vadd.f32 %v273, %v274
      %v276 = vrot.slane %v275, 2
      %v277 = vadd.f32 %v275, %v276
      %v278 = vrot.slane %v277, 1
      %v279 = vadd.f32 %v277, %v278
      %280 = vst [vmem:[%s231] sm:$0x1] %v279
      %v281 = vpack.c.bf16 %v260, %v260
      %282 = vst [vmem:[%s225] sm:$0x1] %v281
      %p283 = scmp.lt.s32.totalorder %s17, 1
      %s284 = scalar_select %p283, %s17, 1
      %s285 = scalar_lea.vmem %s3, %s284
      %p286 = scmp.lt.s32.totalorder %s17, 1
      %s287 = scalar_select %p286, %s17, 1
      %s288 = scalar_lea.vmem %s4, %s287
      %p289 = scmp.lt.s32.totalorder %s17, 1
      %s290 = scalar_select %p289, %s17, 1
      %s291 = scalar_lea.vmem %s5, %s290
      // Predicated region
      $region33: #{forward.12} parent=31 // pred_check
        %p292 = pneg %p103
      $region34: #{forward.12} parent=31 // pred_check_branch
        %294 = sbr.rel (%p292) target = $region36
      $region35: #{forward.12} parent=31 // pred_region
        _
      $region36: #{forward.12} parent=31 // pred_fallthru
        _
      // Predicated region
      $region37: #{forward.12} parent=31 // pred_check
        %p295 = pneg %p129
      $region38: #{forward.12} parent=31 // pred_check_branch
        %297 = sbr.rel (%p295) target = $region40
      $region39: #{forward.12} parent=31 // pred_region
        _
      $region40: #{forward.12} parent=31 // pred_fallthru
        _
      // Predicated region
      $region41: #{forward.12} parent=31 // pred_check
        %p298 = pneg %p155
      $region42: #{forward.12} parent=31 // pred_check_branch
        %300 = sbr.rel (%p298) target = $region44
      $region43: #{forward.12} parent=31 // pred_region
        _
      $region44: #{forward.12} parent=31 // pred_fallthru
        _
    $region32: #{forward.12} parent=5 // pred_fallthru
      _
    %p301 = scmp.le.s32.totalorder 2, %s12
    // Predicated region
    $region45: #{forward.12} parent=5 // pred_check
      %p302 = pneg %p301
    $region46: #{forward.12} parent=5 // pred_check_branch
      %304 = sbr.rel (%p302) target = $region48
    $region47: #{forward.12} parent=5 // pred_region
      %s305 = ssub.s32 %s12, 2
      // Predicated region
      $region49: #{forward.12} parent=47 // pred_check
        %p306 = pneg %p109
      $region50: #{forward.12} parent=47 // pred_check_branch
        %308 = sbr.rel (%p306) target = $region52
      $region51: #{forward.12} parent=47 // pred_region
        %p309 = scmp.lt.s32.totalorder %s18, 1
        %s310 = scalar_select %p309, %s18, 1
        %s311 = scalar_lea.vmem %s3, %s310
      $region52: #{forward.12} parent=47 // pred_fallthru
        _
      // Predicated region
      $region53: #{forward.12} parent=47 // pred_check
        %p312 = pneg %p135
      $region54: #{forward.12} parent=47 // pred_check_branch
        %314 = sbr.rel (%p312) target = $region56
      $region55: #{forward.12} parent=47 // pred_region
        %p315 = scmp.lt.s32.totalorder %s18, 1
        %s316 = scalar_select %p315, %s18, 1
        %s317 = scalar_lea.vmem %s4, %s316
      $region56: #{forward.12} parent=47 // pred_fallthru
        _
      // Predicated region
      $region57: #{forward.12} parent=47 // pred_check
        %p318 = pneg %p161
      $region58: #{forward.12} parent=47 // pred_check_branch
        %320 = sbr.rel (%p318) target = $region60
      $region59: #{forward.12} parent=47 // pred_region
        %p321 = scmp.lt.s32.totalorder %s18, 1
        %s322 = scalar_select %p321, %s18, 1
        %s323 = scalar_lea.vmem %s5, %s322
      $region60: #{forward.12} parent=47 // pred_fallthru
        _
    $region48: #{forward.12} parent=5 // pred_fallthru
      _
  $region6: #{forward.12} parent=0 // loop_footer
    %s16 = sadd.s32 1, %s12
  $region7: #{forward.12} parent=0 // loop_footer_branch
    %11 = sbr.rel target = $region3
  $region8: #{forward.12} parent=0 // loop_exit
    _

// kernel: tile.38
$region0: #{tile.38}
  #allocation0 [shape = 's32[1]{0}', space=sflag, size = 0x4, scoped, tag = 'scoped memory for tile.38']
  %s0 = inlined_call_operand.vmem [shape: f32[4], index: 0, kind: input, shape index: {}]
  %s1 = inlined_call_operand.vmem [shape: f32[32,4], index: 1, kind: output, shape index: {}]
  // Predicated region
  $region2: #{tile.38} parent=0 // pred_check
    _
  $region3: #{tile.38} parent=0 // pred_check_branch
    %3 = sbr.rel (0) target = $region5
  $region4: #{tile.38} parent=0 // pred_region
    _
  $region5: #{tile.38} parent=0 // pred_fallthru
    _
  %v4 = vld [vmem:[%s0] ss:$0 sm:$0xff]
  %5 = vst [vmem:[%s1] sm:$0xff] %v4
  %s6 = scalar_lea.vmem %s1, 8
  %7 = vst [vmem:[%s6] sm:$0xff] %v4
  %s8 = scalar_lea.vmem %s1, 16
  %9 = vst [vmem:[%s8] sm:$0xff] %v4
  %s10 = scalar_lea.vmem %s1, 24
  %11 = vst [vmem:[%s10] sm:$0xff] %v4

// kernel: tile.39
$region0: #{tile.39}
  %s0 = inlined_call_operand.vmem [shape: f32[32,4], index: 0, kind: input, shape index: {}]
  %s1 = inlined_call_operand.vmem [shape: f32[1,128], index: 1, kind: output, shape index: {}]
  $region1: #{tile.39} parent=0
    #allocation0 [shape = 'u8[4096]{0}', space=vmem, size = 0x1000, scoped, tag = 'scoped mem for output reshape']
    %v2 = vld [vmem:[%s0] sm:$0x1]
    %vm3 = vcmask 31744
    %4 = vst.msk [vmem:[#allocation0] sm:$0x1] %vm3, %v2
    %s5 = scalar_lea.vmem %s0, 31
    %v6 = vld [vmem:[%s5] sm:$0x1]
    %7 = vrot.lane.b32.xlu0 %v6, 124
    %v8 = vpop.permute.xlu0 %7
    %vm9 = vcmask 1048544
    %10 = vst.msk [vmem:[#allocation0] sm:$0x1] %vm9, %v8
    %s11 = scalar_lea.vmem %s0, 30
    %v12 = vld [vmem:[%s11] sm:$0x1]
    %13 = vrot.lane.b32.xlu0 %v12, 120
    %v14 = vpop.permute.xlu0 %13
    %vm15 = vcmask 1015744
    %16 = vst.msk [vmem:[#allocation0] sm:$0x1] %vm15, %v14
    %s17 = scalar_lea.vmem %s0, 29
    %v18 = vld [vmem:[%s17] sm:$0x1]
    %19 = vrot.lane.b32.xlu0 %v18, 116
    %v20 = vpop.permute.xlu0 %19
    %vm21 = vcmask 982944
    %22 = vst.msk [vmem:[#allocation0] sm:$0x1] %vm21, %v20
    %s23 = scalar_lea.vmem %s0, 28
    %v24 = vld [vmem:[%s23] sm:$0x1]
    %25 = vrot.lane.b32.xlu0 %v24, 112
    %v26 = vpop.permute.xlu0 %25
    %vm27 = vcmask 950144
    %28 = vst.msk [vmem:[#allocation0] sm:$0x1] %vm27, %v26
    %s29 = scalar_lea.vmem %s0, 27
    %v30 = vld [vmem:[%s29] sm:$0x1]
    %31 = vrot.lane.b32.xlu0 %v30, 108
    %v32 = vpop.permute.xlu0 %31
    %vm33 = vcmask 917344
    %34 = vst.msk [vmem:[#allocation0] sm:$0x1] %vm33, %v32
    %s35 = scalar_lea.vmem %s0, 26
    %v36 = vld [vmem:[%s35] sm:$0x1]
    %37 = vrot.lane.b32.xlu0 %v36, 104
    %v38 = vpop.permute.xlu0 %37
    %vm39 = vcmask 884544
    %40 = vst.msk [vmem:[#allocation0] sm:$0x1] %vm39, %v38
    %s41 = scalar_lea.vmem %s0, 25
    %v42 = vld [vmem:[%s41] sm:$0x1]
    %43 = vrot.lane.b32.xlu0 %v42, 100
    %v44 = vpop.permute.xlu0 %43
    %vm45 = vcmask 851744
    %46 = vst.msk [vmem:[#allocation0] sm:$0x1] %vm45, %v44
    %s47 = scalar_lea.vmem %s0, 24
    %v48 = vld [vmem:[%s47] sm:$0x1]
    %49 = vrot.lane.b32.xlu0 %v48, 96
    %v50 = vpop.permute.xlu0 %49
    %vm51 = vcmask 818944
    %52 = vst.msk [vmem:[#allocation0] sm:$0x1] %vm51, %v50
    %s53 = scalar_lea.vmem %s0, 23
    %v54 = vld [vmem:[%s53] sm:$0x1]
    %55 = vrot.lane.b32.xlu0 %v54, 92
    %v56 = vpop.permute.xlu0 %55
    %vm57 = vcmask 786144
    %58 = vst.msk [vmem:[#allocation0] sm:$0x1] %vm57, %v56
    %s59 = scalar_lea.vmem %s0, 22
    %v60 = vld [vmem:[%s59] sm:$0x1]
    %61 = vrot.lane.b32.xlu0 %v60, 88
    %v62 = vpop.permute.xlu0 %61
    %vm63 = vcmask 753344
    %64 = vst.msk [vmem:[#allocation0] sm:$0x1] %vm63, %v62
    %s65 = scalar_lea.vmem %s0, 21
    %v66 = vld [vmem:[%s65] sm:$0x1]
    %67 = vrot.lane.b32.xlu0 %v66, 84
    %v68 = vpop.permute.xlu0 %67
    %vm69 = vcmask 720544
    %70 = vst.msk [vmem:[#allocation0] sm:$0x1] %vm69, %v68
    %s71 = scalar_lea.vmem %s0, 20
    %v72 = vld [vmem:[%s71] sm:$0x1]
    %73 = vrot.lane.b32.xlu0 %v72, 80
    %v74 = vpop.permute.xlu0 %73
    %vm75 = vcmask 687744
    %76 = vst.msk [vmem:[#allocation0] sm:$0x1] %vm75, %v74
    %s77 = scalar_lea.vmem %s0, 19
    %v78 = vld [vmem:[%s77] sm:$0x1]
    %79 = vrot.lane.b32.xlu0 %v78, 76
    %v80 = vpop.permute.xlu0 %79
    %vm81 = vcmask 654944
    %82 = vst.msk [vmem:[#allocation0] sm:$0x1] %vm81, %v80
    %s83 = scalar_lea.vmem %s0, 18
    %v84 = vld [vmem:[%s83] sm:$0x1]
    %85 = vrot.lane.b32.xlu0 %v84, 72
    %v86 = vpop.permute.xlu0 %85
    %vm87 = vcmask 622144
    %88 = vst.msk [vmem:[#allocation0] sm:$0x1] %vm87, %v86
    %s89 = scalar_lea.vmem %s0, 17
    %v90 = vld [vmem:[%s89] sm:$0x1]
    %91 = vrot.lane.b32.xlu0 %v90, 68
    %v92 = vpop.permute.xlu0 %91
    %vm93 = vcmask 589344
    %94 = vst.msk [vmem:[#allocation0] sm:$0x1] %vm93, %v92
    %s95 = scalar_lea.vmem %s0, 16
    %v96 = vld [vmem:[%s95] sm:$0x1]
    %97 = vrot.lane.b32.xlu0 %v96, 64
    %v98 = vpop.permute.xlu0 %97
    %vm99 = vcmask 556544
    %100 = vst.msk [vmem:[#allocation0] sm:$0x1] %vm99, %v98
    %s101 = scalar_lea.vmem %s0, 15
    %v102 = vld [vmem:[%s101] sm:$0x1]
    %103 = vrot.lane.b32.xlu0 %v102, 60
    %v104 = vpop.permute.xlu0 %103
    %vm105 = vcmask 523744
    %106 = vst.msk [vmem:[#allocation0] sm:$0x1] %vm105, %v104
    %s107 = scalar_lea.vmem %s0, 14
    %v108 = vld [vmem:[%s107] sm:$0x1]
    %109 = vrot.lane.b32.xlu0 %v108, 56
    %v110 = vpop.permute.xlu0 %109
    %vm111 = vcmask 490944
    %112 = vst.msk [vmem:[#allocation0] sm:$0x1] %vm111, %v110
    %s113 = scalar_lea.vmem %s0, 13
    %v114 = vld [vmem:[%s113] sm:$0x1]
    %115 = vrot.lane.b32.xlu0 %v114, 52
    %v116 = vpop.permute.xlu0 %115
    %vm117 = vcmask 458144
    %118 = vst.msk [vmem:[#allocation0] sm:$0x1] %vm117, %v116
    %s119 = scalar_lea.vmem %s0, 12
    %v120 = vld [vmem:[%s119] sm:$0x1]
    %121 = vrot.lane.b32.xlu0 %v120, 48
    %v122 = vpop.permute.xlu0 %121
    %vm123 = vcmask 425344
    %124 = vst.msk [vmem:[#allocation0] sm:$0x1] %vm123, %v122
    %s125 = scalar_lea.vmem %s0, 11
    %v126 = vld [vmem:[%s125] sm:$0x1]
    %127 = vrot.lane.b32.xlu0 %v126, 44
    %v128 = vpop.permute.xlu0 %127
    %vm129 = vcmask 392544
    %130 = vst.msk [vmem:[#allocation0] sm:$0x1] %vm129, %v128
    %s131 = scalar_lea.vmem %s0, 10
    %v132 = vld [vmem:[%s131] sm:$0x1]
    %133 = vrot.lane.b32.xlu0 %v132, 40
    %v134 = vpop.permute.xlu0 %133
    %vm135 = vcmask 359744
    %136 = vst.msk [vmem:[#allocation0] sm:$0x1] %vm135, %v134
    %s137 = scalar_lea.vmem %s0, 9
    %v138 = vld [vmem:[%s137] sm:$0x1]
    %139 = vrot.lane.b32.xlu0 %v138, 36
    %v140 = vpop.permute.xlu0 %139
    %vm141 = vcmask 326944
    %142 = vst.msk [vmem:[#allocation0] sm:$0x1] %vm141, %v140
    %s143 = scalar_lea.vmem %s0, 8
    %v144 = vld [vmem:[%s143] sm:$0x1]
    %145 = vrot.lane.b32.xlu0 %v144, 32
    %v146 = vpop.permute.xlu0 %145
    %vm147 = vcmask 294144
    %148 = vst.msk [vmem:[#allocation0] sm:$0x1] %vm147, %v146
    %s149 = scalar_lea.vmem %s0, 7
    %v150 = vld [vmem:[%s149] sm:$0x1]
    %151 = vrot.lane.b32.xlu0 %v150, 28
    %v152 = vpop.permute.xlu0 %151
    %vm153 = vcmask 261344
    %154 = vst.msk [vmem:[#allocation0] sm:$0x1] %vm153, %v152
    %s155 = scalar_lea.vmem %s0, 6
    %v156 = vld [vmem:[%s155] sm:$0x1]
    %157 = vrot.lane.b32.xlu0 %v156, 24
    %v158 = vpop.permute.xlu0 %157
    %vm159 = vcmask 228544
    %160 = vst.msk [vmem:[#allocation0] sm:$0x1] %vm159, %v158
    %s161 = scalar_lea.vmem %s0, 5
    %v162 = vld [vmem:[%s161] sm:$0x1]
    %163 = vrot.lane.b32.xlu0 %v162, 20
    %v164 = vpop.permute.xlu0 %163
    %vm165 = vcmask 195744
    %166 = vst.msk [vmem:[#allocation0] sm:$0x1] %vm165, %v164
    %s167 = scalar_lea.vmem %s0, 4
    %v168 = vld [vmem:[%s167] sm:$0x1]
    %169 = vrot.lane.b32.xlu0 %v168, 16
    %v170 = vpop.permute.xlu0 %169
    %vm171 = vcmask 162944
    %172 = vst.msk [vmem:[#allocation0] sm:$0x1] %vm171, %v170
    %s173 = scalar_lea.vmem %s0, 3
    %v174 = vld [vmem:[%s173] sm:$0x1]
    %175 = vrot.lane.b32.xlu0 %v174, 12
    %v176 = vpop.permute.xlu0 %175
    %vm177 = vcmask 130144
    %178 = vst.msk [vmem:[#allocation0] sm:$0x1] %vm177, %v176
    %s179 = scalar_lea.vmem %s0, 2
    %v180 = vld [vmem:[%s179] sm:$0x1]
    %181 = vrot.lane.b32.xlu0 %v180, 8
    %v182 = vpop.permute.xlu0 %181
    %vm183 = vcmask 97344
    %184 = vst.msk [vmem:[#allocation0] sm:$0x1] %vm183, %v182
    %s185 = scalar_lea.vmem %s0, 1
    %v186 = vld [vmem:[%s185] sm:$0x1]
    %187 = vrot.lane.b32.xlu0 %v186, 4
    %v188 = vpop.permute.xlu0 %187
    %vm189 = vcmask 64544
    %190 = vst.msk [vmem:[#allocation0] sm:$0x1] %vm189, %v188
    %s192 = ssub.s32 2, 1
    %v193 = vld [vmem:[#allocation0] sm:%s192]
    %s195 = ssub.s32 2, 1
    %196 = vst [vmem:[%s1] sm:%s195] %v193

// kernel: forward.14
$region0: #{forward.14}
  #allocation0 [shape = 'u32[]', space=smem, size = 0x4, offset = 0x4, fixed_abs, tag = 'smem constant byte address 0x4 - core index']
  #allocation1 [shape = 'u32[72,128]{1,0:T(1,128)}', space=vmem, size = 0x9000, scoped, tag = 'internal scratch']
  %s0 = inlined_call_operand.vmem [shape: bf16[32,4], index: 0, kind: input, shape index: {}]
  %s1 = inlined_call_operand.vmem [shape: bf16[4,128], index: 1, kind: input, shape index: {}]
  %s2 = inlined_call_operand.vmem [shape: bf16[32,128], index: 2, kind: output, shape index: {}]
  %s3 = sld [smem:[#allocation0]]
  $region41: #{forward.14} parent=0
    _
  %s5 = ssub.s32 1, %s3
  %s6 = scalar_select 0, %s5, %s3
  loop: start=0, step=1, limit=4
  $region2: #{forward.14} parent=0 // loop_pre_header
    _
  $region3: #{forward.14} parent=0 // loop_header
    %s8 = sphi 0, %s12
    %p9 = scmp.ge.s32.totalorder %s8, 4
    %s15 = sphi 0, %s27
    %s16 = sphi 0, %s23
    %s17 = sphi 0, %s15
    %s18 = sphi 0, %s16
    %s19 = sphi 0, %s17
    %s20 = sphi 0, %s18
    %s30 = sphi 0, %s32
    %s33 = sphi 0, %s30
    %s34 = sphi 0, %s33
    %s50 = sphi 0, %s34
    %s56 = sphi 0, %s58
    %s59 = sphi 0, %s56
    %s60 = sphi 0, %s59
    %s76 = sphi 0, %s60
    %s84 = sphi 0, %s86
    %s87 = sphi 0, %s84
    %s88 = sphi 0, %s87
    %s104 = sphi 0, %s88
  $region4: #{forward.14} parent=0 // loop_header_branch
    %11 = sbr.rel (%p9) target = $region8
  $region5: #{forward.14} parent=0 // loop_body
    %s13 = ssub.s32 %s8, 1
    %s14 = ssub.s32 %s8, 2
    %s21 = sadd.s32 1, %s16
    %p22 = scmp.ge.s32.totalorder %s21, 1
    %s23 = scalar_select %p22, 0, %s21
    %s24 = sadd.s32 1, %s15
    %s25 = scalar_select %p22, %s24, %s15
    %p26 = scmp.ge.s32.totalorder %s25, 2
    %s27 = scalar_select %p26, 0, %s25
    %s28 = ssub.s32 %s15, %s27
    %p29 = scmp.eq.s32.totalorder %s28, 0
    %s31 = sadd.s32 %s30, 1
    %s32 = scalar_select %p29, %s30, %s31
    %p35 = pneg %p29
    %p36 = scmp.eq.s32.totalorder %s8, 1
    %p37 = por %p35, %p36
    %p38 = scmp.ne.s32.totalorder %s30, %s33
    %p39 = scmp.eq.s32.totalorder %s8, 0
    %p40 = por %p38, %p39
    %p41 = scmp.ne.s32.totalorder %s30, %s33
    %p42 = scmp.eq.s32.totalorder %s13, 1
    %p43 = por %p41, %p42
    %p44 = scmp.ne.s32.totalorder %s33, %s34
    %p45 = scmp.eq.s32.totalorder %s13, 0
    %p46 = por %p44, %p45
    %p47 = scmp.ne.s32.totalorder %s33, %s34
    %p48 = scmp.eq.s32.totalorder %s14, 1
    %p49 = por %p47, %p48
    %p51 = scmp.ne.s32.totalorder %s34, %s50
    %p52 = scmp.eq.s32.totalorder %s14, 0
    %p53 = por %p51, %p52
    %s54 = ssub.s32 %s16, %s23
    %p55 = scmp.eq.s32.totalorder %s54, 0
    %s57 = sadd.s32 %s56, 1
    %s58 = scalar_select %p55, %s56, %s57
    %p61 = pneg %p55
    %p62 = scmp.eq.s32.totalorder %s8, 1
    %p63 = por %p61, %p62
    %p64 = scmp.ne.s32.totalorder %s56, %s59
    %p65 = scmp.eq.s32.totalorder %s8, 0
    %p66 = por %p64, %p65
    %p67 = scmp.ne.s32.totalorder %s56, %s59
    %p68 = scmp.eq.s32.totalorder %s13, 1
    %p69 = por %p67, %p68
    %p70 = scmp.ne.s32.totalorder %s59, %s60
    %p71 = scmp.eq.s32.totalorder %s13, 0
    %p72 = por %p70, %p71
    %p73 = scmp.ne.s32.totalorder %s59, %s60
    %p74 = scmp.eq.s32.totalorder %s14, 1
    %p75 = por %p73, %p74
    %p77 = scmp.ne.s32.totalorder %s60, %s76
    %p78 = scmp.eq.s32.totalorder %s14, 0
    %p79 = por %p77, %p78
    %s80 = ssub.s32 %s15, %s27
    %s81 = ssub.s32 %s16, %s23
    %s82 = sor.u32 %s80, %s81
    %p83 = scmp.eq.s32.totalorder %s82, 0
    %s85 = sadd.s32 %s84, 1
    %s86 = scalar_select %p83, %s84, %s85
    %p89 = pneg %p83
    %p90 = scmp.eq.s32.totalorder %s8, 1
    %p91 = por %p89, %p90
    %p92 = scmp.ne.s32.totalorder %s84, %s87
    %p93 = scmp.eq.s32.totalorder %s8, 0
    %p94 = por %p92, %p93
    %p95 = scmp.ne.s32.totalorder %s84, %s87
    %p96 = scmp.eq.s32.totalorder %s13, 1
    %p97 = por %p95, %p96
    %p98 = scmp.ne.s32.totalorder %s87, %s88
    %p99 = scmp.eq.s32.totalorder %s13, 0
    %p100 = por %p98, %p99
    %p101 = scmp.ne.s32.totalorder %s87, %s88
    %p102 = scmp.eq.s32.totalorder %s14, 1
    %p103 = por %p101, %p102
    %p105 = scmp.ne.s32.totalorder %s88, %s104
    %p106 = scmp.eq.s32.totalorder %s14, 0
    %p107 = por %p105, %p106
    %p108 = scmp.le.s32.totalorder 1, %s8
    %p109 = scmp.lt.s32.totalorder %s8, 3
    %p110 = pnand %p108, %p109
    %p111 = pneg %p110
    // Predicated region
    $region9: #{forward.14} parent=5 // pred_check
      _
    $region10: #{forward.14} parent=5 // pred_check_branch
      %113 = sbr.rel (%p110) target = $region12
    $region11: #{forward.14} parent=5 // pred_region
      %s114 = ssub.s32 %s8, 1
      // Predicated region
      $region13: #{forward.14} parent=11 // pred_check
        %p115 = pneg %p72
      $region14: #{forward.14} parent=11 // pred_check_branch
        %117 = sbr.rel (%p115) target = $region16
      $region15: #{forward.14} parent=11 // pred_region
        %p118 = scmp.lt.s32.totalorder %s18, 0
        %s119 = scalar_select %p118, %s18, 0
        %s120 = smul.addr %s119, 2
        %s121 = scalar_lea.vmem %s1, %s120
      $region16: #{forward.14} parent=11 // pred_fallthru
        _
    $region12: #{forward.14} parent=5 // pred_fallthru
      _
    %p122 = scmp.lt.s32.totalorder %s8, 2
    // Predicated region
    $region17: #{forward.14} parent=5 // pred_check
      %p123 = pneg %p122
    $region18: #{forward.14} parent=5 // pred_check_branch
      %125 = sbr.rel (%p123) target = $region20
    $region19: #{forward.14} parent=5 // pred_region
      // Predicated region
      $region21: #{forward.14} parent=19 // pred_check
        %p126 = pneg %p40
      $region22: #{forward.14} parent=19 // pred_check_branch
        %128 = sbr.rel (%p126) target = $region24
      $region23: #{forward.14} parent=19 // pred_region
        %s129 = smul.u32 2, %s15
        %p130 = scmp.lt.s32.totalorder %s129, 3
        %s131 = scalar_select %p130, %s129, 3
        %s132 = smul.addr %s131, 4
        %s133 = scalar_lea.vmem %s0, %s132
        %s134 = smul.u32 2, %s15
      $region24: #{forward.14} parent=19 // pred_fallthru
        _
    $region20: #{forward.14} parent=5 // pred_fallthru
      _
    %p135 = scmp.le.s32.totalorder 1, %s8
    %p136 = scmp.lt.s32.totalorder %s8, 3
    %p137 = pnand %p135, %p136
    %p138 = pneg %p137
    // Predicated region
    $region25: #{forward.14} parent=5 // pred_check
      _
    $region26: #{forward.14} parent=5 // pred_check_branch
      %140 = sbr.rel (%p137) target = $region28
    $region27: #{forward.14} parent=5 // pred_region
      %s141 = ssub.s32 %s8, 1
      %s142 = smul.u32 2, %s17
      %p143 = scmp.lt.s32.totalorder %s142, 3
      %s144 = scalar_select %p143, %s142, 3
      %s145 = smul.addr %s144, 4
      %s146 = scalar_lea.vmem %s0, %s145
      %p147 = pneg %p46
      %p148 = pneg %p43
      %p149 = scmp.lt.s32.totalorder %s18, 0
      %s150 = scalar_select %p149, %s18, 0
      %s151 = smul.addr %s150, 2
      %s152 = scalar_lea.vmem %s1, %s151
      %p153 = pneg %p72
      %p154 = pneg %p69
      %p155 = pneg %p100
      %p156 = pneg %p97
      %s157 = smul.u32 2, %s17
      %p158 = scmp.lt.s32.totalorder %s157, 3
      %s159 = scalar_select %p158, %s157, 3
      %p160 = scmp.lt.s32.totalorder %s18, 0
      %s161 = scalar_select %p160, %s18, 0
      %s162 = sadd.s32 %s161, %s159
      %s163 = smul.addr %s162, 4
      %s164 = scalar_lea.vmem %s2, %s163
      %s165 = smul.u32 2, %s17
      %p166 = scmp.lt.s32.totalorder %s165, 3
      %s167 = scalar_select %p166, %s165, 3
      %s168 = smul.addr %s167, 4
      %s169 = scalar_lea.vmem %s0, %s168
      %s170 = smul.u32 2, %s17
      %p171 = scmp.lt.s32.totalorder %s18, 0
      %s172 = scalar_select %p171, %s18, 0
      %s173 = smul.addr %s172, 2
      %s174 = scalar_lea.vmem %s1, %s173
      %s175 = smul.u32 2, %s17
      %p176 = scmp.lt.s32.totalorder %s175, 3
      %s177 = scalar_select %p176, %s175, 3
      %p178 = scmp.lt.s32.totalorder %s18, 0
      %s179 = scalar_select %p178, %s18, 0
      %s180 = sadd.s32 %s179, %s177
      %s181 = smul.addr %s180, 4
      %s182 = scalar_lea.vmem %s2, %s181
      %s183 = smul.u32 2, %s17
      %v185 = vld [vmem:[%s169] sm:$0xf]
      %v186 = vld [vmem:[%s169 + $0x4] sm:$0xf]
      %v187 = vld [vmem:[%s174] sm:$0x3]
      %v190 = vunpack.c.l.b16 %v185
      %v191 = vunpack.c.l.b16 %v186
      %v192 = vpack.c.b16 %v191, %v190
      %vm193 = vcmask 31744
      %v195 = vsel %vm193, %v192, 0
      %vm197 = vcmask 1041408
      %v199 = vsel %vm197, %v187, 0
      %201 = vmatpush.bf16.msra.mxu0 0
      %202 = vmatpush.bf16.msra.mxu0 0
      %203 = vmatpush.bf16.msra.mxu0 0
      %204 = vmatpush.bf16.msra.mxu0 0
      %205 = vmatpush.bf16.msra.mxu0 0
      %206 = vmatpush.bf16.msra.mxu0 0
      %207 = vmatpush.bf16.msra.mxu0 0
      %208 = vmatpush.bf16.msra.mxu0 %v199
      %209 = vmatmul.bf16.gmra.mxu0 %v195
      %v210 = vpop.f32.mrf.mxu0
      %v211 = vadd.f32 0.0, %v210
      %v212 = vpop.f32.mrf.mxu0
      %v213 = vadd.f32 0.0, %v212
      %214 = vdwg.mxu0
      %v215 = vpack.c.bf16 %v211, %v211
      %v216 = vpack.c.bf16 %v213, %v213
      %217 = vst [vmem:[%s182] sm:$0xf] %v215
      %218 = vst [vmem:[%s182 + $0x4] sm:$0xf] %v216
      %s219 = smul.u32 2, %s17
      %p220 = scmp.lt.s32.totalorder %s219, 3
      %s221 = scalar_select %p220, %s219, 3
      %p222 = scmp.lt.s32.totalorder %s18, 0
      %s223 = scalar_select %p222, %s18, 0
      %s224 = sadd.s32 %s223, %s221
      %s225 = smul.addr %s224, 4
      %s226 = scalar_lea.vmem %s2, %s225
      // Predicated region
      $region29: #{forward.14} parent=27 // pred_check
        %p227 = pneg %p97
      $region30: #{forward.14} parent=27 // pred_check_branch
        %229 = sbr.rel (%p227) target = $region32
      $region31: #{forward.14} parent=27 // pred_region
        %s230 = smul.u32 2, %s17
      $region32: #{forward.14} parent=27 // pred_fallthru
        _
    $region28: #{forward.14} parent=5 // pred_fallthru
      _
    %p231 = scmp.le.s32.totalorder 2, %s8
    // Predicated region
    $region33: #{forward.14} parent=5 // pred_check
      %p232 = pneg %p231
    $region34: #{forward.14} parent=5 // pred_check_branch
      %234 = sbr.rel (%p232) target = $region36
    $region35: #{forward.14} parent=5 // pred_region
      %s235 = ssub.s32 %s8, 2
      // Predicated region
      $region37: #{forward.14} parent=35 // pred_check
        %p236 = pneg %p103
      $region38: #{forward.14} parent=35 // pred_check_branch
        %238 = sbr.rel (%p236) target = $region40
      $region39: #{forward.14} parent=35 // pred_region
        %s239 = smul.u32 2, %s19
        %p240 = scmp.lt.s32.totalorder %s239, 3
        %s241 = scalar_select %p240, %s239, 3
        %p242 = scmp.lt.s32.totalorder %s20, 0
        %s243 = scalar_select %p242, %s20, 0
        %s244 = sadd.s32 %s243, %s241
        %s245 = smul.addr %s244, 4
        %s246 = scalar_lea.vmem %s2, %s245
      $region40: #{forward.14} parent=35 // pred_fallthru
        _
    $region36: #{forward.14} parent=5 // pred_fallthru
      _
  $region6: #{forward.14} parent=0 // loop_footer
    %s12 = sadd.s32 1, %s8
  $region7: #{forward.14} parent=0 // loop_footer_branch
    %7 = sbr.rel target = $region3
  $region8: #{forward.14} parent=0 // loop_exit
    _

// kernel: forward.13
$region0: #{forward.13}
  #allocation0 [shape = 'u32[]', space=smem, size = 0x4, offset = 0x4, fixed_abs, tag = 'smem constant byte address 0x4 - core index']
  #allocation1 [shape = 'u32[72,128]{1,0:T(1,128)}', space=vmem, size = 0x9000, scoped, tag = 'internal scratch']
  %s0 = inlined_call_operand.vmem [shape: bf16[1,128], index: 0, kind: input, shape index: {}]
  %s1 = inlined_call_operand.vmem [shape: bf16[1,128], index: 1, kind: input, shape index: {}]
  %s2 = inlined_call_operand.vmem [shape: f32[1,128], index: 2, kind: input, shape index: {}]
  %s3 = inlined_call_operand.vmem [shape: f32[1,128], index: 3, kind: input, shape index: {}]
  %s4 = inlined_call_operand.vmem [shape: bf16[1,128], index: 4, kind: output, shape index: {}]
  %s5 = sld [smem:[#allocation0]]
  $region26: #{forward.13} parent=0
    _
  %s7 = ssub.s32 1, %s5
  %s8 = scalar_select 0, %s7, %s5
  // Predicated region
  $region2: #{forward.13} parent=0 // pred_check
    _
  $region3: #{forward.13} parent=0 // pred_check_branch
    %10 = sbr.rel (0) target = $region5
  $region4: #{forward.13} parent=0 // pred_region
    _
  $region5: #{forward.13} parent=0 // pred_fallthru
    _
  // Predicated region
  $region6: #{forward.13} parent=0 // pred_check
    _
  $region7: #{forward.13} parent=0 // pred_check_branch
    %12 = sbr.rel (0) target = $region9
  $region8: #{forward.13} parent=0 // pred_region
    _
  $region9: #{forward.13} parent=0 // pred_fallthru
    _
  // Predicated region
  $region10: #{forward.13} parent=0 // pred_check
    _
  $region11: #{forward.13} parent=0 // pred_check_branch
    %14 = sbr.rel (0) target = $region13
  $region12: #{forward.13} parent=0 // pred_region
    _
  $region13: #{forward.13} parent=0 // pred_fallthru
    _
  // Predicated region
  $region14: #{forward.13} parent=0 // pred_check
    _
  $region15: #{forward.13} parent=0 // pred_check_branch
    %16 = sbr.rel (0) target = $region17
  $region16: #{forward.13} parent=0 // pred_region
    _
  $region17: #{forward.13} parent=0 // pred_fallthru
    _
  %v17 = vld [vmem:[%s0] sm:$0x1]
  %v18 = vunpack.c.l.bf16 %v17
  %v19 = vld [vmem:[%s2] sm:$0x1]
  %v20 = vmul.f32 %v18, %v19
  %v21 = vld [vmem:[%s3] sm:$0x1]
  %v22 = vadd.f32 %v20, %v21
  %v23 = vmax.f32 %v22, 0.0
  %v24 = vld [vmem:[%s1] sm:$0x1]
  %v25 = vunpack.c.l.bf16 %v24
  %v26 = vadd.f32 %v23, %v25
  %v27 = vpack.c.bf16 %v26, %v26
  %vm28 = vcmask 1040384
  %vm29 = vsmask.f32 256
  %vm30 = vmand %vm28, %vm29
  %v31 = vld [vmem:[%s4] sm:$0x1]
  %v32 = vsel %vm30, %v27, %v31
  %33 = vst [vmem:[%s4] sm:$0x1] %v32
  // Predicated region
  $region18: #{forward.13} parent=0 // pred_check
    _
  $region19: #{forward.13} parent=0 // pred_check_branch
    %35 = sbr.rel (0) target = $region21
  $region20: #{forward.13} parent=0 // pred_region
    _
  $region21: #{forward.13} parent=0 // pred_fallthru
    _
  // Predicated region
  $region22: #{forward.13} parent=0 // pred_check
    _
  $region23: #{forward.13} parent=0 // pred_check_branch
    %37 = sbr.rel (0) target = $region25
  $region24: #{forward.13} parent=0 // pred_region
    _
  $region25: #{forward.13} parent=0 // pred_fallthru
    _

// kernel: tile.48
$region0: #{tile.48}
  #allocation0 [shape = 's32[1]{0}', space=sflag, size = 0x4, scoped, tag = 'scoped memory for tile.48']
  %s0 = inlined_call_operand.vmem [shape: f32[4], index: 0, kind: input, shape index: {}]
  %s1 = inlined_call_operand.vmem [shape: f32[128,4], index: 1, kind: output, shape index: {}]
  // Predicated region
  $region2: #{tile.48} parent=0 // pred_check
    _
  $region3: #{tile.48} parent=0 // pred_check_branch
    %3 = sbr.rel (0) target = $region5
  $region4: #{tile.48} parent=0 // pred_region
    _
  $region5: #{tile.48} parent=0 // pred_fallthru
    _
  %v4 = vld [vmem:[%s0] ss:$0 sm:$0xff]
  %5 = vst [vmem:[%s1] sm:$0xff] %v4
  %s6 = scalar_lea.vmem %s1, 8
  %7 = vst [vmem:[%s6] sm:$0xff] %v4
  %s8 = scalar_lea.vmem %s1, 16
  %9 = vst [vmem:[%s8] sm:$0xff] %v4
  %s10 = scalar_lea.vmem %s1, 24
  %11 = vst [vmem:[%s10] sm:$0xff] %v4
  %s12 = scalar_lea.vmem %s1, 32
  %13 = vst [vmem:[%s12] sm:$0xff] %v4
  %s14 = scalar_lea.vmem %s1, 40
  %15 = vst [vmem:[%s14] sm:$0xff] %v4
  %s16 = scalar_lea.vmem %s1, 48
  %17 = vst [vmem:[%s16] sm:$0xff] %v4
  %s18 = scalar_lea.vmem %s1, 56
  %19 = vst [vmem:[%s18] sm:$0xff] %v4
  %s20 = scalar_lea.vmem %s1, 64
  %21 = vst [vmem:[%s20] sm:$0xff] %v4
  %s22 = scalar_lea.vmem %s1, 72
  %23 = vst [vmem:[%s22] sm:$0xff] %v4
  %s24 = scalar_lea.vmem %s1, 80
  %25 = vst [vmem:[%s24] sm:$0xff] %v4
  %s26 = scalar_lea.vmem %s1, 88
  %27 = vst [vmem:[%s26] sm:$0xff] %v4
  %s28 = scalar_lea.vmem %s1, 96
  %29 = vst [vmem:[%s28] sm:$0xff] %v4
  %s30 = scalar_lea.vmem %s1, 104
  %31 = vst [vmem:[%s30] sm:$0xff] %v4
  %s32 = scalar_lea.vmem %s1, 112
  %33 = vst [vmem:[%s32] sm:$0xff] %v4
  %s34 = scalar_lea.vmem %s1, 120
  %35 = vst [vmem:[%s34] sm:$0xff] %v4

// kernel: tile.49
$region0: #{tile.49}
  %s0 = inlined_call_operand.vmem [shape: f32[128,4], index: 0, kind: input, shape index: {}]
  %s1 = inlined_call_operand.vmem [shape: f32[1,512], index: 1, kind: output, shape index: {}]
  $region1: #{tile.49} parent=0
    #allocation0 [shape = 'u8[16384]{0}', space=vmem, size = 0x4000, scoped, tag = 'scoped mem for output reshape']
    %v2 = vld [vmem:[%s0] sm:$0x1]
    %s3 = scalar_lea.vmem %s0, 31
    %v4 = vld [vmem:[%s3] sm:$0x2]
    %vm5 = vcmask 1041409
    %v6 = vsel %vm5, %v4, %v2
    %s7 = scalar_lea.vmem %s0, 62
    %v8 = vld [vmem:[%s7] sm:$0x4]
    %vm9 = vcmask 1042434
    %v10 = vsel %vm9, %v8, %v6
    %s11 = scalar_lea.vmem %s0, 93
    %v12 = vld [vmem:[%s11] sm:$0x8]
    %vm13 = vcmask 1043459
    %v14 = vsel %vm13, %v12, %v10
    %vm15 = vcmask 31744
    %16 = vst.msk [vmem:[#allocation0] ss:$8 sm:$0xf] %vm15, %v14
    %s17 = scalar_lea.vmem %s0, 31
    %v18 = vld [vmem:[%s17] sm:$0x1]
    %s19 = scalar_lea.vmem %s0, 62
    %v20 = vld [vmem:[%s19] sm:$0x2]
    %vm21 = vcmask 1041409
    %v22 = vsel %vm21, %v20, %v18
    %s23 = scalar_lea.vmem %s0, 93
    %v24 = vld [vmem:[%s23] sm:$0x4]
    %vm25 = vcmask 1042434
    %v26 = vsel %vm25, %v24, %v22
    %s27 = scalar_lea.vmem %s0, 124
    %v28 = vld [vmem:[%s27] sm:$0x8]
    %vm29 = vcmask 1043459
    %v30 = vsel %vm29, %v28, %v26
    %31 = vrot.lane.b32.xlu0 %v30, 124
    %v32 = vpop.permute.xlu0 %31
    %vm33 = vcmask 1048544
    %34 = vst.msk [vmem:[#allocation0] ss:$8 sm:$0xf] %vm33, %v32
    %s35 = scalar_lea.vmem %s0, 30
    %v36 = vld [vmem:[%s35] sm:$0x1]
    %s37 = scalar_lea.vmem %s0, 61
    %v38 = vld [vmem:[%s37] sm:$0x2]
    %vm39 = vcmask 1041409
    %v40 = vsel %vm39, %v38, %v36
    %s41 = scalar_lea.vmem %s0, 92
    %v42 = vld [vmem:[%s41] sm:$0x4]
    %vm43 = vcmask 1042434
    %v44 = vsel %vm43, %v42, %v40
    %s45 = scalar_lea.vmem %s0, 123
    %v46 = vld [vmem:[%s45] sm:$0x8]
    %vm47 = vcmask 1043459
    %v48 = vsel %vm47, %v46, %v44
    %49 = vrot.lane.b32.xlu0 %v48, 120
    %v50 = vpop.permute.xlu0 %49
    %vm51 = vcmask 1015744
    %52 = vst.msk [vmem:[#allocation0] ss:$8 sm:$0xf] %vm51, %v50
    %s53 = scalar_lea.vmem %s0, 29
    %v54 = vld [vmem:[%s53] sm:$0x1]
    %s55 = scalar_lea.vmem %s0, 60
    %v56 = vld [vmem:[%s55] sm:$0x2]
    %vm57 = vcmask 1041409
    %v58 = vsel %vm57, %v56, %v54
    %s59 = scalar_lea.vmem %s0, 91
    %v60 = vld [vmem:[%s59] sm:$0x4]
    %vm61 = vcmask 1042434
    %v62 = vsel %vm61, %v60, %v58
    %s63 = scalar_lea.vmem %s0, 122
    %v64 = vld [vmem:[%s63] sm:$0x8]
    %vm65 = vcmask 1043459
    %v66 = vsel %vm65, %v64, %v62
    %67 = vrot.lane.b32.xlu0 %v66, 116
    %v68 = vpop.permute.xlu0 %67
    %vm69 = vcmask 982944
    %70 = vst.msk [vmem:[#allocation0] ss:$8 sm:$0xf] %vm69, %v68
    %s71 = scalar_lea.vmem %s0, 28
    %v72 = vld [vmem:[%s71] sm:$0x1]
    %s73 = scalar_lea.vmem %s0, 59
    %v74 = vld [vmem:[%s73] sm:$0x2]
    %vm75 = vcmask 1041409
    %v76 = vsel %vm75, %v74, %v72
    %s77 = scalar_lea.vmem %s0, 90
    %v78 = vld [vmem:[%s77] sm:$0x4]
    %vm79 = vcmask 1042434
    %v80 = vsel %vm79, %v78, %v76
    %s81 = scalar_lea.vmem %s0, 121
    %v82 = vld [vmem:[%s81] sm:$0x8]
    %vm83 = vcmask 1043459
    %v84 = vsel %vm83, %v82, %v80
    %85 = vrot.lane.b32.xlu0 %v84, 112
    %v86 = vpop.permute.xlu0 %85
    %vm87 = vcmask 950144
    %88 = vst.msk [vmem:[#allocation0] ss:$8 sm:$0xf] %vm87, %v86
    %s89 = scalar_lea.vmem %s0, 27
    %v90 = vld [vmem:[%s89] sm:$0x1]
    %s91 = scalar_lea.vmem %s0, 58
    %v92 = vld [vmem:[%s91] sm:$0x2]
    %vm93 = vcmask 1041409
    %v94 = vsel %vm93, %v92, %v90
    %s95 = scalar_lea.vmem %s0, 89
    %v96 = vld [vmem:[%s95] sm:$0x4]
    %vm97 = vcmask 1042434
    %v98 = vsel %vm97, %v96, %v94
    %s99 = scalar_lea.vmem %s0, 120
    %v100 = vld [vmem:[%s99] sm:$0x8]
    %vm101 = vcmask 1043459
    %v102 = vsel %vm101, %v100, %v98
    %103 = vrot.lane.b32.xlu0 %v102, 108
    %v104 = vpop.permute.xlu0 %103
    %vm105 = vcmask 917344
    %106 = vst.msk [vmem:[#allocation0] ss:$8 sm:$0xf] %vm105, %v104
    %s107 = scalar_lea.vmem %s0, 26
    %v108 = vld [vmem:[%s107] sm:$0x1]
    %s109 = scalar_lea.vmem %s0, 57
    %v110 = vld [vmem:[%s109] sm:$0x2]
    %vm111 = vcmask 1041409
    %v112 = vsel %vm111, %v110, %v108
    %s113 = scalar_lea.vmem %s0, 88
    %v114 = vld [vmem:[%s113] sm:$0x4]
    %vm115 = vcmask 1042434
    %v116 = vsel %vm115, %v114, %v112
    %s117 = scalar_lea.vmem %s0, 119
    %v118 = vld [vmem:[%s117] sm:$0x8]
    %vm119 = vcmask 1043459
    %v120 = vsel %vm119, %v118, %v116
    %121 = vrot.lane.b32.xlu0 %v120, 104
    %v122 = vpop.permute.xlu0 %121
    %vm123 = vcmask 884544
    %124 = vst.msk [vmem:[#allocation0] ss:$8 sm:$0xf] %vm123, %v122
    %s125 = scalar_lea.vmem %s0, 25
    %v126 = vld [vmem:[%s125] sm:$0x1]
    %s127 = scalar_lea.vmem %s0, 56
    %v128 = vld [vmem:[%s127] sm:$0x2]
    %vm129 = vcmask 1041409
    %v130 = vsel %vm129, %v128, %v126
    %s131 = scalar_lea.vmem %s0, 87
    %v132 = vld [vmem:[%s131] sm:$0x4]
    %vm133 = vcmask 1042434
    %v134 = vsel %vm133, %v132, %v130
    %s135 = scalar_lea.vmem %s0, 118
    %v136 = vld [vmem:[%s135] sm:$0x8]
    %vm137 = vcmask 1043459
    %v138 = vsel %vm137, %v136, %v134
    %139 = vrot.lane.b32.xlu0 %v138, 100
    %v140 = vpop.permute.xlu0 %139
    %vm141 = vcmask 851744
    %142 = vst.msk [vmem:[#allocation0] ss:$8 sm:$0xf] %vm141, %v140
    %s143 = scalar_lea.vmem %s0, 24
    %v144 = vld [vmem:[%s143] sm:$0x1]
    %s145 = scalar_lea.vmem %s0, 55
    %v146 = vld [vmem:[%s145] sm:$0x2]
    %vm147 = vcmask 1041409
    %v148 = vsel %vm147, %v146, %v144
    %s149 = scalar_lea.vmem %s0, 86
    %v150 = vld [vmem:[%s149] sm:$0x4]
    %vm151 = vcmask 1042434
    %v152 = vsel %vm151, %v150, %v148
    %s153 = scalar_lea.vmem %s0, 117
    %v154 = vld [vmem:[%s153] sm:$0x8]
    %vm155 = vcmask 1043459
    %v156 = vsel %vm155, %v154, %v152
    %157 = vrot.lane.b32.xlu0 %v156, 96
    %v158 = vpop.permute.xlu0 %157
    %vm159 = vcmask 818944
    %160 = vst.msk [vmem:[#allocation0] ss:$8 sm:$0xf] %vm159, %v158
    %s161 = scalar_lea.vmem %s0, 23
    %v162 = vld [vmem:[%s161] sm:$0x1]
    %s163 = scalar_lea.vmem %s0, 54
    %v164 = vld [vmem:[%s163] sm:$0x2]
    %vm165 = vcmask 1041409
    %v166 = vsel %vm165, %v164, %v162
    %s167 = scalar_lea.vmem %s0, 85
    %v168 = vld [vmem:[%s167] sm:$0x4]
    %vm169 = vcmask 1042434
    %v170 = vsel %vm169, %v168, %v166
    %s171 = scalar_lea.vmem %s0, 116
    %v172 = vld [vmem:[%s171] sm:$0x8]
    %vm173 = vcmask 1043459
    %v174 = vsel %vm173, %v172, %v170
    %175 = vrot.lane.b32.xlu0 %v174, 92
    %v176 = vpop.permute.xlu0 %175
    %vm177 = vcmask 786144
    %178 = vst.msk [vmem:[#allocation0] ss:$8 sm:$0xf] %vm177, %v176
    %s179 = scalar_lea.vmem %s0, 22
    %v180 = vld [vmem:[%s179] sm:$0x1]
    %s181 = scalar_lea.vmem %s0, 53
    %v182 = vld [vmem:[%s181] sm:$0x2]
    %vm183 = vcmask 1041409
    %v184 = vsel %vm183, %v182, %v180
    %s185 = scalar_lea.vmem %s0, 84
    %v186 = vld [vmem:[%s185] sm:$0x4]
    %vm187 = vcmask 1042434
    %v188 = vsel %vm187, %v186, %v184
    %s189 = scalar_lea.vmem %s0, 115
    %v190 = vld [vmem:[%s189] sm:$0x8]
    %vm191 = vcmask 1043459
    %v192 = vsel %vm191, %v190, %v188
    %193 = vrot.lane.b32.xlu0 %v192, 88
    %v194 = vpop.permute.xlu0 %193
    %vm195 = vcmask 753344
    %196 = vst.msk [vmem:[#allocation0] ss:$8 sm:$0xf] %vm195, %v194
    %s197 = scalar_lea.vmem %s0, 21
    %v198 = vld [vmem:[%s197] sm:$0x1]
    %s199 = scalar_lea.vmem %s0, 52
    %v200 = vld [vmem:[%s199] sm:$0x2]
    %vm201 = vcmask 1041409
    %v202 = vsel %vm201, %v200, %v198
    %s203 = scalar_lea.vmem %s0, 83
    %v204 = vld [vmem:[%s203] sm:$0x4]
    %vm205 = vcmask 1042434
    %v206 = vsel %vm205, %v204, %v202
    %s207 = scalar_lea.vmem %s0, 114
    %v208 = vld [vmem:[%s207] sm:$0x8]
    %vm209 = vcmask 1043459
    %v210 = vsel %vm209, %v208, %v206
    %211 = vrot.lane.b32.xlu0 %v210, 84
    %v212 = vpop.permute.xlu0 %211
    %vm213 = vcmask 720544
    %214 = vst.msk [vmem:[#allocation0] ss:$8 sm:$0xf] %vm213, %v212
    %s215 = scalar_lea.vmem %s0, 20
    %v216 = vld [vmem:[%s215] sm:$0x1]
    %s217 = scalar_lea.vmem %s0, 51
    %v218 = vld [vmem:[%s217] sm:$0x2]
    %vm219 = vcmask 1041409
    %v220 = vsel %vm219, %v218, %v216
    %s221 = scalar_lea.vmem %s0, 82
    %v222 = vld [vmem:[%s221] sm:$0x4]
    %vm223 = vcmask 1042434
    %v224 = vsel %vm223, %v222, %v220
    %s225 = scalar_lea.vmem %s0, 113
    %v226 = vld [vmem:[%s225] sm:$0x8]
    %vm227 = vcmask 1043459
    %v228 = vsel %vm227, %v226, %v224
    %229 = vrot.lane.b32.xlu0 %v228, 80
    %v230 = vpop.permute.xlu0 %229
    %vm231 = vcmask 687744
    %232 = vst.msk [vmem:[#allocation0] ss:$8 sm:$0xf] %vm231, %v230
    %s233 = scalar_lea.vmem %s0, 19
    %v234 = vld [vmem:[%s233] sm:$0x1]
    %s235 = scalar_lea.vmem %s0, 50
    %v236 = vld [vmem:[%s235] sm:$0x2]
    %vm237 = vcmask 1041409
    %v238 = vsel %vm237, %v236, %v234
    %s239 = scalar_lea.vmem %s0, 81
    %v240 = vld [vmem:[%s239] sm:$0x4]
    %vm241 = vcmask 1042434
    %v242 = vsel %vm241, %v240, %v238
    %s243 = scalar_lea.vmem %s0, 112
    %v244 = vld [vmem:[%s243] sm:$0x8]
    %vm245 = vcmask 1043459
    %v246 = vsel %vm245, %v244, %v242
    %247 = vrot.lane.b32.xlu0 %v246, 76
    %v248 = vpop.permute.xlu0 %247
    %vm249 = vcmask 654944
    %250 = vst.msk [vmem:[#allocation0] ss:$8 sm:$0xf] %vm249, %v248
    %s251 = scalar_lea.vmem %s0, 18
    %v252 = vld [vmem:[%s251] sm:$0x1]
    %s253 = scalar_lea.vmem %s0, 49
    %v254 = vld [vmem:[%s253] sm:$0x2]
    %vm255 = vcmask 1041409
    %v256 = vsel %vm255, %v254, %v252
    %s257 = scalar_lea.vmem %s0, 80
    %v258 = vld [vmem:[%s257] sm:$0x4]
    %vm259 = vcmask 1042434
    %v260 = vsel %vm259, %v258, %v256
    %s261 = scalar_lea.vmem %s0, 111
    %v262 = vld [vmem:[%s261] sm:$0x8]
    %vm263 = vcmask 1043459
    %v264 = vsel %vm263, %v262, %v260
    %265 = vrot.lane.b32.xlu0 %v264, 72
    %v266 = vpop.permute.xlu0 %265
    %vm267 = vcmask 622144
    %268 = vst.msk [vmem:[#allocation0] ss:$8 sm:$0xf] %vm267, %v266
    %s269 = scalar_lea.vmem %s0, 17
    %v270 = vld [vmem:[%s269] sm:$0x1]
    %s271 = scalar_lea.vmem %s0, 48
    %v272 = vld [vmem:[%s271] sm:$0x2]
    %vm273 = vcmask 1041409
    %v274 = vsel %vm273, %v272, %v270
    %s275 = scalar_lea.vmem %s0, 79
    %v276 = vld [vmem:[%s275] sm:$0x4]
    %vm277 = vcmask 1042434
    %v278 = vsel %vm277, %v276, %v274
    %s279 = scalar_lea.vmem %s0, 110
    %v280 = vld [vmem:[%s279] sm:$0x8]
    %vm281 = vcmask 1043459
    %v282 = vsel %vm281, %v280, %v278
    %283 = vrot.lane.b32.xlu0 %v282, 68
    %v284 = vpop.permute.xlu0 %283
    %vm285 = vcmask 589344
    %286 = vst.msk [vmem:[#allocation0] ss:$8 sm:$0xf] %vm285, %v284
    %s287 = scalar_lea.vmem %s0, 16
    %v288 = vld [vmem:[%s287] sm:$0x1]
    %s289 = scalar_lea.vmem %s0, 47
    %v290 = vld [vmem:[%s289] sm:$0x2]
    %vm291 = vcmask 1041409
    %v292 = vsel %vm291, %v290, %v288
    %s293 = scalar_lea.vmem %s0, 78
    %v294 = vld [vmem:[%s293] sm:$0x4]
    %vm295 = vcmask 1042434
    %v296 = vsel %vm295, %v294, %v292
    %s297 = scalar_lea.vmem %s0, 109
    %v298 = vld [vmem:[%s297] sm:$0x8]
    %vm299 = vcmask 1043459
    %v300 = vsel %vm299, %v298, %v296
    %301 = vrot.lane.b32.xlu0 %v300, 64
    %v302 = vpop.permute.xlu0 %301
    %vm303 = vcmask 556544
    %304 = vst.msk [vmem:[#allocation0] ss:$8 sm:$0xf] %vm303, %v302
    %s305 = scalar_lea.vmem %s0, 15
    %v306 = vld [vmem:[%s305] sm:$0x1]
    %s307 = scalar_lea.vmem %s0, 46
    %v308 = vld [vmem:[%s307] sm:$0x2]
    %vm309 = vcmask 1041409
    %v310 = vsel %vm309, %v308, %v306
    %s311 = scalar_lea.vmem %s0, 77
    %v312 = vld [vmem:[%s311] sm:$0x4]
    %vm313 = vcmask 1042434
    %v314 = vsel %vm313, %v312, %v310
    %s315 = scalar_lea.vmem %s0, 108
    %v316 = vld [vmem:[%s315] sm:$0x8]
    %vm317 = vcmask 1043459
    %v318 = vsel %vm317, %v316, %v314
    %319 = vrot.lane.b32.xlu0 %v318, 60
    %v320 = vpop.permute.xlu0 %319
    %vm321 = vcmask 523744
    %322 = vst.msk [vmem:[#allocation0] ss:$8 sm:$0xf] %vm321, %v320
    %s323 = scalar_lea.vmem %s0, 14
    %v324 = vld [vmem:[%s323] sm:$0x1]
    %s325 = scalar_lea.vmem %s0, 45
    %v326 = vld [vmem:[%s325] sm:$0x2]
    %vm327 = vcmask 1041409
    %v328 = vsel %vm327, %v326, %v324
    %s329 = scalar_lea.vmem %s0, 76
    %v330 = vld [vmem:[%s329] sm:$0x4]
    %vm331 = vcmask 1042434
    %v332 = vsel %vm331, %v330, %v328
    %s333 = scalar_lea.vmem %s0, 107
    %v334 = vld [vmem:[%s333] sm:$0x8]
    %vm335 = vcmask 1043459
    %v336 = vsel %vm335, %v334, %v332
    %337 = vrot.lane.b32.xlu0 %v336, 56
    %v338 = vpop.permute.xlu0 %337
    %vm339 = vcmask 490944
    %340 = vst.msk [vmem:[#allocation0] ss:$8 sm:$0xf] %vm339, %v338
    %s341 = scalar_lea.vmem %s0, 13
    %v342 = vld [vmem:[%s341] sm:$0x1]
    %s343 = scalar_lea.vmem %s0, 44
    %v344 = vld [vmem:[%s343] sm:$0x2]
    %vm345 = vcmask 1041409
    %v346 = vsel %vm345, %v344, %v342
    %s347 = scalar_lea.vmem %s0, 75
    %v348 = vld [vmem:[%s347] sm:$0x4]
    %vm349 = vcmask 1042434
    %v350 = vsel %vm349, %v348, %v346
    %s351 = scalar_lea.vmem %s0, 106
    %v352 = vld [vmem:[%s351] sm:$0x8]
    %vm353 = vcmask 1043459
    %v354 = vsel %vm353, %v352, %v350
    %355 = vrot.lane.b32.xlu0 %v354, 52
    %v356 = vpop.permute.xlu0 %355
    %vm357 = vcmask 458144
    %358 = vst.msk [vmem:[#allocation0] ss:$8 sm:$0xf] %vm357, %v356
    %s359 = scalar_lea.vmem %s0, 12
    %v360 = vld [vmem:[%s359] sm:$0x1]
    %s361 = scalar_lea.vmem %s0, 43
    %v362 = vld [vmem:[%s361] sm:$0x2]
    %vm363 = vcmask 1041409
    %v364 = vsel %vm363, %v362, %v360
    %s365 = scalar_lea.vmem %s0, 74
    %v366 = vld [vmem:[%s365] sm:$0x4]
    %vm367 = vcmask 1042434
    %v368 = vsel %vm367, %v366, %v364
    %s369 = scalar_lea.vmem %s0, 105
    %v370 = vld [vmem:[%s369] sm:$0x8]
    %vm371 = vcmask 1043459
    %v372 = vsel %vm371, %v370, %v368
    %373 = vrot.lane.b32.xlu0 %v372, 48
    %v374 = vpop.permute.xlu0 %373
    %vm375 = vcmask 425344
    %376 = vst.msk [vmem:[#allocation0] ss:$8 sm:$0xf] %vm375, %v374
    %s377 = scalar_lea.vmem %s0, 11
    %v378 = vld [vmem:[%s377] sm:$0x1]
    %s379 = scalar_lea.vmem %s0, 42
    %v380 = vld [vmem:[%s379] sm:$0x2]
    %vm381 = vcmask 1041409
    %v382 = vsel %vm381, %v380, %v378
    %s383 = scalar_lea.vmem %s0, 73
    %v384 = vld [vmem:[%s383] sm:$0x4]
    %vm385 = vcmask 1042434
    %v386 = vsel %vm385, %v384, %v382
    %s387 = scalar_lea.vmem %s0, 104
    %v388 = vld [vmem:[%s387] sm:$0x8]
    %vm389 = vcmask 1043459
    %v390 = vsel %vm389, %v388, %v386
    %391 = vrot.lane.b32.xlu0 %v390, 44
    %v392 = vpop.permute.xlu0 %391
    %vm393 = vcmask 392544
    %394 = vst.msk [vmem:[#allocation0] ss:$8 sm:$0xf] %vm393, %v392
    %s395 = scalar_lea.vmem %s0, 10
    %v396 = vld [vmem:[%s395] sm:$0x1]
    %s397 = scalar_lea.vmem %s0, 41
    %v398 = vld [vmem:[%s397] sm:$0x2]
    %vm399 = vcmask 1041409
    %v400 = vsel %vm399, %v398, %v396
    %s401 = scalar_lea.vmem %s0, 72
    %v402 = vld [vmem:[%s401] sm:$0x4]
    %vm403 = vcmask 1042434
    %v404 = vsel %vm403, %v402, %v400
    %s405 = scalar_lea.vmem %s0, 103
    %v406 = vld [vmem:[%s405] sm:$0x8]
    %vm407 = vcmask 1043459
    %v408 = vsel %vm407, %v406, %v404
    %409 = vrot.lane.b32.xlu0 %v408, 40
    %v410 = vpop.permute.xlu0 %409
    %vm411 = vcmask 359744
    %412 = vst.msk [vmem:[#allocation0] ss:$8 sm:$0xf] %vm411, %v410
    %s413 = scalar_lea.vmem %s0, 9
    %v414 = vld [vmem:[%s413] sm:$0x1]
    %s415 = scalar_lea.vmem %s0, 40
    %v416 = vld [vmem:[%s415] sm:$0x2]
    %vm417 = vcmask 1041409
    %v418 = vsel %vm417, %v416, %v414
    %s419 = scalar_lea.vmem %s0, 71
    %v420 = vld [vmem:[%s419] sm:$0x4]
    %vm421 = vcmask 1042434
    %v422 = vsel %vm421, %v420, %v418
    %s423 = scalar_lea.vmem %s0, 102
    %v424 = vld [vmem:[%s423] sm:$0x8]
    %vm425 = vcmask 1043459
    %v426 = vsel %vm425, %v424, %v422
    %427 = vrot.lane.b32.xlu0 %v426, 36
    %v428 = vpop.permute.xlu0 %427
    %vm429 = vcmask 326944
    %430 = vst.msk [vmem:[#allocation0] ss:$8 sm:$0xf] %vm429, %v428
    %s431 = scalar_lea.vmem %s0, 8
    %v432 = vld [vmem:[%s431] sm:$0x1]
    %s433 = scalar_lea.vmem %s0, 39
    %v434 = vld [vmem:[%s433] sm:$0x2]
    %vm435 = vcmask 1041409
    %v436 = vsel %vm435, %v434, %v432
    %s437 = scalar_lea.vmem %s0, 70
    %v438 = vld [vmem:[%s437] sm:$0x4]
    %vm439 = vcmask 1042434
    %v440 = vsel %vm439, %v438, %v436
    %s441 = scalar_lea.vmem %s0, 101
    %v442 = vld [vmem:[%s441] sm:$0x8]
    %vm443 = vcmask 1043459
    %v444 = vsel %vm443, %v442, %v440
    %445 = vrot.lane.b32.xlu0 %v444, 32
    %v446 = vpop.permute.xlu0 %445
    %vm447 = vcmask 294144
    %448 = vst.msk [vmem:[#allocation0] ss:$8 sm:$0xf] %vm447, %v446
    %s449 = scalar_lea.vmem %s0, 7
    %v450 = vld [vmem:[%s449] sm:$0x1]
    %s451 = scalar_lea.vmem %s0, 38
    %v452 = vld [vmem:[%s451] sm:$0x2]
    %vm453 = vcmask 1041409
    %v454 = vsel %vm453, %v452, %v450
    %s455 = scalar_lea.vmem %s0, 69
    %v456 = vld [vmem:[%s455] sm:$0x4]
    %vm457 = vcmask 1042434
    %v458 = vsel %vm457, %v456, %v454
    %s459 = scalar_lea.vmem %s0, 100
    %v460 = vld [vmem:[%s459] sm:$0x8]
    %vm461 = vcmask 1043459
    %v462 = vsel %vm461, %v460, %v458
    %463 = vrot.lane.b32.xlu0 %v462, 28
    %v464 = vpop.permute.xlu0 %463
    %vm465 = vcmask 261344
    %466 = vst.msk [vmem:[#allocation0] ss:$8 sm:$0xf] %vm465, %v464
    %s467 = scalar_lea.vmem %s0, 6
    %v468 = vld [vmem:[%s467] sm:$0x1]
    %s469 = scalar_lea.vmem %s0, 37
    %v470 = vld [vmem:[%s469] sm:$0x2]
    %vm471 = vcmask 1041409
    %v472 = vsel %vm471, %v470, %v468
    %s473 = scalar_lea.vmem %s0, 68
    %v474 = vld [vmem:[%s473] sm:$0x4]
    %vm475 = vcmask 1042434
    %v476 = vsel %vm475, %v474, %v472
    %s477 = scalar_lea.vmem %s0, 99
    %v478 = vld [vmem:[%s477] sm:$0x8]
    %vm479 = vcmask 1043459
    %v480 = vsel %vm479, %v478, %v476
    %481 = vrot.lane.b32.xlu0 %v480, 24
    %v482 = vpop.permute.xlu0 %481
    %vm483 = vcmask 228544
    %484 = vst.msk [vmem:[#allocation0] ss:$8 sm:$0xf] %vm483, %v482
    %s485 = scalar_lea.vmem %s0, 5
    %v486 = vld [vmem:[%s485] sm:$0x1]
    %s487 = scalar_lea.vmem %s0, 36
    %v488 = vld [vmem:[%s487] sm:$0x2]
    %vm489 = vcmask 1041409
    %v490 = vsel %vm489, %v488, %v486
    %s491 = scalar_lea.vmem %s0, 67
    %v492 = vld [vmem:[%s491] sm:$0x4]
    %vm493 = vcmask 1042434
    %v494 = vsel %vm493, %v492, %v490
    %s495 = scalar_lea.vmem %s0, 98
    %v496 = vld [vmem:[%s495] sm:$0x8]
    %vm497 = vcmask 1043459
    %v498 = vsel %vm497, %v496, %v494
    %499 = vrot.lane.b32.xlu0 %v498, 20
    %v500 = vpop.permute.xlu0 %499
    %vm501 = vcmask 195744
    %502 = vst.msk [vmem:[#allocation0] ss:$8 sm:$0xf] %vm501, %v500
    %s503 = scalar_lea.vmem %s0, 4
    %v504 = vld [vmem:[%s503] sm:$0x1]
    %s505 = scalar_lea.vmem %s0, 35
    %v506 = vld [vmem:[%s505] sm:$0x2]
    %vm507 = vcmask 1041409
    %v508 = vsel %vm507, %v506, %v504
    %s509 = scalar_lea.vmem %s0, 66
    %v510 = vld [vmem:[%s509] sm:$0x4]
    %vm511 = vcmask 1042434
    %v512 = vsel %vm511, %v510, %v508
    %s513 = scalar_lea.vmem %s0, 97
    %v514 = vld [vmem:[%s513] sm:$0x8]
    %vm515 = vcmask 1043459
    %v516 = vsel %vm515, %v514, %v512
    %517 = vrot.lane.b32.xlu0 %v516, 16
    %v518 = vpop.permute.xlu0 %517
    %vm519 = vcmask 162944
    %520 = vst.msk [vmem:[#allocation0] ss:$8 sm:$0xf] %vm519, %v518
    %s521 = scalar_lea.vmem %s0, 3
    %v522 = vld [vmem:[%s521] sm:$0x1]
    %s523 = scalar_lea.vmem %s0, 34
    %v524 = vld [vmem:[%s523] sm:$0x2]
    %vm525 = vcmask 1041409
    %v526 = vsel %vm525, %v524, %v522
    %s527 = scalar_lea.vmem %s0, 65
    %v528 = vld [vmem:[%s527] sm:$0x4]
    %vm529 = vcmask 1042434
    %v530 = vsel %vm529, %v528, %v526
    %s531 = scalar_lea.vmem %s0, 96
    %v532 = vld [vmem:[%s531] sm:$0x8]
    %vm533 = vcmask 1043459
    %v534 = vsel %vm533, %v532, %v530
    %535 = vrot.lane.b32.xlu0 %v534, 12
    %v536 = vpop.permute.xlu0 %535
    %vm537 = vcmask 130144
    %538 = vst.msk [vmem:[#allocation0] ss:$8 sm:$0xf] %vm537, %v536
    %s539 = scalar_lea.vmem %s0, 2
    %v540 = vld [vmem:[%s539] sm:$0x1]
    %s541 = scalar_lea.vmem %s0, 33
    %v542 = vld [vmem:[%s541] sm:$0x2]
    %vm543 = vcmask 1041409
    %v544 = vsel %vm543, %v542, %v540
    %s545 = scalar_lea.vmem %s0, 64
    %v546 = vld [vmem:[%s545] sm:$0x4]
    %vm547 = vcmask 1042434
    %v548 = vsel %vm547, %v546, %v544
    %s549 = scalar_lea.vmem %s0, 95
    %v550 = vld [vmem:[%s549] sm:$0x8]
    %vm551 = vcmask 1043459
    %v552 = vsel %vm551, %v550, %v548
    %553 = vrot.lane.b32.xlu0 %v552, 8
    %v554 = vpop.permute.xlu0 %553
    %vm555 = vcmask 97344
    %556 = vst.msk [vmem:[#allocation0] ss:$8 sm:$0xf] %vm555, %v554
    %s557 = scalar_lea.vmem %s0, 1
    %v558 = vld [vmem:[%s557] sm:$0x1]
    %s559 = scalar_lea.vmem %s0, 32
    %v560 = vld [vmem:[%s559] sm:$0x2]
    %vm561 = vcmask 1041409
    %v562 = vsel %vm561, %v560, %v558
    %s563 = scalar_lea.vmem %s0, 63
    %v564 = vld [vmem:[%s563] sm:$0x4]
    %vm565 = vcmask 1042434
    %v566 = vsel %vm565, %v564, %v562
    %s567 = scalar_lea.vmem %s0, 94
    %v568 = vld [vmem:[%s567] sm:$0x8]
    %vm569 = vcmask 1043459
    %v570 = vsel %vm569, %v568, %v566
    %571 = vrot.lane.b32.xlu0 %v570, 4
    %v572 = vpop.permute.xlu0 %571
    %vm573 = vcmask 64544
    %574 = vst.msk [vmem:[#allocation0] ss:$8 sm:$0xf] %vm573, %v572
    %s576 = ssub.s32 2, 1
    %v577 = vld [vmem:[#allocation0] sm:%s576]
    %s579 = ssub.s32 2, 1
    %580 = vst [vmem:[%s1] sm:%s579] %v577
    %s581 = scalar_lea.vmem [#allocation0], 8
    %v582 = vld [vmem:[%s581] sm:%s576]
    %s584 = ssub.s32 2, 1
    %s585 = scalar_lea.vmem %s1, 1
    %586 = vst [vmem:[%s585] sm:%s584] %v582
    %s587 = scalar_lea.vmem [#allocation0], 16
    %v588 = vld [vmem:[%s587] sm:%s576]
    %s590 = ssub.s32 2, 1
    %s591 = scalar_lea.vmem %s1, 2
    %592 = vst [vmem:[%s591] sm:%s590] %v588
    %s593 = scalar_lea.vmem [#allocation0], 24
    %v594 = vld [vmem:[%s593] sm:%s576]
    %s596 = ssub.s32 2, 1
    %s597 = scalar_lea.vmem %s1, 3
    %598 = vst [vmem:[%s597] sm:%s596] %v594

// kernel: forward.15
$region0: #{forward.15}
  #allocation0 [shape = 'u32[]', space=smem, size = 0x4, offset = 0x4, fixed_abs, tag = 'smem constant byte address 0x4 - core index']
  #allocation1 [shape = 'u32[72,128]{1,0:T(1,128)}', space=vmem, size = 0x9000, scoped, tag = 'internal scratch']
  %s0 = inlined_call_operand.vmem [shape: bf16[2,5,20], index: 0, kind: input, shape index: {}]
  %s1 = inlined_call_operand.vmem [shape: bf16[2,20,128], index: 1, kind: input, shape index: {}]
  %s2 = inlined_call_operand.vmem [shape: bf16[2,4,128], index: 2, kind: output, shape index: {0}]
  %s3 = inlined_call_operand.vmem [shape: f32[2,1,128], index: 3, kind: output, shape index: {1}]
  %s4 = inlined_call_operand.vmem [shape: f32[2,1,128], index: 4, kind: output, shape index: {2}]
  %5 = xla_tuple %s2, %s3, %s4
  %s6 = sld [smem:[#allocation0]]
  $region57: #{forward.15} parent=0
    _
  %s8 = ssub.s32 1, %s6
  %s9 = scalar_select 0, %s8, %s6
  loop: start=0, step=1, limit=4
  $region2: #{forward.15} parent=0 // loop_pre_header
    _
  $region3: #{forward.15} parent=0 // loop_header
    %s11 = sphi 0, %s15
    %p12 = scmp.ge.s32.totalorder %s11, 4
    %s21 = sphi 0, %s23
    %s24 = sphi 0, %s21
    %s25 = sphi 0, %s24
    %s41 = sphi 0, %s25
    %s45 = sphi 0, %s45
    %s47 = sphi 0, %s45
    %s48 = sphi 0, %s47
    %s62 = sphi 0, %s48
    %s68 = sphi 0, %s70
    %s71 = sphi 0, %s68
    %s72 = sphi 0, %s71
    %s88 = sphi 0, %s72
    %s94 = sphi 0, %s96
    %s97 = sphi 0, %s94
    %s98 = sphi 0, %s97
    %s114 = sphi 0, %s98
    %s120 = sphi 0, %s122
    %s123 = sphi 0, %s120
    %s124 = sphi 0, %s123
    %s140 = sphi 0, %s124
  $region4: #{forward.15} parent=0 // loop_header_branch
    %14 = sbr.rel (%p12) target = $region8
  $region5: #{forward.15} parent=0 // loop_body
    %s16 = ssub.s32 %s11, 1
    %s17 = ssub.s32 %s11, 2
    %s18 = sadd.s32 %s11, 1
    %s19 = ssub.s32 %s11, %s18
    %p20 = scmp.eq.s32.totalorder %s19, 0
    %s22 = sadd.s32 %s21, 1
    %s23 = scalar_select %p20, %s21, %s22
    %p26 = pneg %p20
    %p27 = scmp.eq.s32.totalorder %s11, 1
    %p28 = por %p26, %p27
    %p29 = scmp.ne.s32.totalorder %s21, %s24
    %p30 = scmp.eq.s32.totalorder %s11, 0
    %p31 = por %p29, %p30
    %p32 = scmp.ne.s32.totalorder %s21, %s24
    %p33 = scmp.eq.s32.totalorder %s16, 1
    %p34 = por %p32, %p33
    %p35 = scmp.ne.s32.totalorder %s24, %s25
    %p36 = scmp.eq.s32.totalorder %s16, 0
    %p37 = por %p35, %p36
    %p38 = scmp.ne.s32.totalorder %s24, %s25
    %p39 = scmp.eq.s32.totalorder %s17, 1
    %p40 = por %p38, %p39
    %p42 = scmp.ne.s32.totalorder %s25, %s41
    %p43 = scmp.eq.s32.totalorder %s17, 0
    %p44 = por %p42, %p43
    %s46 = sadd.s32 %s45, 1
    %p49 = scmp.eq.s32.totalorder %s11, 1
    %p50 = scmp.ne.s32.totalorder %s45, %s47
    %p51 = scmp.eq.s32.totalorder %s11, 0
    %p52 = por %p50, %p51
    %p53 = scmp.ne.s32.totalorder %s45, %s47
    %p54 = scmp.eq.s32.totalorder %s16, 1
    %p55 = por %p53, %p54
    %p56 = scmp.ne.s32.totalorder %s47, %s48
    %p57 = scmp.eq.s32.totalorder %s16, 0
    %p58 = por %p56, %p57
    %p59 = scmp.ne.s32.totalorder %s47, %s48
    %p60 = scmp.eq.s32.totalorder %s17, 1
    %p61 = por %p59, %p60
    %p63 = scmp.ne.s32.totalorder %s48, %s62
    %p64 = scmp.eq.s32.totalorder %s17, 0
    %p65 = por %p63, %p64
    %s66 = ssub.s32 %s11, %s18
    %p67 = scmp.eq.s32.totalorder %s66, 0
    %s69 = sadd.s32 %s68, 1
    %s70 = scalar_select %p67, %s68, %s69
    %p73 = pneg %p67
    %p74 = scmp.eq.s32.totalorder %s11, 1
    %p75 = por %p73, %p74
    %p76 = scmp.ne.s32.totalorder %s68, %s71
    %p77 = scmp.eq.s32.totalorder %s11, 0
    %p78 = por %p76, %p77
    %p79 = scmp.ne.s32.totalorder %s68, %s71
    %p80 = scmp.eq.s32.totalorder %s16, 1
    %p81 = por %p79, %p80
    %p82 = scmp.ne.s32.totalorder %s71, %s72
    %p83 = scmp.eq.s32.totalorder %s16, 0
    %p84 = por %p82, %p83
    %p85 = scmp.ne.s32.totalorder %s71, %s72
    %p86 = scmp.eq.s32.totalorder %s17, 1
    %p87 = por %p85, %p86
    %p89 = scmp.ne.s32.totalorder %s72, %s88
    %p90 = scmp.eq.s32.totalorder %s17, 0
    %p91 = por %p89, %p90
    %s92 = ssub.s32 %s11, %s18
    %p93 = scmp.eq.s32.totalorder %s92, 0
    %s95 = sadd.s32 %s94, 1
    %s96 = scalar_select %p93, %s94, %s95
    %p99 = pneg %p93
    %p100 = scmp.eq.s32.totalorder %s11, 1
    %p101 = por %p99, %p100
    %p102 = scmp.ne.s32.totalorder %s94, %s97
    %p103 = scmp.eq.s32.totalorder %s11, 0
    %p104 = por %p102, %p103
    %p105 = scmp.ne.s32.totalorder %s94, %s97
    %p106 = scmp.eq.s32.totalorder %s16, 1
    %p107 = por %p105, %p106
    %p108 = scmp.ne.s32.totalorder %s97, %s98
    %p109 = scmp.eq.s32.totalorder %s16, 0
    %p110 = por %p108, %p109
    %p111 = scmp.ne.s32.totalorder %s97, %s98
    %p112 = scmp.eq.s32.totalorder %s17, 1
    %p113 = por %p111, %p112
    %p115 = scmp.ne.s32.totalorder %s98, %s114
    %p116 = scmp.eq.s32.totalorder %s17, 0
    %p117 = por %p115, %p116
    %s118 = ssub.s32 %s11, %s18
    %p119 = scmp.eq.s32.totalorder %s118, 0
    %s121 = sadd.s32 %s120, 1
    %s122 = scalar_select %p119, %s120, %s121
    %p125 = pneg %p119
    %p126 = scmp.eq.s32.totalorder %s11, 1
    %p127 = por %p125, %p126
    %p128 = scmp.ne.s32.totalorder %s120, %s123
    %p129 = scmp.eq.s32.totalorder %s11, 0
    %p130 = por %p128, %p129
    %p131 = scmp.ne.s32.totalorder %s120, %s123
    %p132 = scmp.eq.s32.totalorder %s16, 1
    %p133 = por %p131, %p132
    %p134 = scmp.ne.s32.totalorder %s123, %s124
    %p135 = scmp.eq.s32.totalorder %s16, 0
    %p136 = por %p134, %p135
    %p137 = scmp.ne.s32.totalorder %s123, %s124
    %p138 = scmp.eq.s32.totalorder %s17, 1
    %p139 = por %p137, %p138
    %p141 = scmp.ne.s32.totalorder %s124, %s140
    %p142 = scmp.eq.s32.totalorder %s17, 0
    %p143 = por %p141, %p142
    %p144 = scmp.le.s32.totalorder 1, %s11
    %p145 = scmp.lt.s32.totalorder %s11, 3
    %p146 = pnand %p144, %p145
    %p147 = pneg %p146
    // Predicated region
    $region9: #{forward.15} parent=5 // pred_check
      _
    $region10: #{forward.15} parent=5 // pred_check_branch
      %149 = sbr.rel (%p146) target = $region12
    $region11: #{forward.15} parent=5 // pred_region
      %s150 = ssub.s32 %s11, 1
      // Predicated region
      $region13: #{forward.15} parent=11 // pred_check
        %p151 = pneg %p58
      $region14: #{forward.15} parent=11 // pred_check_branch
        %153 = sbr.rel (%p151) target = $region16
      $region15: #{forward.15} parent=11 // pred_region
        _
      $region16: #{forward.15} parent=11 // pred_fallthru
        _
    $region12: #{forward.15} parent=5 // pred_fallthru
      _
    %p154 = scmp.lt.s32.totalorder %s11, 2
    // Predicated region
    $region17: #{forward.15} parent=5 // pred_check
      %p155 = pneg %p154
    $region18: #{forward.15} parent=5 // pred_check_branch
      %157 = sbr.rel (%p155) target = $region20
    $region19: #{forward.15} parent=5 // pred_region
      // Predicated region
      $region21: #{forward.15} parent=19 // pred_check
        %p158 = pneg %p31
      $region22: #{forward.15} parent=19 // pred_check_branch
        %160 = sbr.rel (%p158) target = $region24
      $region23: #{forward.15} parent=19 // pred_region
        %p161 = scmp.lt.s32.totalorder %s11, 1
        %s162 = scalar_select %p161, %s11, 1
        %s163 = smul.addr %s162, 4
        %s164 = scalar_lea.vmem %s0, %s163
      $region24: #{forward.15} parent=19 // pred_fallthru
        _
    $region20: #{forward.15} parent=5 // pred_fallthru
      _
    %p165 = scmp.le.s32.totalorder 1, %s11
    %p166 = scmp.lt.s32.totalorder %s11, 3
    %p167 = pnand %p165, %p166
    %p168 = pneg %p167
    // Predicated region
    $region25: #{forward.15} parent=5 // pred_check
      _
    $region26: #{forward.15} parent=5 // pred_check_branch
      %170 = sbr.rel (%p167) target = $region28
    $region27: #{forward.15} parent=5 // pred_region
      %s171 = ssub.s32 %s11, 1
      %p172 = scmp.lt.s32.totalorder %s16, 1
      %s173 = scalar_select %p172, %s16, 1
      %s174 = smul.addr %s173, 4
      %s175 = scalar_lea.vmem %s0, %s174
      %p176 = pneg %p37
      %p177 = pneg %p34
      %p178 = pneg %p58
      %p179 = pneg %p55
      %p180 = pneg %p84
      %p181 = pneg %p81
      %p182 = scmp.lt.s32.totalorder %s16, 1
      %s183 = scalar_select %p182, %s16, 1
      %s184 = smul.addr %s183, 2
      %s185 = scalar_lea.vmem %s2, %s184
      %p186 = pneg %p110
      %p187 = pneg %p107
      %p188 = scmp.lt.s32.totalorder %s16, 1
      %s189 = scalar_select %p188, %s16, 1
      %s190 = scalar_lea.vmem %s3, %s189
      %p191 = pneg %p136
      %p192 = pneg %p133
      %p193 = scmp.lt.s32.totalorder %s16, 1
      %s194 = scalar_select %p193, %s16, 1
      %s195 = scalar_lea.vmem %s4, %s194
      %p196 = scmp.lt.s32.totalorder %s16, 1
      %s197 = scalar_select %p196, %s16, 1
      %s198 = smul.addr %s197, 4
      %s199 = scalar_lea.vmem %s0, %s198
      %p200 = scmp.lt.s32.totalorder %s16, 1
      %s201 = scalar_select %p200, %s16, 1
      %s202 = smul.addr %s201, 2
      %s203 = scalar_lea.vmem %s2, %s202
      %p204 = scmp.lt.s32.totalorder %s16, 1
      %s205 = scalar_select %p204, %s16, 1
      %s206 = scalar_lea.vmem %s3, %s205
      %p207 = scmp.lt.s32.totalorder %s16, 1
      %s208 = scalar_select %p207, %s16, 1
      %s209 = scalar_lea.vmem %s4, %s208
      %v211 = vld [vmem:[%s199] sm:$0x3]
      %v212 = vld [vmem:[%s1] sm:$0xf]
      %v213 = vld [vmem:[%s1 + $0x4] sm:$0xf]
      %v214 = vld [vmem:[%s1 + $0x8] sm:$0x3]
      %v215 = vld [vmem:[%s199] sm:$0x7]
      %s216 = scalar_lea.vmem %s1, 12
      %v217 = vld [vmem:[%s216] sm:$0xf]
      %v218 = vld [vmem:[%s216 + $0x4] sm:$0xf]
      %v219 = vld [vmem:[%s216 + $0x8] sm:$0x3]
      %v221 = vunpack.c.l.b16 %v215
      %v222 = vpack.c.b16 %v221, %v221
      %v224 = vshrl.u32 %v222, 16
      %v226 = vshll.u32 %v222, 16
      %v228 = vrot.slane %v226, 1
      %v229 = vor.u32 %v224, %v228
      %v233 = vunpack.c.l.b16 %v217
      %v234 = vunpack.c.l.b16 %v218
      %v235 = vunpack.c.l.b16 %v219
      %v236 = vpack.c.b16 %v234, %v233
      %v237 = vpack.c.b16 %v235, %v235
      %vm239 = vcmask 162816
      %v241 = vsel %vm239, %v229, 0
      %vm243 = vcmask 1041408
      %v245 = vsel %vm243, %v237, 0
      %247 = vmatpush.bf16.msra.mxu0 0
      %248 = vmatpush.bf16.msra.mxu0 0
      %249 = vmatpush.bf16.msra.mxu0 0
      %250 = vmatpush.bf16.msra.mxu0 0
      %251 = vmatpush.bf16.msra.mxu0 0
      %252 = vmatpush.bf16.msra.mxu0 0
      %253 = vmatpush.bf16.msra.mxu0 %v245
      %254 = vmatpush.bf16.msra.mxu0 %v236
      %255 = vmatmul.bf16.gmra.mxu0 %v241
      %v256 = vpop.f32.mrf.mxu0
      %v257 = vadd.f32 0.0, %v256
      %v258 = vpop.f32.mrf.mxu0
      %259 = vdwg.mxu0
      %v263 = vunpack.c.l.b16 %v212
      %v264 = vunpack.c.l.b16 %v213
      %v265 = vunpack.c.l.b16 %v214
      %v266 = vpack.c.b16 %v264, %v263
      %v267 = vpack.c.b16 %v265, %v265
      %v270 = vsel %vm239, %v211, 0
      %v273 = vsel %vm243, %v267, 0
      %275 = vmatpush.bf16.msra.mxu0 0
      %276 = vmatpush.bf16.msra.mxu0 0
      %277 = vmatpush.bf16.msra.mxu0 0
      %278 = vmatpush.bf16.msra.mxu0 0
      %279 = vmatpush.bf16.msra.mxu0 0
      %280 = vmatpush.bf16.msra.mxu0 0
      %281 = vmatpush.bf16.msra.mxu0 %v273
      %282 = vmatpush.bf16.msra.mxu0 %v266
      %283 = vmatmul.bf16.gmra.mxu0 %v270
      %v284 = vpop.f32.mrf.mxu0
      %v285 = vadd.f32 %v257, %v284
      %v286 = vpop.f32.mrf.mxu0
      %287 = vdwg.mxu0
      %vm288 = vcmask 1043456
      %v289 = vsel %vm288, %v285, 0.0
      %v290 = vrot.slane %v289, 4
      %v291 = vadd.f32 %v289, %v290
      %v292 = vrot.slane %v291, 2
      %v293 = vadd.f32 %v291, %v292
      %v294 = vrot.slane %v293, 1
      %v295 = vadd.f32 %v293, %v294
      %296 = vst [vmem:[%s206] sm:$0x1] %v295
      %v297 = vmul.f32 %v285, %v285
      %v298 = vsel %vm288, %v297, 0.0
      %v299 = vrot.slane %v298, 4
      %v300 = vadd.f32 %v298, %v299
      %v301 = vrot.slane %v300, 2
      %v302 = vadd.f32 %v300, %v301
      %v303 = vrot.slane %v302, 1
      %v304 = vadd.f32 %v302, %v303
      %305 = vst [vmem:[%s209] sm:$0x1] %v304
      %v306 = vpack.c.bf16 %v285, %v285
      %307 = vst [vmem:[%s203] sm:$0x3] %v306
      %p308 = scmp.lt.s32.totalorder %s16, 1
      %s309 = scalar_select %p308, %s16, 1
      %s310 = smul.addr %s309, 2
      %s311 = scalar_lea.vmem %s2, %s310
      %p312 = scmp.lt.s32.totalorder %s16, 1
      %s313 = scalar_select %p312, %s16, 1
      %s314 = scalar_lea.vmem %s3, %s313
      %p315 = scmp.lt.s32.totalorder %s16, 1
      %s316 = scalar_select %p315, %s16, 1
      %s317 = scalar_lea.vmem %s4, %s316
      // Predicated region
      $region29: #{forward.15} parent=27 // pred_check
        %p318 = pneg %p81
      $region30: #{forward.15} parent=27 // pred_check_branch
        %320 = sbr.rel (%p318) target = $region32
      $region31: #{forward.15} parent=27 // pred_region
        _
      $region32: #{forward.15} parent=27 // pred_fallthru
        _
      // Predicated region
      $region33: #{forward.15} parent=27 // pred_check
        %p321 = pneg %p107
      $region34: #{forward.15} parent=27 // pred_check_branch
        %323 = sbr.rel (%p321) target = $region36
      $region35: #{forward.15} parent=27 // pred_region
        _
      $region36: #{forward.15} parent=27 // pred_fallthru
        _
      // Predicated region
      $region37: #{forward.15} parent=27 // pred_check
        %p324 = pneg %p133
      $region38: #{forward.15} parent=27 // pred_check_branch
        %326 = sbr.rel (%p324) target = $region40
      $region39: #{forward.15} parent=27 // pred_region
        _
      $region40: #{forward.15} parent=27 // pred_fallthru
        _
    $region28: #{forward.15} parent=5 // pred_fallthru
      _
    %p327 = scmp.le.s32.totalorder 2, %s11
    // Predicated region
    $region41: #{forward.15} parent=5 // pred_check
      %p328 = pneg %p327
    $region42: #{forward.15} parent=5 // pred_check_branch
      %330 = sbr.rel (%p328) target = $region44
    $region43: #{forward.15} parent=5 // pred_region
      %s331 = ssub.s32 %s11, 2
      // Predicated region
      $region45: #{forward.15} parent=43 // pred_check
        %p332 = pneg %p87
      $region46: #{forward.15} parent=43 // pred_check_branch
        %334 = sbr.rel (%p332) target = $region48
      $region47: #{forward.15} parent=43 // pred_region
        %p335 = scmp.lt.s32.totalorder %s17, 1
        %s336 = scalar_select %p335, %s17, 1
        %s337 = smul.addr %s336, 2
        %s338 = scalar_lea.vmem %s2, %s337
      $region48: #{forward.15} parent=43 // pred_fallthru
        _
      // Predicated region
      $region49: #{forward.15} parent=43 // pred_check
        %p339 = pneg %p113
      $region50: #{forward.15} parent=43 // pred_check_branch
        %341 = sbr.rel (%p339) target = $region52
      $region51: #{forward.15} parent=43 // pred_region
        %p342 = scmp.lt.s32.totalorder %s17, 1
        %s343 = scalar_select %p342, %s17, 1
        %s344 = scalar_lea.vmem %s3, %s343
      $region52: #{forward.15} parent=43 // pred_fallthru
        _
      // Predicated region
      $region53: #{forward.15} parent=43 // pred_check
        %p345 = pneg %p139
      $region54: #{forward.15} parent=43 // pred_check_branch
        %347 = sbr.rel (%p345) target = $region56
      $region55: #{forward.15} parent=43 // pred_region
        %p348 = scmp.lt.s32.totalorder %s17, 1
        %s349 = scalar_select %p348, %s17, 1
        %s350 = scalar_lea.vmem %s4, %s349
      $region56: #{forward.15} parent=43 // pred_fallthru
        _
    $region44: #{forward.15} parent=5 // pred_fallthru
      _
  $region6: #{forward.15} parent=0 // loop_footer
    %s15 = sadd.s32 1, %s11
  $region7: #{forward.15} parent=0 // loop_footer_branch
    %10 = sbr.rel target = $region3
  $region8: #{forward.15} parent=0 // loop_exit
    _

// kernel: forward.16
$region0: #{forward.16}
  #allocation0 [shape = 'u32[]', space=smem, size = 0x4, offset = 0x4, fixed_abs, tag = 'smem constant byte address 0x4 - core index']
  #allocation1 [shape = 'u32[72,128]{1,0:T(1,128)}', space=vmem, size = 0x9000, scoped, tag = 'internal scratch']
  %s0 = inlined_call_operand.vmem [shape: bf16[1,512], index: 0, kind: input, shape index: {}]
  %s1 = inlined_call_operand.vmem [shape: f32[1,512], index: 1, kind: input, shape index: {}]
  %s2 = inlined_call_operand.vmem [shape: f32[1,512], index: 2, kind: input, shape index: {}]
  %s3 = inlined_call_operand.vmem [shape: bf16[1,512], index: 3, kind: output, shape index: {}]
  %s4 = sld [smem:[#allocation0]]
  $region22: #{forward.16} parent=0
    _
  %s6 = ssub.s32 1, %s4
  %s7 = scalar_select 0, %s6, %s4
  // Predicated region
  $region2: #{forward.16} parent=0 // pred_check
    _
  $region3: #{forward.16} parent=0 // pred_check_branch
    %9 = sbr.rel (0) target = $region5
  $region4: #{forward.16} parent=0 // pred_region
    _
  $region5: #{forward.16} parent=0 // pred_fallthru
    _
  // Predicated region
  $region6: #{forward.16} parent=0 // pred_check
    _
  $region7: #{forward.16} parent=0 // pred_check_branch
    %11 = sbr.rel (0) target = $region9
  $region8: #{forward.16} parent=0 // pred_region
    _
  $region9: #{forward.16} parent=0 // pred_fallthru
    _
  // Predicated region
  $region10: #{forward.16} parent=0 // pred_check
    _
  $region11: #{forward.16} parent=0 // pred_check_branch
    %13 = sbr.rel (0) target = $region13
  $region12: #{forward.16} parent=0 // pred_region
    _
  $region13: #{forward.16} parent=0 // pred_fallthru
    _
  %v14 = vld [vmem:[%s0] sm:$0xf]
  %v15 = vunpack.c.l.bf16 %v14
  %v16 = vld [vmem:[%s1] sm:$0xf]
  %v19 = vunpack.c.l.s4 857870592
  %v20 = vunpack.c.0.s8 %v19
  %v21 = vperm.slane %v16, %v20
  %v23 = vmul.f32 %v15, %v21
  %v24 = vld [vmem:[%s2] sm:$0xf]
  %v27 = vunpack.c.l.s4 857870592
  %v28 = vunpack.c.0.s8 %v27
  %v29 = vperm.slane %v24, %v28
  %v31 = vadd.f32 %v23, %v29
  %v32 = vmax.f32 %v31, 0.0
  %v34 = vperm.slane %v32, 0
  %v35 = vperm.slane %v32, 2
  %v36 = vperm.slane %v32, 4
  %v37 = vperm.slane %v32, 6
  %v42 = vpack.c.bf16 %v35, %v34
  %v43 = vpack.c.bf16 %v37, %v36
  %v46 = vrot.slane %v42, 3
  %v47 = vrot.slane %v43, 6
  %v48 = vrot.slane %v43, 1
  %vm49 = vcmask 1040384
  %v52 = vsel %vm49, %v42, %v46
  %vm53 = vcmask 1042434
  %v56 = vsel %vm53, %v47, %v48
  %vm57 = vcmask 1041408
  %v58 = vsel %vm57, %v52, %v56
  %vm60 = vcmask 1040384
  %vm61 = vsmask.f32 256
  %vm62 = vmand %vm60, %vm61
  %vm63 = vcmask 1041409
  %vm64 = vsmask.f32 1280
  %vm65 = vmand %vm63, %vm64
  %vm66 = vmor %vm65, %vm62
  %vm67 = vcmask 1042434
  %vm68 = vsmask.f32 2304
  %vm69 = vmand %vm67, %vm68
  %vm70 = vmor %vm69, %vm66
  %vm71 = vcmask 1043459
  %vm72 = vsmask.f32 3328
  %vm73 = vmand %vm71, %vm72
  %vm74 = vmor %vm73, %vm70
  %v75 = vld [vmem:[%s3] sm:$0xf]
  %v76 = vsel %vm74, %v58, %v75
  %77 = vst [vmem:[%s3] sm:$0xf] %v76
  // Predicated region
  $region14: #{forward.16} parent=0 // pred_check
    _
  $region15: #{forward.16} parent=0 // pred_check_branch
    %79 = sbr.rel (0) target = $region17
  $region16: #{forward.16} parent=0 // pred_region
    _
  $region17: #{forward.16} parent=0 // pred_fallthru
    _
  // Predicated region
  $region18: #{forward.16} parent=0 // pred_check
    _
  $region19: #{forward.16} parent=0 // pred_check_branch
    %81 = sbr.rel (0) target = $region21
  $region20: #{forward.16} parent=0 // pred_region
    _
  $region21: #{forward.16} parent=0 // pred_fallthru
    _

// kernel: forward.18
$region0: #{forward.18}
  #allocation0 [shape = 'u32[]', space=smem, size = 0x4, offset = 0x4, fixed_abs, tag = 'smem constant byte address 0x4 - core index']
  #allocation1 [shape = 'u32[72,128]{1,0:T(1,128)}', space=vmem, size = 0x9000, scoped, tag = 'internal scratch']
  %s0 = inlined_call_operand.vmem [shape: bf16[1,512], index: 0, kind: input, shape index: {}]
  %s1 = inlined_call_operand.vmem [shape: bf16[1,512], index: 1, kind: input, shape index: {}]
  %s2 = inlined_call_operand.vmem [shape: f32[1,512], index: 2, kind: input, shape index: {}]
  %s3 = inlined_call_operand.vmem [shape: f32[1,512], index: 3, kind: input, shape index: {}]
  %s4 = inlined_call_operand.vmem [shape: bf16[1,512], index: 4, kind: output, shape index: {}]
  %s5 = sld [smem:[#allocation0]]
  $region26: #{forward.18} parent=0
    _
  %s7 = ssub.s32 1, %s5
  %s8 = scalar_select 0, %s7, %s5
  // Predicated region
  $region2: #{forward.18} parent=0 // pred_check
    _
  $region3: #{forward.18} parent=0 // pred_check_branch
    %10 = sbr.rel (0) target = $region5
  $region4: #{forward.18} parent=0 // pred_region
    _
  $region5: #{forward.18} parent=0 // pred_fallthru
    _
  // Predicated region
  $region6: #{forward.18} parent=0 // pred_check
    _
  $region7: #{forward.18} parent=0 // pred_check_branch
    %12 = sbr.rel (0) target = $region9
  $region8: #{forward.18} parent=0 // pred_region
    _
  $region9: #{forward.18} parent=0 // pred_fallthru
    _
  // Predicated region
  $region10: #{forward.18} parent=0 // pred_check
    _
  $region11: #{forward.18} parent=0 // pred_check_branch
    %14 = sbr.rel (0) target = $region13
  $region12: #{forward.18} parent=0 // pred_region
    _
  $region13: #{forward.18} parent=0 // pred_fallthru
    _
  // Predicated region
  $region14: #{forward.18} parent=0 // pred_check
    _
  $region15: #{forward.18} parent=0 // pred_check_branch
    %16 = sbr.rel (0) target = $region17
  $region16: #{forward.18} parent=0 // pred_region
    _
  $region17: #{forward.18} parent=0 // pred_fallthru
    _
  %v17 = vld [vmem:[%s0] sm:$0xf]
  %v18 = vunpack.c.l.bf16 %v17
  %v19 = vld [vmem:[%s2] sm:$0xf]
  %v22 = vunpack.c.l.s4 857870592
  %v23 = vunpack.c.0.s8 %v22
  %v24 = vperm.slane %v19, %v23
  %v26 = vmul.f32 %v18, %v24
  %v27 = vld [vmem:[%s3] sm:$0xf]
  %v30 = vunpack.c.l.s4 857870592
  %v31 = vunpack.c.0.s8 %v30
  %v32 = vperm.slane %v27, %v31
  %v34 = vadd.f32 %v26, %v32
  %v35 = vld [vmem:[%s1] sm:$0xf]
  %v36 = vunpack.c.l.bf16 %v35
  %v37 = vadd.f32 %v34, %v36
  %v38 = vmax.f32 %v37, 0.0
  %v40 = vperm.slane %v38, 0
  %v41 = vperm.slane %v38, 2
  %v42 = vperm.slane %v38, 4
  %v43 = vperm.slane %v38, 6
  %v48 = vpack.c.bf16 %v41, %v40
  %v49 = vpack.c.bf16 %v43, %v42
  %v52 = vrot.slane %v48, 3
  %v53 = vrot.slane %v49, 6
  %v54 = vrot.slane %v49, 1
  %vm55 = vcmask 1040384
  %v58 = vsel %vm55, %v48, %v52
  %vm59 = vcmask 1042434
  %v62 = vsel %vm59, %v53, %v54
  %vm63 = vcmask 1041408
  %v64 = vsel %vm63, %v58, %v62
  %vm66 = vcmask 1040384
  %vm67 = vsmask.f32 256
  %vm68 = vmand %vm66, %vm67
  %vm69 = vcmask 1041409
  %vm70 = vsmask.f32 1280
  %vm71 = vmand %vm69, %vm70
  %vm72 = vmor %vm71, %vm68
  %vm73 = vcmask 1042434
  %vm74 = vsmask.f32 2304
  %vm75 = vmand %vm73, %vm74
  %vm76 = vmor %vm75, %vm72
  %vm77 = vcmask 1043459
  %vm78 = vsmask.f32 3328
  %vm79 = vmand %vm77, %vm78
  %vm80 = vmor %vm79, %vm76
  %v81 = vld [vmem:[%s4] sm:$0xf]
  %v82 = vsel %vm80, %v64, %v81
  %83 = vst [vmem:[%s4] sm:$0xf] %v82
  // Predicated region
  $region18: #{forward.18} parent=0 // pred_check
    _
  $region19: #{forward.18} parent=0 // pred_check_branch
    %85 = sbr.rel (0) target = $region21
  $region20: #{forward.18} parent=0 // pred_region
    _
  $region21: #{forward.18} parent=0 // pred_fallthru
    _
  // Predicated region
  $region22: #{forward.18} parent=0 // pred_check
    _
  $region23: #{forward.18} parent=0 // pred_check_branch
    %87 = sbr.rel (0) target = $region25
  $region24: #{forward.18} parent=0 // pred_region
    _
  $region25: #{forward.18} parent=0 // pred_fallthru
    _

// kernel: forward.17
$region0: #{forward.17}
  #allocation0 [shape = 'u32[]', space=smem, size = 0x4, offset = 0x4, fixed_abs, tag = 'smem constant byte address 0x4 - core index']
  #allocation1 [shape = 'u32[72,128]{1,0:T(1,128)}', space=vmem, size = 0x9000, scoped, tag = 'internal scratch']
  %s0 = inlined_call_operand.vmem [shape: bf16[2,10,40], index: 0, kind: input, shape index: {}]
  %s1 = inlined_call_operand.vmem [shape: bf16[3,40,128], index: 1, kind: input, shape index: {}]
  %s2 = inlined_call_operand.vmem [shape: bf16[2,8,128], index: 2, kind: output, shape index: {0}]
  %s3 = inlined_call_operand.vmem [shape: f32[2,1,128], index: 3, kind: output, shape index: {1}]
  %s4 = inlined_call_operand.vmem [shape: f32[2,1,128], index: 4, kind: output, shape index: {2}]
  %5 = xla_tuple %s2, %s3, %s4
  %s6 = sld [smem:[#allocation0]]
  $region57: #{forward.17} parent=0
    _
  %s8 = ssub.s32 1, %s6
  %s9 = scalar_select 0, %s8, %s6
  loop: start=0, step=1, limit=4
  $region2: #{forward.17} parent=0 // loop_pre_header
    _
  $region3: #{forward.17} parent=0 // loop_header
    %s11 = sphi 0, %s15
    %p12 = scmp.ge.s32.totalorder %s11, 4
    %s21 = sphi 0, %s23
    %s24 = sphi 0, %s21
    %s25 = sphi 0, %s24
    %s41 = sphi 0, %s25
    %s45 = sphi 0, %s45
    %s47 = sphi 0, %s45
    %s48 = sphi 0, %s47
    %s62 = sphi 0, %s48
    %s68 = sphi 0, %s70
    %s71 = sphi 0, %s68
    %s72 = sphi 0, %s71
    %s88 = sphi 0, %s72
    %s94 = sphi 0, %s96
    %s97 = sphi 0, %s94
    %s98 = sphi 0, %s97
    %s114 = sphi 0, %s98
    %s120 = sphi 0, %s122
    %s123 = sphi 0, %s120
    %s124 = sphi 0, %s123
    %s140 = sphi 0, %s124
  $region4: #{forward.17} parent=0 // loop_header_branch
    %14 = sbr.rel (%p12) target = $region8
  $region5: #{forward.17} parent=0 // loop_body
    %s16 = ssub.s32 %s11, 1
    %s17 = ssub.s32 %s11, 2
    %s18 = sadd.s32 %s11, 1
    %s19 = ssub.s32 %s11, %s18
    %p20 = scmp.eq.s32.totalorder %s19, 0
    %s22 = sadd.s32 %s21, 1
    %s23 = scalar_select %p20, %s21, %s22
    %p26 = pneg %p20
    %p27 = scmp.eq.s32.totalorder %s11, 1
    %p28 = por %p26, %p27
    %p29 = scmp.ne.s32.totalorder %s21, %s24
    %p30 = scmp.eq.s32.totalorder %s11, 0
    %p31 = por %p29, %p30
    %p32 = scmp.ne.s32.totalorder %s21, %s24
    %p33 = scmp.eq.s32.totalorder %s16, 1
    %p34 = por %p32, %p33
    %p35 = scmp.ne.s32.totalorder %s24, %s25
    %p36 = scmp.eq.s32.totalorder %s16, 0
    %p37 = por %p35, %p36
    %p38 = scmp.ne.s32.totalorder %s24, %s25
    %p39 = scmp.eq.s32.totalorder %s17, 1
    %p40 = por %p38, %p39
    %p42 = scmp.ne.s32.totalorder %s25, %s41
    %p43 = scmp.eq.s32.totalorder %s17, 0
    %p44 = por %p42, %p43
    %s46 = sadd.s32 %s45, 1
    %p49 = scmp.eq.s32.totalorder %s11, 1
    %p50 = scmp.ne.s32.totalorder %s45, %s47
    %p51 = scmp.eq.s32.totalorder %s11, 0
    %p52 = por %p50, %p51
    %p53 = scmp.ne.s32.totalorder %s45, %s47
    %p54 = scmp.eq.s32.totalorder %s16, 1
    %p55 = por %p53, %p54
    %p56 = scmp.ne.s32.totalorder %s47, %s48
    %p57 = scmp.eq.s32.totalorder %s16, 0
    %p58 = por %p56, %p57
    %p59 = scmp.ne.s32.totalorder %s47, %s48
    %p60 = scmp.eq.s32.totalorder %s17, 1
    %p61 = por %p59, %p60
    %p63 = scmp.ne.s32.totalorder %s48, %s62
    %p64 = scmp.eq.s32.totalorder %s17, 0
    %p65 = por %p63, %p64
    %s66 = ssub.s32 %s11, %s18
    %p67 = scmp.eq.s32.totalorder %s66, 0
    %s69 = sadd.s32 %s68, 1
    %s70 = scalar_select %p67, %s68, %s69
    %p73 = pneg %p67
    %p74 = scmp.eq.s32.totalorder %s11, 1
    %p75 = por %p73, %p74
    %p76 = scmp.ne.s32.totalorder %s68, %s71
    %p77 = scmp.eq.s32.totalorder %s11, 0
    %p78 = por %p76, %p77
    %p79 = scmp.ne.s32.totalorder %s68, %s71
    %p80 = scmp.eq.s32.totalorder %s16, 1
    %p81 = por %p79, %p80
    %p82 = scmp.ne.s32.totalorder %s71, %s72
    %p83 = scmp.eq.s32.totalorder %s16, 0
    %p84 = por %p82, %p83
    %p85 = scmp.ne.s32.totalorder %s71, %s72
    %p86 = scmp.eq.s32.totalorder %s17, 1
    %p87 = por %p85, %p86
    %p89 = scmp.ne.s32.totalorder %s72, %s88
    %p90 = scmp.eq.s32.totalorder %s17, 0
    %p91 = por %p89, %p90
    %s92 = ssub.s32 %s11, %s18
    %p93 = scmp.eq.s32.totalorder %s92, 0
    %s95 = sadd.s32 %s94, 1
    %s96 = scalar_select %p93, %s94, %s95
    %p99 = pneg %p93
    %p100 = scmp.eq.s32.totalorder %s11, 1
    %p101 = por %p99, %p100
    %p102 = scmp.ne.s32.totalorder %s94, %s97
    %p103 = scmp.eq.s32.totalorder %s11, 0
    %p104 = por %p102, %p103
    %p105 = scmp.ne.s32.totalorder %s94, %s97
    %p106 = scmp.eq.s32.totalorder %s16, 1
    %p107 = por %p105, %p106
    %p108 = scmp.ne.s32.totalorder %s97, %s98
    %p109 = scmp.eq.s32.totalorder %s16, 0
    %p110 = por %p108, %p109
    %p111 = scmp.ne.s32.totalorder %s97, %s98
    %p112 = scmp.eq.s32.totalorder %s17, 1
    %p113 = por %p111, %p112
    %p115 = scmp.ne.s32.totalorder %s98, %s114
    %p116 = scmp.eq.s32.totalorder %s17, 0
    %p117 = por %p115, %p116
    %s118 = ssub.s32 %s11, %s18
    %p119 = scmp.eq.s32.totalorder %s118, 0
    %s121 = sadd.s32 %s120, 1
    %s122 = scalar_select %p119, %s120, %s121
    %p125 = pneg %p119
    %p126 = scmp.eq.s32.totalorder %s11, 1
    %p127 = por %p125, %p126
    %p128 = scmp.ne.s32.totalorder %s120, %s123
    %p129 = scmp.eq.s32.totalorder %s11, 0
    %p130 = por %p128, %p129
    %p131 = scmp.ne.s32.totalorder %s120, %s123
    %p132 = scmp.eq.s32.totalorder %s16, 1
    %p133 = por %p131, %p132
    %p134 = scmp.ne.s32.totalorder %s123, %s124
    %p135 = scmp.eq.s32.totalorder %s16, 0
    %p136 = por %p134, %p135
    %p137 = scmp.ne.s32.totalorder %s123, %s124
    %p138 = scmp.eq.s32.totalorder %s17, 1
    %p139 = por %p137, %p138
    %p141 = scmp.ne.s32.totalorder %s124, %s140
    %p142 = scmp.eq.s32.totalorder %s17, 0
    %p143 = por %p141, %p142
    %p144 = scmp.le.s32.totalorder 1, %s11
    %p145 = scmp.lt.s32.totalorder %s11, 3
    %p146 = pnand %p144, %p145
    %p147 = pneg %p146
    // Predicated region
    $region9: #{forward.17} parent=5 // pred_check
      _
    $region10: #{forward.17} parent=5 // pred_check_branch
      %149 = sbr.rel (%p146) target = $region12
    $region11: #{forward.17} parent=5 // pred_region
      %s150 = ssub.s32 %s11, 1
      // Predicated region
      $region13: #{forward.17} parent=11 // pred_check
        %p151 = pneg %p58
      $region14: #{forward.17} parent=11 // pred_check_branch
        %153 = sbr.rel (%p151) target = $region16
      $region15: #{forward.17} parent=11 // pred_region
        _
      $region16: #{forward.17} parent=11 // pred_fallthru
        _
    $region12: #{forward.17} parent=5 // pred_fallthru
      _
    %p154 = scmp.lt.s32.totalorder %s11, 2
    // Predicated region
    $region17: #{forward.17} parent=5 // pred_check
      %p155 = pneg %p154
    $region18: #{forward.17} parent=5 // pred_check_branch
      %157 = sbr.rel (%p155) target = $region20
    $region19: #{forward.17} parent=5 // pred_region
      // Predicated region
      $region21: #{forward.17} parent=19 // pred_check
        %p158 = pneg %p31
      $region22: #{forward.17} parent=19 // pred_check_branch
        %160 = sbr.rel (%p158) target = $region24
      $region23: #{forward.17} parent=19 // pred_region
        %p161 = scmp.lt.s32.totalorder %s11, 1
        %s162 = scalar_select %p161, %s11, 1
        %s163 = smul.addr %s162, 2
        %s164 = smul.addr %s163, 4
        %s165 = scalar_lea.vmem %s0, %s164
      $region24: #{forward.17} parent=19 // pred_fallthru
        _
    $region20: #{forward.17} parent=5 // pred_fallthru
      _
    %p166 = scmp.le.s32.totalorder 1, %s11
    %p167 = scmp.lt.s32.totalorder %s11, 3
    %p168 = pnand %p166, %p167
    %p169 = pneg %p168
    // Predicated region
    $region25: #{forward.17} parent=5 // pred_check
      _
    $region26: #{forward.17} parent=5 // pred_check_branch
      %171 = sbr.rel (%p168) target = $region28
    $region27: #{forward.17} parent=5 // pred_region
      %s172 = ssub.s32 %s11, 1
      %p173 = scmp.lt.s32.totalorder %s16, 1
      %s174 = scalar_select %p173, %s16, 1
      %s175 = smul.addr %s174, 2
      %s176 = smul.addr %s175, 4
      %s177 = scalar_lea.vmem %s0, %s176
      %p178 = pneg %p37
      %p179 = pneg %p34
      %p180 = pneg %p58
      %p181 = pneg %p55
      %p182 = pneg %p84
      %p183 = pneg %p81
      %p184 = scmp.lt.s32.totalorder %s16, 1
      %s185 = scalar_select %p184, %s16, 1
      %s186 = smul.addr %s185, 4
      %s187 = scalar_lea.vmem %s2, %s186
      %p188 = pneg %p110
      %p189 = pneg %p107
      %p190 = scmp.lt.s32.totalorder %s16, 1
      %s191 = scalar_select %p190, %s16, 1
      %s192 = scalar_lea.vmem %s3, %s191
      %p193 = pneg %p136
      %p194 = pneg %p133
      %p195 = scmp.lt.s32.totalorder %s16, 1
      %s196 = scalar_select %p195, %s16, 1
      %s197 = scalar_lea.vmem %s4, %s196
      %p198 = scmp.lt.s32.totalorder %s16, 1
      %s199 = scalar_select %p198, %s16, 1
      %s200 = smul.addr %s199, 2
      %s201 = smul.addr %s200, 4
      %s202 = scalar_lea.vmem %s0, %s201
      %p203 = scmp.lt.s32.totalorder %s16, 1
      %s204 = scalar_select %p203, %s16, 1
      %s205 = smul.addr %s204, 4
      %s206 = scalar_lea.vmem %s2, %s205
      %p207 = scmp.lt.s32.totalorder %s16, 1
      %s208 = scalar_select %p207, %s16, 1
      %s209 = scalar_lea.vmem %s3, %s208
      %p210 = scmp.lt.s32.totalorder %s16, 1
      %s211 = scalar_select %p210, %s16, 1
      %s212 = scalar_lea.vmem %s4, %s211
      %v214 = vld [vmem:[%s202] sm:$0xf]
      %v215 = vld [vmem:[%s1] sm:$0xf]
      %v216 = vld [vmem:[%s1 + $0x4] sm:$0xf]
      %v217 = vld [vmem:[%s1 + $0x8] sm:$0xf]
      %v218 = vld [vmem:[%s1 + $0xc] sm:$0xf]
      %v219 = vld [vmem:[%s1 + $0x10] sm:$0xf]
      %v220 = vld [vmem:[%s202 + $0x4] sm:$0x1]
      %s221 = scalar_lea.vmem %s1, 20
      %v222 = vld [vmem:[%s221] sm:$0xf]
      %v223 = vld [vmem:[%s221 + $0x4] sm:$0xf]
      %v224 = vld [vmem:[%s221 + $0x8] sm:$0xf]
      %v225 = vld [vmem:[%s221 + $0xc] sm:$0xf]
      %v226 = vld [vmem:[%s221 + $0x10] sm:$0xf]
      %v229 = vunpack.c.l.b16 %v214
      %v230 = vunpack.c.l.b16 %v220
      %v231 = vpack.c.b16 %v230, %v229
      %v233 = vshrl.u32 %v231, 16
      %v235 = vshll.u32 %v231, 16
      %v237 = vrot.slane %v235, 1
      %v238 = vor.u32 %v233, %v237
      %v244 = vunpack.c.l.b16 %v222
      %v245 = vunpack.c.l.b16 %v223
      %v246 = vunpack.c.l.b16 %v224
      %v247 = vunpack.c.l.b16 %v225
      %v248 = vunpack.c.l.b16 %v226
      %v249 = vpack.c.b16 %v245, %v244
      %v250 = vpack.c.b16 %v247, %v246
      %v251 = vpack.c.b16 %v248, %v248
      %vm254 = vcmask 326656
      %v256 = vsel %vm254, %v238, 0
      %vm258 = vcmask 1043456
      %v260 = vsel %vm258, %v251, 0
      %262 = vmatpush.bf16.msra.mxu0 0
      %263 = vmatpush.bf16.msra.mxu0 0
      %264 = vmatpush.bf16.msra.mxu0 0
      %265 = vmatpush.bf16.msra.mxu0 0
      %266 = vmatpush.bf16.msra.mxu0 0
      %267 = vmatpush.bf16.msra.mxu0 %v260
      %268 = vmatpush.bf16.msra.mxu0 %v250
      %269 = vmatpush.bf16.msra.mxu0 %v249
      %270 = vmatmul.bf16.gmra.mxu0 %v256
      %v271 = vpop.f32.mrf.mxu0
      %v272 = vadd.f32 0.0, %v271
      %v273 = vpop.f32.mrf.mxu0
      %274 = vdwg.mxu0
      %v280 = vunpack.c.l.b16 %v215
      %v281 = vunpack.c.l.b16 %v216
      %v282 = vunpack.c.l.b16 %v217
      %v283 = vunpack.c.l.b16 %v218
      %v284 = vunpack.c.l.b16 %v219
      %v285 = vpack.c.b16 %v281, %v280
      %v286 = vpack.c.b16 %v283, %v282
      %v287 = vpack.c.b16 %v284, %v284
      %v291 = vsel %vm254, %v214, 0
      %v294 = vsel %vm258, %v287, 0
      %296 = vmatpush.bf16.msra.mxu0 0
      %297 = vmatpush.bf16.msra.mxu0 0
      %298 = vmatpush.bf16.msra.mxu0 0
      %299 = vmatpush.bf16.msra.mxu0 0
      %300 = vmatpush.bf16.msra.mxu0 0
      %301 = vmatpush.bf16.msra.mxu0 %v294
      %302 = vmatpush.bf16.msra.mxu0 %v286
      %303 = vmatpush.bf16.msra.mxu0 %v285
      %304 = vmatmul.bf16.gmra.mxu0 %v291
      %v305 = vpop.f32.mrf.mxu0
      %v306 = vadd.f32 %v272, %v305
      %v307 = vpop.f32.mrf.mxu0
      %308 = vdwg.mxu0
      %v309 = vld [vmem:[%s202] sm:$0xe]
      %s310 = scalar_lea.vmem %s1, 40
      %v311 = vld [vmem:[%s310] sm:$0xf]
      %v312 = vld [vmem:[%s310 + $0x4] sm:$0xf]
      %v313 = vld [vmem:[%s310 + $0x8] sm:$0xf]
      %v314 = vld [vmem:[%s310 + $0xc] sm:$0xf]
      %v315 = vld [vmem:[%s310 + $0x10] sm:$0xf]
      %v317 = vunpack.c.l.b16 %v309
      %v318 = vpack.c.b16 %v230, %v317
      %v319 = vrot.slane %v318, 1
      %v325 = vunpack.c.l.b16 %v311
      %v326 = vunpack.c.l.b16 %v312
      %v327 = vunpack.c.l.b16 %v313
      %v328 = vunpack.c.l.b16 %v314
      %v329 = vunpack.c.l.b16 %v315
      %v330 = vpack.c.b16 %v326, %v325
      %v331 = vpack.c.b16 %v328, %v327
      %v332 = vpack.c.b16 %v329, %v329
      %v336 = vsel %vm254, %v319, 0
      %v339 = vsel %vm258, %v332, 0
      %341 = vmatpush.bf16.msra.mxu0 0
      %342 = vmatpush.bf16.msra.mxu0 0
      %343 = vmatpush.bf16.msra.mxu0 0
      %344 = vmatpush.bf16.msra.mxu0 0
      %345 = vmatpush.bf16.msra.mxu0 0
      %346 = vmatpush.bf16.msra.mxu0 %v339
      %347 = vmatpush.bf16.msra.mxu0 %v331
      %348 = vmatpush.bf16.msra.mxu0 %v330
      %349 = vmatmul.bf16.gmra.mxu0 %v336
      %v350 = vpop.f32.mrf.mxu0
      %v351 = vadd.f32 0.0, %v350
      %v352 = vpop.f32.mrf.mxu0
      %353 = vdwg.mxu0
      %v354 = vadd.f32 %v306, %v351
      %v355 = vrot.slane %v354, 4
      %v356 = vadd.f32 %v354, %v355
      %v357 = vrot.slane %v356, 2
      %v358 = vadd.f32 %v356, %v357
      %v359 = vrot.slane %v358, 1
      %v360 = vadd.f32 %v358, %v359
      %361 = vst [vmem:[%s209] sm:$0x1] %v360
      %v362 = vmul.f32 %v354, %v354
      %v363 = vrot.slane %v362, 4
      %v364 = vadd.f32 %v362, %v363
      %v365 = vrot.slane %v364, 2
      %v366 = vadd.f32 %v364, %v365
      %v367 = vrot.slane %v366, 1
      %v368 = vadd.f32 %v366, %v367
      %369 = vst [vmem:[%s212] sm:$0x1] %v368
      %v370 = vpack.c.bf16 %v354, %v354
      %371 = vst [vmem:[%s206] sm:$0xf] %v370
      %p372 = scmp.lt.s32.totalorder %s16, 1
      %s373 = scalar_select %p372, %s16, 1
      %s374 = smul.addr %s373, 4
      %s375 = scalar_lea.vmem %s2, %s374
      %p376 = scmp.lt.s32.totalorder %s16, 1
      %s377 = scalar_select %p376, %s16, 1
      %s378 = scalar_lea.vmem %s3, %s377
      %p379 = scmp.lt.s32.totalorder %s16, 1
      %s380 = scalar_select %p379, %s16, 1
      %s381 = scalar_lea.vmem %s4, %s380
      // Predicated region
      $region29: #{forward.17} parent=27 // pred_check
        %p382 = pneg %p81
      $region30: #{forward.17} parent=27 // pred_check_branch
        %384 = sbr.rel (%p382) target = $region32
      $region31: #{forward.17} parent=27 // pred_region
        _
      $region32: #{forward.17} parent=27 // pred_fallthru
        _
      // Predicated region
      $region33: #{forward.17} parent=27 // pred_check
        %p385 = pneg %p107
      $region34: #{forward.17} parent=27 // pred_check_branch
        %387 = sbr.rel (%p385) target = $region36
      $region35: #{forward.17} parent=27 // pred_region
        _
      $region36: #{forward.17} parent=27 // pred_fallthru
        _
      // Predicated region
      $region37: #{forward.17} parent=27 // pred_check
        %p388 = pneg %p133
      $region38: #{forward.17} parent=27 // pred_check_branch
        %390 = sbr.rel (%p388) target = $region40
      $region39: #{forward.17} parent=27 // pred_region
        _
      $region40: #{forward.17} parent=27 // pred_fallthru
        _
    $region28: #{forward.17} parent=5 // pred_fallthru
      _
    %p391 = scmp.le.s32.totalorder 2, %s11
    // Predicated region
    $region41: #{forward.17} parent=5 // pred_check
      %p392 = pneg %p391
    $region42: #{forward.17} parent=5 // pred_check_branch
      %394 = sbr.rel (%p392) target = $region44
    $region43: #{forward.17} parent=5 // pred_region
      %s395 = ssub.s32 %s11, 2
      // Predicated region
      $region45: #{forward.17} parent=43 // pred_check
        %p396 = pneg %p87
      $region46: #{forward.17} parent=43 // pred_check_branch
        %398 = sbr.rel (%p396) target = $region48
      $region47: #{forward.17} parent=43 // pred_region
        %p399 = scmp.lt.s32.totalorder %s17, 1
        %s400 = scalar_select %p399, %s17, 1
        %s401 = smul.addr %s400, 4
        %s402 = scalar_lea.vmem %s2, %s401
      $region48: #{forward.17} parent=43 // pred_fallthru
        _
      // Predicated region
      $region49: #{forward.17} parent=43 // pred_check
        %p403 = pneg %p113
      $region50: #{forward.17} parent=43 // pred_check_branch
        %405 = sbr.rel (%p403) target = $region52
      $region51: #{forward.17} parent=43 // pred_region
        %p406 = scmp.lt.s32.totalorder %s17, 1
        %s407 = scalar_select %p406, %s17, 1
        %s408 = scalar_lea.vmem %s3, %s407
      $region52: #{forward.17} parent=43 // pred_fallthru
        _
      // Predicated region
      $region53: #{forward.17} parent=43 // pred_check
        %p409 = pneg %p139
      $region54: #{forward.17} parent=43 // pred_check_branch
        %411 = sbr.rel (%p409) target = $region56
      $region55: #{forward.17} parent=43 // pred_region
        %p412 = scmp.lt.s32.totalorder %s17, 1
        %s413 = scalar_select %p412, %s17, 1
        %s414 = scalar_lea.vmem %s4, %s413
      $region56: #{forward.17} parent=43 // pred_fallthru
        _
    $region44: #{forward.17} parent=5 // pred_fallthru
      _
  $region6: #{forward.17} parent=0 // loop_footer
    %s15 = sadd.s32 1, %s11
  $region7: #{forward.17} parent=0 // loop_footer_branch
    %10 = sbr.rel target = $region3
  $region8: #{forward.17} parent=0 // loop_exit
    _

// kernel: forward.19
$region0: #{forward.19}
  #allocation0 [shape = 'u32[]', space=smem, size = 0x4, offset = 0x4, fixed_abs, tag = 'smem constant byte address 0x4 - core index']
  #allocation1 [shape = 'u32[72,128]{1,0:T(1,128)}', space=vmem, size = 0x9000, scoped, tag = 'internal scratch']
  %s0 = inlined_call_operand.vmem [shape: bf16[2,8,32], index: 0, kind: input, shape index: {}]
  %s1 = inlined_call_operand.vmem [shape: bf16[1,32,128], index: 1, kind: input, shape index: {}]
  %s2 = inlined_call_operand.vmem [shape: f32[1,128], index: 2, kind: input, shape index: {}]
  %s3 = inlined_call_operand.vmem [shape: bf16[2,8,128], index: 3, kind: output, shape index: {}]
  %s4 = sld [smem:[#allocation0]]
  $region45: #{forward.19} parent=0
    _
  %s6 = ssub.s32 1, %s4
  %s7 = scalar_select 0, %s6, %s4
  loop: start=0, step=1, limit=4
  $region2: #{forward.19} parent=0 // loop_pre_header
    _
  $region3: #{forward.19} parent=0 // loop_header
    %s9 = sphi 0, %s13
    %p10 = scmp.ge.s32.totalorder %s9, 4
    %s19 = sphi 0, %s21
    %s22 = sphi 0, %s19
    %s23 = sphi 0, %s22
    %s39 = sphi 0, %s23
    %s43 = sphi 0, %s43
    %s45 = sphi 0, %s43
    %s46 = sphi 0, %s45
    %s60 = sphi 0, %s46
    %s64 = sphi 0, %s64
    %s66 = sphi 0, %s64
    %s67 = sphi 0, %s66
    %s81 = sphi 0, %s67
    %s87 = sphi 0, %s89
    %s90 = sphi 0, %s87
    %s91 = sphi 0, %s90
    %s107 = sphi 0, %s91
  $region4: #{forward.19} parent=0 // loop_header_branch
    %12 = sbr.rel (%p10) target = $region8
  $region5: #{forward.19} parent=0 // loop_body
    %s14 = ssub.s32 %s9, 1
    %s15 = ssub.s32 %s9, 2
    %s16 = sadd.s32 %s9, 1
    %s17 = ssub.s32 %s9, %s16
    %p18 = scmp.eq.s32.totalorder %s17, 0
    %s20 = sadd.s32 %s19, 1
    %s21 = scalar_select %p18, %s19, %s20
    %p24 = pneg %p18
    %p25 = scmp.eq.s32.totalorder %s9, 1
    %p26 = por %p24, %p25
    %p27 = scmp.ne.s32.totalorder %s19, %s22
    %p28 = scmp.eq.s32.totalorder %s9, 0
    %p29 = por %p27, %p28
    %p30 = scmp.ne.s32.totalorder %s19, %s22
    %p31 = scmp.eq.s32.totalorder %s14, 1
    %p32 = por %p30, %p31
    %p33 = scmp.ne.s32.totalorder %s22, %s23
    %p34 = scmp.eq.s32.totalorder %s14, 0
    %p35 = por %p33, %p34
    %p36 = scmp.ne.s32.totalorder %s22, %s23
    %p37 = scmp.eq.s32.totalorder %s15, 1
    %p38 = por %p36, %p37
    %p40 = scmp.ne.s32.totalorder %s23, %s39
    %p41 = scmp.eq.s32.totalorder %s15, 0
    %p42 = por %p40, %p41
    %s44 = sadd.s32 %s43, 1
    %p47 = scmp.eq.s32.totalorder %s9, 1
    %p48 = scmp.ne.s32.totalorder %s43, %s45
    %p49 = scmp.eq.s32.totalorder %s9, 0
    %p50 = por %p48, %p49
    %p51 = scmp.ne.s32.totalorder %s43, %s45
    %p52 = scmp.eq.s32.totalorder %s14, 1
    %p53 = por %p51, %p52
    %p54 = scmp.ne.s32.totalorder %s45, %s46
    %p55 = scmp.eq.s32.totalorder %s14, 0
    %p56 = por %p54, %p55
    %p57 = scmp.ne.s32.totalorder %s45, %s46
    %p58 = scmp.eq.s32.totalorder %s15, 1
    %p59 = por %p57, %p58
    %p61 = scmp.ne.s32.totalorder %s46, %s60
    %p62 = scmp.eq.s32.totalorder %s15, 0
    %p63 = por %p61, %p62
    %s65 = sadd.s32 %s64, 1
    %p68 = scmp.eq.s32.totalorder %s9, 1
    %p69 = scmp.ne.s32.totalorder %s64, %s66
    %p70 = scmp.eq.s32.totalorder %s9, 0
    %p71 = por %p69, %p70
    %p72 = scmp.ne.s32.totalorder %s64, %s66
    %p73 = scmp.eq.s32.totalorder %s14, 1
    %p74 = por %p72, %p73
    %p75 = scmp.ne.s32.totalorder %s66, %s67
    %p76 = scmp.eq.s32.totalorder %s14, 0
    %p77 = por %p75, %p76
    %p78 = scmp.ne.s32.totalorder %s66, %s67
    %p79 = scmp.eq.s32.totalorder %s15, 1
    %p80 = por %p78, %p79
    %p82 = scmp.ne.s32.totalorder %s67, %s81
    %p83 = scmp.eq.s32.totalorder %s15, 0
    %p84 = por %p82, %p83
    %s85 = ssub.s32 %s9, %s16
    %p86 = scmp.eq.s32.totalorder %s85, 0
    %s88 = sadd.s32 %s87, 1
    %s89 = scalar_select %p86, %s87, %s88
    %p92 = pneg %p86
    %p93 = scmp.eq.s32.totalorder %s9, 1
    %p94 = por %p92, %p93
    %p95 = scmp.ne.s32.totalorder %s87, %s90
    %p96 = scmp.eq.s32.totalorder %s9, 0
    %p97 = por %p95, %p96
    %p98 = scmp.ne.s32.totalorder %s87, %s90
    %p99 = scmp.eq.s32.totalorder %s14, 1
    %p100 = por %p98, %p99
    %p101 = scmp.ne.s32.totalorder %s90, %s91
    %p102 = scmp.eq.s32.totalorder %s14, 0
    %p103 = por %p101, %p102
    %p104 = scmp.ne.s32.totalorder %s90, %s91
    %p105 = scmp.eq.s32.totalorder %s15, 1
    %p106 = por %p104, %p105
    %p108 = scmp.ne.s32.totalorder %s91, %s107
    %p109 = scmp.eq.s32.totalorder %s15, 0
    %p110 = por %p108, %p109
    %p111 = scmp.le.s32.totalorder 1, %s9
    %p112 = scmp.lt.s32.totalorder %s9, 3
    %p113 = pnand %p111, %p112
    %p114 = pneg %p113
    // Predicated region
    $region9: #{forward.19} parent=5 // pred_check
      _
    $region10: #{forward.19} parent=5 // pred_check_branch
      %116 = sbr.rel (%p113) target = $region12
    $region11: #{forward.19} parent=5 // pred_region
      %s117 = ssub.s32 %s9, 1
      // Predicated region
      $region13: #{forward.19} parent=11 // pred_check
        %p118 = pneg %p56
      $region14: #{forward.19} parent=11 // pred_check_branch
        %120 = sbr.rel (%p118) target = $region16
      $region15: #{forward.19} parent=11 // pred_region
        _
      $region16: #{forward.19} parent=11 // pred_fallthru
        _
      // Predicated region
      $region17: #{forward.19} parent=11 // pred_check
        %p121 = pneg %p77
      $region18: #{forward.19} parent=11 // pred_check_branch
        %123 = sbr.rel (%p121) target = $region20
      $region19: #{forward.19} parent=11 // pred_region
        _
      $region20: #{forward.19} parent=11 // pred_fallthru
        _
    $region12: #{forward.19} parent=5 // pred_fallthru
      _
    %p124 = scmp.lt.s32.totalorder %s9, 2
    // Predicated region
    $region21: #{forward.19} parent=5 // pred_check
      %p125 = pneg %p124
    $region22: #{forward.19} parent=5 // pred_check_branch
      %127 = sbr.rel (%p125) target = $region24
    $region23: #{forward.19} parent=5 // pred_region
      // Predicated region
      $region25: #{forward.19} parent=23 // pred_check
        %p128 = pneg %p29
      $region26: #{forward.19} parent=23 // pred_check_branch
        %130 = sbr.rel (%p128) target = $region28
      $region27: #{forward.19} parent=23 // pred_region
        %p131 = scmp.lt.s32.totalorder %s9, 1
        %s132 = scalar_select %p131, %s9, 1
        %s133 = smul.addr %s132, 4
        %s134 = scalar_lea.vmem %s0, %s133
      $region28: #{forward.19} parent=23 // pred_fallthru
        _
    $region24: #{forward.19} parent=5 // pred_fallthru
      _
    %p135 = scmp.le.s32.totalorder 1, %s9
    %p136 = scmp.lt.s32.totalorder %s9, 3
    %p137 = pnand %p135, %p136
    %p138 = pneg %p137
    // Predicated region
    $region29: #{forward.19} parent=5 // pred_check
      _
    $region30: #{forward.19} parent=5 // pred_check_branch
      %140 = sbr.rel (%p137) target = $region32
    $region31: #{forward.19} parent=5 // pred_region
      %s141 = ssub.s32 %s9, 1
      %p142 = scmp.lt.s32.totalorder %s14, 1
      %s143 = scalar_select %p142, %s14, 1
      %s144 = smul.addr %s143, 4
      %s145 = scalar_lea.vmem %s0, %s144
      %p146 = pneg %p35
      %p147 = pneg %p32
      %p148 = pneg %p56
      %p149 = pneg %p53
      %p150 = pneg %p77
      %p151 = pneg %p74
      %p152 = pneg %p103
      %p153 = pneg %p100
      %p154 = scmp.lt.s32.totalorder %s14, 1
      %s155 = scalar_select %p154, %s14, 1
      %s156 = smul.addr %s155, 4
      %s157 = scalar_lea.vmem %s3, %s156
      %p158 = scmp.lt.s32.totalorder %s14, 1
      %s159 = scalar_select %p158, %s14, 1
      %s160 = smul.addr %s159, 4
      %s161 = scalar_lea.vmem %s0, %s160
      %p162 = scmp.lt.s32.totalorder %s14, 1
      %s163 = scalar_select %p162, %s14, 1
      %s164 = smul.addr %s163, 4
      %s165 = scalar_lea.vmem %s3, %s164
      %v167 = vld [vmem:[%s161] sm:$0xf]
      %v168 = vld [vmem:[%s1] sm:$0xf]
      %v169 = vld [vmem:[%s1 + $0x4] sm:$0xf]
      %v170 = vld [vmem:[%s1 + $0x8] sm:$0xf]
      %v171 = vld [vmem:[%s1 + $0xc] sm:$0xf]
      %v172 = vld [vmem:[%s2] sm:$0x1]
      %v174 = vperm.slane %v172, 0
      %v180 = vunpack.c.l.b16 %v168
      %v181 = vunpack.c.l.b16 %v169
      %v182 = vunpack.c.l.b16 %v170
      %v183 = vunpack.c.l.b16 %v171
      %v184 = vpack.c.b16 %v181, %v180
      %v185 = vpack.c.b16 %v183, %v182
      %vm188 = vcmask 261120
      %v190 = vsel %vm188, %v167, 0
      %192 = vmatpush.bf16.msra.mxu0 0
      %193 = vmatpush.bf16.msra.mxu0 0
      %194 = vmatpush.bf16.msra.mxu0 0
      %195 = vmatpush.bf16.msra.mxu0 0
      %196 = vmatpush.bf16.msra.mxu0 0
      %197 = vmatpush.bf16.msra.mxu0 0
      %198 = vmatpush.bf16.msra.mxu0 %v185
      %199 = vmatpush.bf16.msra.mxu0 %v184
      %200 = vmatmul.bf16.gmra.mxu0 %v190
      %v201 = vpop.f32.mrf.mxu0
      %v202 = vadd.f32 %v174, %v201
      %v203 = vpop.f32.mrf.mxu0
      %204 = vdwg.mxu0
      %v205 = vtanh.pop %v202
      %v206 = vpack.c.bf16 %v205, %v205
      %207 = vst [vmem:[%s165] sm:$0xf] %v206
      %p208 = scmp.lt.s32.totalorder %s14, 1
      %s209 = scalar_select %p208, %s14, 1
      %s210 = smul.addr %s209, 4
      %s211 = scalar_lea.vmem %s3, %s210
      // Predicated region
      $region33: #{forward.19} parent=31 // pred_check
        %p212 = pneg %p100
      $region34: #{forward.19} parent=31 // pred_check_branch
        %214 = sbr.rel (%p212) target = $region36
      $region35: #{forward.19} parent=31 // pred_region
        _
      $region36: #{forward.19} parent=31 // pred_fallthru
        _
    $region32: #{forward.19} parent=5 // pred_fallthru
      _
    %p215 = scmp.le.s32.totalorder 2, %s9
    // Predicated region
    $region37: #{forward.19} parent=5 // pred_check
      %p216 = pneg %p215
    $region38: #{forward.19} parent=5 // pred_check_branch
      %218 = sbr.rel (%p216) target = $region40
    $region39: #{forward.19} parent=5 // pred_region
      %s219 = ssub.s32 %s9, 2
      // Predicated region
      $region41: #{forward.19} parent=39 // pred_check
        %p220 = pneg %p106
      $region42: #{forward.19} parent=39 // pred_check_branch
        %222 = sbr.rel (%p220) target = $region44
      $region43: #{forward.19} parent=39 // pred_region
        %p223 = scmp.lt.s32.totalorder %s15, 1
        %s224 = scalar_select %p223, %s15, 1
        %s225 = smul.addr %s224, 4
        %s226 = scalar_lea.vmem %s3, %s225
      $region44: #{forward.19} parent=39 // pred_fallthru
        _
    $region40: #{forward.19} parent=5 // pred_fallthru
      _
  $region6: #{forward.19} parent=0 // loop_footer
    %s13 = sadd.s32 1, %s9
  $region7: #{forward.19} parent=0 // loop_footer_branch
    %8 = sbr.rel target = $region3
  $region8: #{forward.19} parent=0 // loop_exit
    _

</llo_original>
